<compile_context>
chip_gen: v7x
topology: tpu7x:2x2x1
jax: 0.10.0
libtpu: 0.0.40
codegen_flags: <defaults>
</compile_context>

<pallas_src>
import functools

import jax
import jax.numpy as jnp
from jax.experimental import pallas as pl
from jax.experimental.pallas import tpu as pltpu


def _conv_bn_relu_kernel(x_ref, w_ref, shift_ref, o_ref, *, ksize, wp, q):
    # x_ref:     (Hp*Wp, Cin_p)               flattened padded image (one batch element)
    # w_ref:     (ksize*ksize, Cin_p, Cout_p) BN-scale-folded conv weights
    # shift_ref: (1, Cout_p)                  folded BN shift (+ conv bias)
    # o_ref:     (Q, Cout_p)                  Q = H*Wp flat output rows (junk cols dropped outside)
    acc = jnp.zeros(o_ref.shape, jnp.float32)
    for kh in range(ksize):               # static unrolled: ksize*ksize MXU pushes back-to-back
        for kw in range(ksize):
            patch = x_ref[pl.ds(kh * wp + kw, q), :]          # (Q, Cin_p) shifted resident view
            acc = acc + jnp.dot(patch, w_ref[kh * ksize + kw],
                                preferred_element_type=jnp.float32)
    y = acc + shift_ref[...]                                  # f32 epilogue
    o_ref[...] = jnp.maximum(y, 0.0).astype(o_ref.dtype)


@functools.partial(jax.jit, static_argnames=("ksize",))
def basic_conv2d(x_nchw, conv_w, conv_b, bn_gamma, bn_beta, bn_mean, bn_var,
                 ksize=3, eps=1e-5):
    N, Cin, H, W = x_nchw.shape
    Cout = conv_w.shape[0]
    pad = (ksize - 1) // 2
    pad_bot = pad + (1 if ksize > 1 else 0)   # extra bottom rows so shifted slices stay in-bounds
    Wp = W + 2 * pad
    Hp = H + pad + pad_bot

    cin_p = max(8, ((Cin + 7) // 8) * 8)            # sublane-aligned contraction dim
    cout_p = max(128, ((Cout + 127) // 128) * 128)  # lane-dense output / MXU-aligned N

    # ---- layout plumbing (plain JAX, one pass): NCHW -> padded NHWC -> flat pixel rows ----
    x_nhwc = jnp.transpose(x_nchw, (0, 2, 3, 1))
    x_padded = jnp.pad(x_nhwc, ((0, 0), (pad, pad_bot), (pad, pad), (0, cin_p - Cin)))
    x_flat = x_padded.reshape(N, Hp * Wp, cin_p)

    # ---- fold eval-mode BN (+ conv bias): scale into weights, shift kept separate ----
    inv_std = jax.lax.rsqrt(bn_var + eps)
    scale = bn_gamma * inv_std                                  # (Cout,)
    shift = (conv_b - bn_mean) * scale + bn_beta                # (Cout,)

    # (Cout, Cin, kh, kw) -> (kh*kw, Cin, Cout), fold scale, pad to (cin_p, cout_p)
    w = jnp.transpose(conv_w, (2, 3, 1, 0)).reshape(ksize * ksize, Cin, Cout)
    w = w * scale[None, None, :]
    w = jnp.pad(w, ((0, 0), (0, cin_p - Cin), (0, cout_p - Cout))).astype(x_nchw.dtype)
    shift_p = jnp.pad(shift, (0, cout_p - Cout)).reshape(1, cout_p).astype(jnp.float32)

    Q = H * Wp  # flat output rows per image (includes (Wp - W) junk columns per spatial row)

    kernel = functools.partial(_conv_bn_relu_kernel, ksize=ksize, wp=Wp, q=Q)

    itemsize = jnp.dtype(x_nchw.dtype).itemsize
    cost = pl.CostEstimate(
        flops=2 * N * Q * cin_p * cout_p * ksize * ksize,
        transcendentals=0,
        bytes_accessed=(N * Hp * Wp * cin_p * itemsize
                        + ksize * ksize * cin_p * cout_p * itemsize
                        + N * Q * cout_p * itemsize),
    )

    out_flat = pl.pallas_call(
        kernel,
        out_shape=jax.ShapeDtypeStruct((N, Q, cout_p), x_nchw.dtype),
        grid_spec=pltpu.PrefetchScalarGridSpec(
            num_scalar_prefetch=0,
            grid=(N,),
            in_specs=[
                pl.BlockSpec((None, Hp * Wp, cin_p), lambda n: (n, 0, 0)),
                pl.BlockSpec((ksize * ksize, cin_p, cout_p), lambda n: (0, 0, 0)),
                pl.BlockSpec((1, cout_p), lambda n: (0, 0)),
            ],
            out_specs=pl.BlockSpec((None, Q, cout_p), lambda n: (n, 0, 0)),
        ),
        compiler_params=pltpu.CompilerParams(
            dimension_semantics=("parallel",),
            vmem_limit_bytes=32 * 1024 * 1024,
        ),
        cost_estimate=cost,
    )(x_flat, w, shift_p)

    # drop junk columns / padded channels, back to NCHW
    out = out_flat.reshape(N, H, Wp, cout_p)[:, :, :W, :Cout]
    return jnp.transpose(out, (0, 3, 1, 2))


if __name__ == "__main__":
    # small deterministic setup: batch=2, in_features=4, out_features=8, spatial=16
    N, Cin, H, W = 2, 4, 16, 16
    Cout, K = 8, 3

    key = jax.random.PRNGKey(0)
    kx, kw, kb = jax.random.split(key, 3)
    x = jax.random.normal(kx, (N, Cin, H, W), dtype=jnp.float32)
    conv_w = jax.random.normal(kw, (Cout, Cin, K, K), dtype=jnp.float32) * 0.1
    conv_b = jax.random.normal(kb, (Cout,), dtype=jnp.float32) * 0.1

    # BatchNorm2d parameters (deterministic, eval-mode defaults)
    bn_gamma = jnp.ones((Cout,), jnp.float32)
    bn_beta = jnp.zeros((Cout,), jnp.float32)
    bn_mean = jnp.zeros((Cout,), jnp.float32)
    bn_var = jnp.ones((Cout,), jnp.float32)

    out = basic_conv2d(x, conv_w, conv_b, bn_gamma, bn_beta, bn_mean, bn_var, ksize=K)
    out = jax.block_until_ready(out)

    # reference check (XLA conv), same eval-mode BN fold
    ref = jax.lax.conv_general_dilated(
        x, conv_w, window_strides=(1, 1), padding=((1, 1), (1, 1)),
        dimension_numbers=("NCHW", "OIHW", "NCHW"))
    ref = ref + conv_b.reshape(1, Cout, 1, 1)
    ref = (ref - bn_mean.reshape(1, Cout, 1, 1)) * jax.lax.rsqrt(
        bn_var.reshape(1, Cout, 1, 1) + 1e-5) * bn_gamma.reshape(1, Cout, 1, 1) \
        + bn_beta.reshape(1, Cout, 1, 1)
    ref = jnp.maximum(ref, 0.0)
    assert jnp.allclose(out, ref, atol=1e-4, rtol=1e-4), "mismatch vs reference"

    print("KERNEL_OK")
</pallas_src>

<mosaic_0001>
module attributes {stable_mosaic.version = 11 : i64} {
  func.func @_conv_bn_relu_kernel(%arg0: i32, %arg1: memref<1x342x8xf32, #tpu.memory_space<vmem>>, %arg2: memref<9x8x128xf32, #tpu.memory_space<vmem>>, %arg3: memref<1x128xf32, #tpu.memory_space<vmem>>, %arg4: memref<1x288x128xf32, #tpu.memory_space<vmem>>) attributes {dimension_semantics = [#tpu.dimension_semantics<parallel>], iteration_bounds = array<i64: 2>, scalar_prefetch = 0 : i64, scratch_operands = 0 : i64, tpu.core_type = #tpu.core_type<tc>, window_params = [{transform_indices = @transform_0, window_bounds = array<i64: 1, 342, 8>}, {pipeline_mode = #tpu.pipeline_mode<synchronous>, transform_indices = @transform_1, window_bounds = array<i64: 9, 8, 128>}, {pipeline_mode = #tpu.pipeline_mode<synchronous>, transform_indices = @transform_2, window_bounds = array<i64: 1, 128>}, {transform_indices = @transform_3, window_bounds = array<i64: 1, 288, 128>}]} {
    %cst = arith.constant 0.000000e+00 : f32
    %0 = vector.broadcast %cst : f32 to vector<288x128xf32>
    %c0 = arith.constant 0 : index
    %c0_0 = arith.constant 0 : index
    %c0_1 = arith.constant 0 : index
    %1 = vector.load %arg1[%c0, %c0_0, %c0_1] : memref<1x342x8xf32, #tpu.memory_space<vmem>>, vector<1x288x8xf32>
    %2 = vector.shape_cast %1 : vector<1x288x8xf32> to vector<288x8xf32>
    %c0_2 = arith.constant 0 : index
    %c0_3 = arith.constant 0 : index
    %c0_4 = arith.constant 0 : index
    %3 = vector.load %arg2[%c0_2, %c0_3, %c0_4] : memref<9x8x128xf32, #tpu.memory_space<vmem>>, vector<1x8x128xf32>
    %4 = vector.shape_cast %3 : vector<1x8x128xf32> to vector<8x128xf32>
    %cst_5 = arith.constant dense<0.000000e+00> : vector<288x128xf32>
    %5 = tpu.matmul %2, %4, %cst_5 {dimension_numbers = #tpu.dot_dimension_numbers<[1], [0], [0], [1], [0, 0, 1, 1], [], []>} : vector<288x8xf32>, vector<8x128xf32>, vector<288x128xf32> -> vector<288x128xf32>
    %6 = arith.addf %0, %5 : vector<288x128xf32>
    %c0_6 = arith.constant 0 : index
    %c1 = arith.constant 1 : index
    %c0_7 = arith.constant 0 : index
    %7 = vector.load %arg1[%c0_6, %c1, %c0_7] : memref<1x342x8xf32, #tpu.memory_space<vmem>>, vector<1x288x8xf32>
    %8 = vector.shape_cast %7 : vector<1x288x8xf32> to vector<288x8xf32>
    %c1_8 = arith.constant 1 : index
    %c0_9 = arith.constant 0 : index
    %c0_10 = arith.constant 0 : index
    %9 = vector.load %arg2[%c1_8, %c0_9, %c0_10] : memref<9x8x128xf32, #tpu.memory_space<vmem>>, vector<1x8x128xf32>
    %10 = vector.shape_cast %9 : vector<1x8x128xf32> to vector<8x128xf32>
    %cst_11 = arith.constant dense<0.000000e+00> : vector<288x128xf32>
    %11 = tpu.matmul %8, %10, %cst_11 {dimension_numbers = #tpu.dot_dimension_numbers<[1], [0], [0], [1], [0, 0, 1, 1], [], []>} : vector<288x8xf32>, vector<8x128xf32>, vector<288x128xf32> -> vector<288x128xf32>
    %12 = arith.addf %6, %11 : vector<288x128xf32>
    %c0_12 = arith.constant 0 : index
    %c2 = arith.constant 2 : index
    %c0_13 = arith.constant 0 : index
    %13 = vector.load %arg1[%c0_12, %c2, %c0_13] : memref<1x342x8xf32, #tpu.memory_space<vmem>>, vector<1x288x8xf32>
    %14 = vector.shape_cast %13 : vector<1x288x8xf32> to vector<288x8xf32>
    %c2_14 = arith.constant 2 : index
    %c0_15 = arith.constant 0 : index
    %c0_16 = arith.constant 0 : index
    %15 = vector.load %arg2[%c2_14, %c0_15, %c0_16] : memref<9x8x128xf32, #tpu.memory_space<vmem>>, vector<1x8x128xf32>
    %16 = vector.shape_cast %15 : vector<1x8x128xf32> to vector<8x128xf32>
    %cst_17 = arith.constant dense<0.000000e+00> : vector<288x128xf32>
    %17 = tpu.matmul %14, %16, %cst_17 {dimension_numbers = #tpu.dot_dimension_numbers<[1], [0], [0], [1], [0, 0, 1, 1], [], []>} : vector<288x8xf32>, vector<8x128xf32>, vector<288x128xf32> -> vector<288x128xf32>
    %18 = arith.addf %12, %17 : vector<288x128xf32>
    %c0_18 = arith.constant 0 : index
    %c18 = arith.constant 18 : index
    %c0_19 = arith.constant 0 : index
    %19 = vector.load %arg1[%c0_18, %c18, %c0_19] : memref<1x342x8xf32, #tpu.memory_space<vmem>>, vector<1x288x8xf32>
    %20 = vector.shape_cast %19 : vector<1x288x8xf32> to vector<288x8xf32>
    %c3 = arith.constant 3 : index
    %c0_20 = arith.constant 0 : index
    %c0_21 = arith.constant 0 : index
    %21 = vector.load %arg2[%c3, %c0_20, %c0_21] : memref<9x8x128xf32, #tpu.memory_space<vmem>>, vector<1x8x128xf32>
    %22 = vector.shape_cast %21 : vector<1x8x128xf32> to vector<8x128xf32>
    %cst_22 = arith.constant dense<0.000000e+00> : vector<288x128xf32>
    %23 = tpu.matmul %20, %22, %cst_22 {dimension_numbers = #tpu.dot_dimension_numbers<[1], [0], [0], [1], [0, 0, 1, 1], [], []>} : vector<288x8xf32>, vector<8x128xf32>, vector<288x128xf32> -> vector<288x128xf32>
    %24 = arith.addf %18, %23 : vector<288x128xf32>
    %c0_23 = arith.constant 0 : index
    %c19 = arith.constant 19 : index
    %c0_24 = arith.constant 0 : index
    %25 = vector.load %arg1[%c0_23, %c19, %c0_24] : memref<1x342x8xf32, #tpu.memory_space<vmem>>, vector<1x288x8xf32>
    %26 = vector.shape_cast %25 : vector<1x288x8xf32> to vector<288x8xf32>
    %c4 = arith.constant 4 : index
    %c0_25 = arith.constant 0 : index
    %c0_26 = arith.constant 0 : index
    %27 = vector.load %arg2[%c4, %c0_25, %c0_26] : memref<9x8x128xf32, #tpu.memory_space<vmem>>, vector<1x8x128xf32>
    %28 = vector.shape_cast %27 : vector<1x8x128xf32> to vector<8x128xf32>
    %cst_27 = arith.constant dense<0.000000e+00> : vector<288x128xf32>
    %29 = tpu.matmul %26, %28, %cst_27 {dimension_numbers = #tpu.dot_dimension_numbers<[1], [0], [0], [1], [0, 0, 1, 1], [], []>} : vector<288x8xf32>, vector<8x128xf32>, vector<288x128xf32> -> vector<288x128xf32>
    %30 = arith.addf %24, %29 : vector<288x128xf32>
    %c0_28 = arith.constant 0 : index
    %c20 = arith.constant 20 : index
    %c0_29 = arith.constant 0 : index
    %31 = vector.load %arg1[%c0_28, %c20, %c0_29] : memref<1x342x8xf32, #tpu.memory_space<vmem>>, vector<1x288x8xf32>
    %32 = vector.shape_cast %31 : vector<1x288x8xf32> to vector<288x8xf32>
    %c5 = arith.constant 5 : index
    %c0_30 = arith.constant 0 : index
    %c0_31 = arith.constant 0 : index
    %33 = vector.load %arg2[%c5, %c0_30, %c0_31] : memref<9x8x128xf32, #tpu.memory_space<vmem>>, vector<1x8x128xf32>
    %34 = vector.shape_cast %33 : vector<1x8x128xf32> to vector<8x128xf32>
    %cst_32 = arith.constant dense<0.000000e+00> : vector<288x128xf32>
    %35 = tpu.matmul %32, %34, %cst_32 {dimension_numbers = #tpu.dot_dimension_numbers<[1], [0], [0], [1], [0, 0, 1, 1], [], []>} : vector<288x8xf32>, vector<8x128xf32>, vector<288x128xf32> -> vector<288x128xf32>
    %36 = arith.addf %30, %35 : vector<288x128xf32>
    %c0_33 = arith.constant 0 : index
    %c36 = arith.constant 36 : index
    %c0_34 = arith.constant 0 : index
    %37 = vector.load %arg1[%c0_33, %c36, %c0_34] : memref<1x342x8xf32, #tpu.memory_space<vmem>>, vector<1x288x8xf32>
    %38 = vector.shape_cast %37 : vector<1x288x8xf32> to vector<288x8xf32>
    %c6 = arith.constant 6 : index
    %c0_35 = arith.constant 0 : index
    %c0_36 = arith.constant 0 : index
    %39 = vector.load %arg2[%c6, %c0_35, %c0_36] : memref<9x8x128xf32, #tpu.memory_space<vmem>>, vector<1x8x128xf32>
    %40 = vector.shape_cast %39 : vector<1x8x128xf32> to vector<8x128xf32>
    %cst_37 = arith.constant dense<0.000000e+00> : vector<288x128xf32>
    %41 = tpu.matmul %38, %40, %cst_37 {dimension_numbers = #tpu.dot_dimension_numbers<[1], [0], [0], [1], [0, 0, 1, 1], [], []>} : vector<288x8xf32>, vector<8x128xf32>, vector<288x128xf32> -> vector<288x128xf32>
    %42 = arith.addf %36, %41 : vector<288x128xf32>
    %c0_38 = arith.constant 0 : index
    %c37 = arith.constant 37 : index
    %c0_39 = arith.constant 0 : index
    %43 = vector.load %arg1[%c0_38, %c37, %c0_39] : memref<1x342x8xf32, #tpu.memory_space<vmem>>, vector<1x288x8xf32>
    %44 = vector.shape_cast %43 : vector<1x288x8xf32> to vector<288x8xf32>
    %c7 = arith.constant 7 : index
    %c0_40 = arith.constant 0 : index
    %c0_41 = arith.constant 0 : index
    %45 = vector.load %arg2[%c7, %c0_40, %c0_41] : memref<9x8x128xf32, #tpu.memory_space<vmem>>, vector<1x8x128xf32>
    %46 = vector.shape_cast %45 : vector<1x8x128xf32> to vector<8x128xf32>
    %cst_42 = arith.constant dense<0.000000e+00> : vector<288x128xf32>
    %47 = tpu.matmul %44, %46, %cst_42 {dimension_numbers = #tpu.dot_dimension_numbers<[1], [0], [0], [1], [0, 0, 1, 1], [], []>} : vector<288x8xf32>, vector<8x128xf32>, vector<288x128xf32> -> vector<288x128xf32>
    %48 = arith.addf %42, %47 : vector<288x128xf32>
    %c0_43 = arith.constant 0 : index
    %c38 = arith.constant 38 : index
    %c0_44 = arith.constant 0 : index
    %49 = vector.load %arg1[%c0_43, %c38, %c0_44] : memref<1x342x8xf32, #tpu.memory_space<vmem>>, vector<1x288x8xf32>
    %50 = vector.shape_cast %49 : vector<1x288x8xf32> to vector<288x8xf32>
    %c8 = arith.constant 8 : index
    %c0_45 = arith.constant 0 : index
    %c0_46 = arith.constant 0 : index
    %51 = vector.load %arg2[%c8, %c0_45, %c0_46] : memref<9x8x128xf32, #tpu.memory_space<vmem>>, vector<1x8x128xf32>
    %52 = vector.shape_cast %51 : vector<1x8x128xf32> to vector<8x128xf32>
    %cst_47 = arith.constant dense<0.000000e+00> : vector<288x128xf32>
    %53 = tpu.matmul %50, %52, %cst_47 {dimension_numbers = #tpu.dot_dimension_numbers<[1], [0], [0], [1], [0, 0, 1, 1], [], []>} : vector<288x8xf32>, vector<8x128xf32>, vector<288x128xf32> -> vector<288x128xf32>
    %54 = arith.addf %48, %53 : vector<288x128xf32>
    %c0_48 = arith.constant 0 : index
    %c0_49 = arith.constant 0 : index
    %55 = vector.load %arg3[%c0_48, %c0_49] : memref<1x128xf32, #tpu.memory_space<vmem>>, vector<1x128xf32>
    %56 = vector.broadcast %55 : vector<1x128xf32> to vector<288x128xf32>
    %57 = arith.addf %54, %56 : vector<288x128xf32>
    %cst_50 = arith.constant 0.000000e+00 : f32
    %58 = vector.broadcast %cst_50 : f32 to vector<288x128xf32>
    %59 = arith.maximumf %57, %58 : vector<288x128xf32>
    %c0_51 = arith.constant 0 : index
    %c0_52 = arith.constant 0 : index
    %c0_53 = arith.constant 0 : index
    %60 = vector.load %arg4[%c0_51, %c0_52, %c0_53] : memref<1x288x128xf32, #tpu.memory_space<vmem>>, vector<1x288x128xf32>
    %61 = vector.shape_cast %60 : vector<1x288x128xf32> to vector<288x128xf32>
    %62 = vector.shape_cast %59 : vector<288x128xf32> to vector<1x288x128xf32>
    tpu.vector_store %arg4[%c0_51, %c0_52, %c0_53], %62 {strides = array<i32>} : memref<1x288x128xf32, #tpu.memory_space<vmem>>, vector<1x288x128xf32>,
    return
  }
  func.func @transform_0(%arg0: i32) -> (i32, i32, i32) {
    %c0_i32 = arith.constant 0 : i32
    %c0_i32_0 = arith.constant 0 : i32
    %c0_i32_1 = arith.constant 0 : i32
    return %arg0, %c0_i32, %c0_i32_0 : i32, i32, i32
  }
  func.func @transform_1(%arg0: i32) -> (i32, i32, i32) {
    %c0_i32 = arith.constant 0 : i32
    %c0_i32_0 = arith.constant 0 : i32
    %c0_i32_1 = arith.constant 0 : i32
    %c0_i32_2 = arith.constant 0 : i32
    return %c0_i32, %c0_i32_0, %c0_i32_1 : i32, i32, i32
  }
  func.func @transform_2(%arg0: i32) -> (i32, i32) {
    %c0_i32 = arith.constant 0 : i32
    %c0_i32_0 = arith.constant 0 : i32
    %c0_i32_1 = arith.constant 0 : i32
    return %c0_i32, %c0_i32_0 : i32, i32
  }
  func.func @transform_3(%arg0: i32) -> (i32, i32, i32) {
    %c0_i32 = arith.constant 0 : i32
    %c0_i32_0 = arith.constant 0 : i32
    %c0_i32_1 = arith.constant 0 : i32
    return %arg0, %c0_i32, %c0_i32_0 : i32, i32, i32
  }
}

</mosaic_0001>

<llo_original>
// kernel: basic_conv2d.1
$region0: #{basic_conv2d.1}
  #allocation0 [shape = 'u32[]', space=smem, size = 0x4, offset = 0x4, fixed_abs, tag = 'smem constant byte address 0x4 - core index']
  #allocation1 [shape = 'u32[144,128]{1,0:T(1,128)}', space=vmem, size = 0x12000, scoped, tag = 'internal scratch']
  %s0 = inlined_call_operand.vmem [shape: f32[2,342,8], index: 0, kind: input, shape index: {}]
  %s1 = inlined_call_operand.vmem [shape: f32[9,8,128], index: 1, kind: input, shape index: {}]
  %s2 = inlined_call_operand.vmem [shape: f32[1,128], index: 2, kind: input, shape index: {}]
  %s3 = inlined_call_operand.vmem [shape: f32[2,288,128], index: 3, kind: output, shape index: {}]
  %s4 = sld [smem:[#allocation0]]
  $region45: #{basic_conv2d.1} parent=0
    _
  %s6 = ssub.s32 1, %s4
  %s7 = scalar_select 0, %s6, %s4
  loop: start=0, step=1, limit=4
  $region2: #{basic_conv2d.1} parent=0 // loop_pre_header
    _
  $region3: #{basic_conv2d.1} parent=0 // loop_header
    %s9 = sphi 0, %s13
    %p10 = scmp.ge.s32.totalorder %s9, 4
    %s19 = sphi 0, %s21
    %s22 = sphi 0, %s19
    %s23 = sphi 0, %s22
    %s39 = sphi 0, %s23
    %s43 = sphi 0, %s43
    %s45 = sphi 0, %s43
    %s46 = sphi 0, %s45
    %s60 = sphi 0, %s46
    %s64 = sphi 0, %s64
    %s66 = sphi 0, %s64
    %s67 = sphi 0, %s66
    %s81 = sphi 0, %s67
    %s87 = sphi 0, %s89
    %s90 = sphi 0, %s87
    %s91 = sphi 0, %s90
    %s107 = sphi 0, %s91
  $region4: #{basic_conv2d.1} parent=0 // loop_header_branch
    %12 = sbr.rel (%p10) target = $region8
  $region5: #{basic_conv2d.1} parent=0 // loop_body
    %s14 = ssub.s32 %s9, 1
    %s15 = ssub.s32 %s9, 2
    %s16 = sadd.s32 %s9, 1
    %s17 = ssub.s32 %s9, %s16
    %p18 = scmp.eq.s32.totalorder %s17, 0
    %s20 = sadd.s32 %s19, 1
    %s21 = scalar_select %p18, %s19, %s20
    %p24 = pneg %p18
    %p25 = scmp.eq.s32.totalorder %s9, 1
    %p26 = por %p24, %p25
    %p27 = scmp.ne.s32.totalorder %s19, %s22
    %p28 = scmp.eq.s32.totalorder %s9, 0
    %p29 = por %p27, %p28
    %p30 = scmp.ne.s32.totalorder %s19, %s22
    %p31 = scmp.eq.s32.totalorder %s14, 1
    %p32 = por %p30, %p31
    %p33 = scmp.ne.s32.totalorder %s22, %s23
    %p34 = scmp.eq.s32.totalorder %s14, 0
    %p35 = por %p33, %p34
    %p36 = scmp.ne.s32.totalorder %s22, %s23
    %p37 = scmp.eq.s32.totalorder %s15, 1
    %p38 = por %p36, %p37
    %p40 = scmp.ne.s32.totalorder %s23, %s39
    %p41 = scmp.eq.s32.totalorder %s15, 0
    %p42 = por %p40, %p41
    %s44 = sadd.s32 %s43, 1
    %p47 = scmp.eq.s32.totalorder %s9, 1
    %p48 = scmp.ne.s32.totalorder %s43, %s45
    %p49 = scmp.eq.s32.totalorder %s9, 0
    %p50 = por %p48, %p49
    %p51 = scmp.ne.s32.totalorder %s43, %s45
    %p52 = scmp.eq.s32.totalorder %s14, 1
    %p53 = por %p51, %p52
    %p54 = scmp.ne.s32.totalorder %s45, %s46
    %p55 = scmp.eq.s32.totalorder %s14, 0
    %p56 = por %p54, %p55
    %p57 = scmp.ne.s32.totalorder %s45, %s46
    %p58 = scmp.eq.s32.totalorder %s15, 1
    %p59 = por %p57, %p58
    %p61 = scmp.ne.s32.totalorder %s46, %s60
    %p62 = scmp.eq.s32.totalorder %s15, 0
    %p63 = por %p61, %p62
    %s65 = sadd.s32 %s64, 1
    %p68 = scmp.eq.s32.totalorder %s9, 1
    %p69 = scmp.ne.s32.totalorder %s64, %s66
    %p70 = scmp.eq.s32.totalorder %s9, 0
    %p71 = por %p69, %p70
    %p72 = scmp.ne.s32.totalorder %s64, %s66
    %p73 = scmp.eq.s32.totalorder %s14, 1
    %p74 = por %p72, %p73
    %p75 = scmp.ne.s32.totalorder %s66, %s67
    %p76 = scmp.eq.s32.totalorder %s14, 0
    %p77 = por %p75, %p76
    %p78 = scmp.ne.s32.totalorder %s66, %s67
    %p79 = scmp.eq.s32.totalorder %s15, 1
    %p80 = por %p78, %p79
    %p82 = scmp.ne.s32.totalorder %s67, %s81
    %p83 = scmp.eq.s32.totalorder %s15, 0
    %p84 = por %p82, %p83
    %s85 = ssub.s32 %s9, %s16
    %p86 = scmp.eq.s32.totalorder %s85, 0
    %s88 = sadd.s32 %s87, 1
    %s89 = scalar_select %p86, %s87, %s88
    %p92 = pneg %p86
    %p93 = scmp.eq.s32.totalorder %s9, 1
    %p94 = por %p92, %p93
    %p95 = scmp.ne.s32.totalorder %s87, %s90
    %p96 = scmp.eq.s32.totalorder %s9, 0
    %p97 = por %p95, %p96
    %p98 = scmp.ne.s32.totalorder %s87, %s90
    %p99 = scmp.eq.s32.totalorder %s14, 1
    %p100 = por %p98, %p99
    %p101 = scmp.ne.s32.totalorder %s90, %s91
    %p102 = scmp.eq.s32.totalorder %s14, 0
    %p103 = por %p101, %p102
    %p104 = scmp.ne.s32.totalorder %s90, %s91
    %p105 = scmp.eq.s32.totalorder %s15, 1
    %p106 = por %p104, %p105
    %p108 = scmp.ne.s32.totalorder %s91, %s107
    %p109 = scmp.eq.s32.totalorder %s15, 0
    %p110 = por %p108, %p109
    %p111 = scmp.le.s32.totalorder 1, %s9
    %p112 = scmp.lt.s32.totalorder %s9, 3
    %p113 = pnand %p111, %p112
    %p114 = pneg %p113
    // Predicated region
    $region9: #{basic_conv2d.1} parent=5 // pred_check
      _
    $region10: #{basic_conv2d.1} parent=5 // pred_check_branch
      %116 = sbr.rel (%p113) target = $region12
    $region11: #{basic_conv2d.1} parent=5 // pred_region
      %s117 = ssub.s32 %s9, 1
      // Predicated region
      $region13: #{basic_conv2d.1} parent=11 // pred_check
        %p118 = pneg %p56
      $region14: #{basic_conv2d.1} parent=11 // pred_check_branch
        %120 = sbr.rel (%p118) target = $region16
      $region15: #{basic_conv2d.1} parent=11 // pred_region
        _
      $region16: #{basic_conv2d.1} parent=11 // pred_fallthru
        _
      // Predicated region
      $region17: #{basic_conv2d.1} parent=11 // pred_check
        %p121 = pneg %p77
      $region18: #{basic_conv2d.1} parent=11 // pred_check_branch
        %123 = sbr.rel (%p121) target = $region20
      $region19: #{basic_conv2d.1} parent=11 // pred_region
        _
      $region20: #{basic_conv2d.1} parent=11 // pred_fallthru
        _
    $region12: #{basic_conv2d.1} parent=5 // pred_fallthru
      _
    %p124 = scmp.lt.s32.totalorder %s9, 2
    // Predicated region
    $region21: #{basic_conv2d.1} parent=5 // pred_check
      %p125 = pneg %p124
    $region22: #{basic_conv2d.1} parent=5 // pred_check_branch
      %127 = sbr.rel (%p125) target = $region24
    $region23: #{basic_conv2d.1} parent=5 // pred_region
      // Predicated region
      $region25: #{basic_conv2d.1} parent=23 // pred_check
        %p128 = pneg %p29
      $region26: #{basic_conv2d.1} parent=23 // pred_check_branch
        %130 = sbr.rel (%p128) target = $region28
      $region27: #{basic_conv2d.1} parent=23 // pred_region
        %p131 = scmp.lt.s32.totalorder %s9, 1
        %s132 = scalar_select %p131, %s9, 1
        %s133 = smul.addr %s132, 43
        %s134 = smul.addr %s133, 8
        %s135 = scalar_lea.vmem %s0, %s134
      $region28: #{basic_conv2d.1} parent=23 // pred_fallthru
        _
    $region24: #{basic_conv2d.1} parent=5 // pred_fallthru
      _
    %p136 = scmp.le.s32.totalorder 1, %s9
    %p137 = scmp.lt.s32.totalorder %s9, 3
    %p138 = pnand %p136, %p137
    %p139 = pneg %p138
    // Predicated region
    $region29: #{basic_conv2d.1} parent=5 // pred_check
      _
    $region30: #{basic_conv2d.1} parent=5 // pred_check_branch
      %141 = sbr.rel (%p138) target = $region32
    $region31: #{basic_conv2d.1} parent=5 // pred_region
      %s142 = ssub.s32 %s9, 1
      %p143 = scmp.lt.s32.totalorder %s14, 1
      %s144 = scalar_select %p143, %s14, 1
      %s145 = smul.addr %s144, 43
      %s146 = smul.addr %s145, 8
      %s147 = scalar_lea.vmem %s0, %s146
      %p148 = pneg %p35
      %p149 = pneg %p32
      %p150 = pneg %p56
      %p151 = pneg %p53
      %p152 = pneg %p77
      %p153 = pneg %p74
      %p154 = pneg %p103
      %p155 = pneg %p100
      %p156 = scmp.lt.s32.totalorder %s14, 1
      %s157 = scalar_select %p156, %s14, 1
      %s158 = smul.addr %s157, 36
      %s159 = smul.addr %s158, 8
      %s160 = scalar_lea.vmem %s3, %s159
      %p161 = scmp.lt.s32.totalorder %s14, 1
      %s162 = scalar_select %p161, %s14, 1
      %s163 = smul.addr %s162, 43
      %s164 = smul.addr %s163, 8
      %s165 = scalar_lea.vmem %s0, %s164
      %p166 = scmp.lt.s32.totalorder %s14, 1
      %s167 = scalar_select %p166, %s14, 1
      %s168 = smul.addr %s167, 36
      %s169 = smul.addr %s168, 8
      %s170 = scalar_lea.vmem %s3, %s169
      %v171 = vld [vmem:[%s165] sm:$0xff]
      %v172 = vld [vmem:[%s165 + $0x8] sm:$0xff]
      %v173 = vld [vmem:[%s165 + $0x10] sm:$0xff]
      %v174 = vld [vmem:[%s165 + $0x18] sm:$0xff]
      %v175 = vld [vmem:[%s165 + $0x20] sm:$0xff]
      %v176 = vld [vmem:[%s165 + $0x28] sm:$0xff]
      %v177 = vld [vmem:[%s165 + $0x30] sm:$0xff]
      %v178 = vld [vmem:[%s165 + $0x38] sm:$0xff]
      %v179 = vld [vmem:[%s165 + $0x40] sm:$0xff]
      %v180 = vld [vmem:[%s165 + $0x48] sm:$0xff]
      %v181 = vld [vmem:[%s165 + $0x50] sm:$0xff]
      %v182 = vld [vmem:[%s165 + $0x58] sm:$0xff]
      %v183 = vld [vmem:[%s165 + $0x60] sm:$0xff]
      %v184 = vld [vmem:[%s165 + $0x68] sm:$0xff]
      %v185 = vld [vmem:[%s165 + $0x70] sm:$0xff]
      %v186 = vld [vmem:[%s165 + $0x78] sm:$0xff]
      %v187 = vld [vmem:[%s165 + $0x80] sm:$0xff]
      %v188 = vld [vmem:[%s165 + $0x88] sm:$0xff]
      %v189 = vld [vmem:[%s165 + $0x90] sm:$0xff]
      %v190 = vld [vmem:[%s165 + $0x98] sm:$0xff]
      %v191 = vld [vmem:[%s165 + $0xa0] sm:$0xff]
      %v192 = vld [vmem:[%s165 + $0xa8] sm:$0xff]
      %v193 = vld [vmem:[%s165 + $0xb0] sm:$0xff]
      %v194 = vld [vmem:[%s165 + $0xb8] sm:$0xff]
      %v195 = vld [vmem:[%s165 + $0xc0] sm:$0xff]
      %v196 = vld [vmem:[%s165 + $0xc8] sm:$0xff]
      %v197 = vld [vmem:[%s165 + $0xd0] sm:$0xff]
      %v198 = vld [vmem:[%s165 + $0xd8] sm:$0xff]
      %v199 = vld [vmem:[%s165 + $0xe0] sm:$0xff]
      %v200 = vld [vmem:[%s165 + $0xe8] sm:$0xff]
      %v201 = vld [vmem:[%s165 + $0xf0] sm:$0xff]
      %v202 = vld [vmem:[%s165 + $0xf8] sm:$0xff]
      %v203 = vld [vmem:[%s165 + $0x100] sm:$0xff]
      %v204 = vld [vmem:[%s165 + $0x108] sm:$0xff]
      %v205 = vld [vmem:[%s165 + $0x110] sm:$0xff]
      %v206 = vld [vmem:[%s165 + $0x118] sm:$0xff]
      %v207 = vld [vmem:[%s1] sm:$0xff]
      %v208 = vld [vmem:[%s165 + $0x1] sm:$0xff]
      %v209 = vld [vmem:[%s165 + $0x9] sm:$0xff]
      %v210 = vld [vmem:[%s165 + $0x11] sm:$0xff]
      %v211 = vld [vmem:[%s165 + $0x19] sm:$0xff]
      %v212 = vld [vmem:[%s165 + $0x21] sm:$0xff]
      %v213 = vld [vmem:[%s165 + $0x29] sm:$0xff]
      %v214 = vld [vmem:[%s165 + $0x31] sm:$0xff]
      %v215 = vld [vmem:[%s165 + $0x39] sm:$0xff]
      %v216 = vld [vmem:[%s165 + $0x41] sm:$0xff]
      %v217 = vld [vmem:[%s165 + $0x49] sm:$0xff]
      %v218 = vld [vmem:[%s165 + $0x51] sm:$0xff]
      %v219 = vld [vmem:[%s165 + $0x59] sm:$0xff]
      %v220 = vld [vmem:[%s165 + $0x61] sm:$0xff]
      %v221 = vld [vmem:[%s165 + $0x69] sm:$0xff]
      %v222 = vld [vmem:[%s165 + $0x71] sm:$0xff]
      %v223 = vld [vmem:[%s165 + $0x79] sm:$0xff]
      %v224 = vld [vmem:[%s165 + $0x81] sm:$0xff]
      %v225 = vld [vmem:[%s165 + $0x89] sm:$0xff]
      %v226 = vld [vmem:[%s165 + $0x91] sm:$0xff]
      %v227 = vld [vmem:[%s165 + $0x99] sm:$0xff]
      %v228 = vld [vmem:[%s165 + $0xa1] sm:$0xff]
      %v229 = vld [vmem:[%s165 + $0xa9] sm:$0xff]
      %v230 = vld [vmem:[%s165 + $0xb1] sm:$0xff]
      %v231 = vld [vmem:[%s165 + $0xb9] sm:$0xff]
      %v232 = vld [vmem:[%s165 + $0xc1] sm:$0xff]
      %v233 = vld [vmem:[%s165 + $0xc9] sm:$0xff]
      %v234 = vld [vmem:[%s165 + $0xd1] sm:$0xff]
      %v235 = vld [vmem:[%s165 + $0xd9] sm:$0xff]
      %v236 = vld [vmem:[%s165 + $0xe1] sm:$0xff]
      %v237 = vld [vmem:[%s165 + $0xe9] sm:$0xff]
      %v238 = vld [vmem:[%s165 + $0xf1] sm:$0xff]
      %v239 = vld [vmem:[%s165 + $0xf9] sm:$0xff]
      %v240 = vld [vmem:[%s165 + $0x101] sm:$0xff]
      %v241 = vld [vmem:[%s165 + $0x109] sm:$0xff]
      %v242 = vld [vmem:[%s165 + $0x111] sm:$0xff]
      %v243 = vld [vmem:[%s165 + $0x119] sm:$0xff]
      %s244 = scalar_lea.vmem %s1, 8
      %v245 = vld [vmem:[%s244] sm:$0xff]
      %vm246 = vcmask 64512
      %v248 = vsel %vm246, %v208, 0
      %v251 = vsel %vm246, %v209, 0
      %v254 = vsel %vm246, %v210, 0
      %v257 = vsel %vm246, %v211, 0
      %v260 = vsel %vm246, %v212, 0
      %v263 = vsel %vm246, %v213, 0
      %v266 = vsel %vm246, %v214, 0
      %v269 = vsel %vm246, %v215, 0
      %v272 = vsel %vm246, %v216, 0
      %v275 = vsel %vm246, %v217, 0
      %v278 = vsel %vm246, %v218, 0
      %v281 = vsel %vm246, %v219, 0
      %v284 = vsel %vm246, %v220, 0
      %v287 = vsel %vm246, %v221, 0
      %v290 = vsel %vm246, %v222, 0
      %v293 = vsel %vm246, %v223, 0
      %v296 = vsel %vm246, %v224, 0
      %v299 = vsel %vm246, %v225, 0
      %v302 = vsel %vm246, %v226, 0
      %v305 = vsel %vm246, %v227, 0
      %v308 = vsel %vm246, %v228, 0
      %v311 = vsel %vm246, %v229, 0
      %v314 = vsel %vm246, %v230, 0
      %v317 = vsel %vm246, %v231, 0
      %v320 = vsel %vm246, %v232, 0
      %v323 = vsel %vm246, %v233, 0
      %v326 = vsel %vm246, %v234, 0
      %v329 = vsel %vm246, %v235, 0
      %v332 = vsel %vm246, %v236, 0
      %v335 = vsel %vm246, %v237, 0
      %v338 = vsel %vm246, %v238, 0
      %v341 = vsel %vm246, %v239, 0
      %v344 = vsel %vm246, %v240, 0
      %v347 = vsel %vm246, %v241, 0
      %v350 = vsel %vm246, %v242, 0
      %v353 = vsel %vm246, %v243, 0
      %355 = vmatprep.subr.mxu0 0.0
      %356 = vmatpush1.msra.mxu0 %v245
      %357 = vmatprep.subr.mxu0 0.0
      %358 = vmatpush1.msra.mxu0 0.0
      %359 = vmatprep.subr.mxu0 0.0
      %360 = vmatpush1.msra.mxu0 0.0
      %361 = vmatprep.subr.mxu0 0.0
      %362 = vmatpush1.msra.mxu0 0.0
      %363 = vmatprep.subr.mxu0 0.0
      %364 = vmatpush1.msra.mxu0 0.0
      %365 = vmatprep.subr.mxu0 0.0
      %366 = vmatpush1.msra.mxu0 0.0
      %367 = vmatprep.subr.mxu0 0.0
      %368 = vmatpush1.msra.mxu0 0.0
      %369 = vmatprep.subr.mxu0 0.0
      %370 = vmatpush1.msra.mxu0 0.0
      %371 = vmatprep.subr.mxu0 0.0
      %372 = vmatpush1.msra.mxu0 0.0
      %373 = vmatprep.subr.mxu0 0.0
      %374 = vmatpush1.msra.mxu0 0.0
      %375 = vmatprep.subr.mxu0 0.0
      %376 = vmatpush1.msra.mxu0 0.0
      %377 = vmatprep.subr.mxu0 0.0
      %378 = vmatpush1.msra.mxu0 0.0
      %379 = vmatprep.subr.mxu0 0.0
      %380 = vmatpush1.msra.mxu0 0.0
      %381 = vmatprep.subr.mxu0 0.0
      %382 = vmatpush1.msra.mxu0 0.0
      %383 = vmatprep.subr.mxu0 0.0
      %384 = vmatpush1.msra.mxu0 0.0
      %385 = vmatprep.subr.mxu0 0.0
      %386 = vmatpush1.msra.mxu0 0.0
      %387 = vmatprep.subr.mxu0 0.0
      %388 = vmatpush1.msra.mxu0 0.0
      %389 = vmatprep.subr.mxu0 0.0
      %390 = vmatpush1.msra.mxu0 0.0
      %391 = vmatprep.subr.mxu0 0.0
      %392 = vmatpush1.msra.mxu0 0.0
      %393 = vmatprep.subr.mxu0 0.0
      %394 = vmatpush1.msra.mxu0 0.0
      %395 = vmatprep.subr.mxu0 0.0
      %396 = vmatpush1.msra.mxu0 0.0
      %397 = vmatprep.subr.mxu0 0.0
      %398 = vmatpush1.msra.mxu0 0.0
      %399 = vmatprep.subr.mxu0 0.0
      %400 = vmatpush1.msra.mxu0 0.0
      %401 = vmatprep.subr.mxu0 0.0
      %402 = vmatpush1.msra.mxu0 0.0
      %403 = vmatprep.subr.mxu0 0.0
      %404 = vmatpush1.msra.mxu0 0.0
      %405 = vmatprep.subr.mxu0 0.0
      %406 = vmatpush1.msra.mxu0 0.0
      %407 = vmatprep.subr.mxu0 0.0
      %408 = vmatpush1.msra.mxu0 0.0
      %409 = vmatprep.subr.mxu0 0.0
      %410 = vmatpush1.msra.mxu0 0.0
      %411 = vmatprep.subr.mxu0 0.0
      %412 = vmatpush1.msra.mxu0 0.0
      %413 = vmatprep.subr.mxu0 0.0
      %414 = vmatpush1.msra.mxu0 0.0
      %415 = vmatprep.subr.mxu0 0.0
      %416 = vmatpush1.msra.mxu0 0.0
      %417 = vmatprep.subr.mxu0 0.0
      %418 = vmatpush1.msra.mxu0 0.0
      %419 = vmatprep.mubr.f32.mxu0 0.0
      %420 = vmatmul.mubr.f32.gmra.mrb[0].mxu0 %v248
      %v421 = vpop.f32.mrb[0].mxu0
      %v422 = vadd.f32 0.0, %v421
      %v423 = vpop.f32.mrb[0].mxu0
      %424 = vmatprep.mubr.f32.mxu0 0.0
      %425 = vmatmul.mubr.f32.gmra.mrb[0].mxu0 %v251
      %v426 = vpop.f32.mrb[0].mxu0
      %v427 = vadd.f32 0.0, %v426
      %v428 = vpop.f32.mrb[0].mxu0
      %429 = vmatprep.mubr.f32.mxu0 0.0
      %430 = vmatmul.mubr.f32.gmra.mrb[0].mxu0 %v254
      %v431 = vpop.f32.mrb[0].mxu0
      %v432 = vadd.f32 0.0, %v431
      %v433 = vpop.f32.mrb[0].mxu0
      %434 = vmatprep.mubr.f32.mxu0 0.0
      %435 = vmatmul.mubr.f32.gmra.mrb[0].mxu0 %v257
      %v436 = vpop.f32.mrb[0].mxu0
      %v437 = vadd.f32 0.0, %v436
      %v438 = vpop.f32.mrb[0].mxu0
      %439 = vmatprep.mubr.f32.mxu0 0.0
      %440 = vmatmul.mubr.f32.gmra.mrb[0].mxu0 %v260
      %v441 = vpop.f32.mrb[0].mxu0
      %v442 = vadd.f32 0.0, %v441
      %v443 = vpop.f32.mrb[0].mxu0
      %444 = vmatprep.mubr.f32.mxu0 0.0
      %445 = vmatmul.mubr.f32.gmra.mrb[0].mxu0 %v263
      %v446 = vpop.f32.mrb[0].mxu0
      %v447 = vadd.f32 0.0, %v446
      %v448 = vpop.f32.mrb[0].mxu0
      %449 = vmatprep.mubr.f32.mxu0 0.0
      %450 = vmatmul.mubr.f32.gmra.mrb[0].mxu0 %v266
      %v451 = vpop.f32.mrb[0].mxu0
      %v452 = vadd.f32 0.0, %v451
      %v453 = vpop.f32.mrb[0].mxu0
      %454 = vmatprep.mubr.f32.mxu0 0.0
      %455 = vmatmul.mubr.f32.gmra.mrb[0].mxu0 %v269
      %v456 = vpop.f32.mrb[0].mxu0
      %v457 = vadd.f32 0.0, %v456
      %v458 = vpop.f32.mrb[0].mxu0
      %459 = vmatprep.mubr.f32.mxu0 0.0
      %460 = vmatmul.mubr.f32.gmra.mrb[0].mxu0 %v272
      %v461 = vpop.f32.mrb[0].mxu0
      %v462 = vadd.f32 0.0, %v461
      %v463 = vpop.f32.mrb[0].mxu0
      %464 = vmatprep.mubr.f32.mxu0 0.0
      %465 = vmatmul.mubr.f32.gmra.mrb[0].mxu0 %v275
      %v466 = vpop.f32.mrb[0].mxu0
      %v467 = vadd.f32 0.0, %v466
      %v468 = vpop.f32.mrb[0].mxu0
      %469 = vmatprep.mubr.f32.mxu0 0.0
      %470 = vmatmul.mubr.f32.gmra.mrb[0].mxu0 %v278
      %v471 = vpop.f32.mrb[0].mxu0
      %v472 = vadd.f32 0.0, %v471
      %v473 = vpop.f32.mrb[0].mxu0
      %474 = vmatprep.mubr.f32.mxu0 0.0
      %475 = vmatmul.mubr.f32.gmra.mrb[0].mxu0 %v281
      %v476 = vpop.f32.mrb[0].mxu0
      %v477 = vadd.f32 0.0, %v476
      %v478 = vpop.f32.mrb[0].mxu0
      %479 = vmatprep.mubr.f32.mxu0 0.0
      %480 = vmatmul.mubr.f32.gmra.mrb[0].mxu0 %v284
      %v481 = vpop.f32.mrb[0].mxu0
      %v482 = vadd.f32 0.0, %v481
      %v483 = vpop.f32.mrb[0].mxu0
      %484 = vmatprep.mubr.f32.mxu0 0.0
      %485 = vmatmul.mubr.f32.gmra.mrb[0].mxu0 %v287
      %v486 = vpop.f32.mrb[0].mxu0
      %v487 = vadd.f32 0.0, %v486
      %v488 = vpop.f32.mrb[0].mxu0
      %489 = vmatprep.mubr.f32.mxu0 0.0
      %490 = vmatmul.mubr.f32.gmra.mrb[0].mxu0 %v290
      %v491 = vpop.f32.mrb[0].mxu0
      %v492 = vadd.f32 0.0, %v491
      %v493 = vpop.f32.mrb[0].mxu0
      %494 = vmatprep.mubr.f32.mxu0 0.0
      %495 = vmatmul.mubr.f32.gmra.mrb[0].mxu0 %v293
      %v496 = vpop.f32.mrb[0].mxu0
      %v497 = vadd.f32 0.0, %v496
      %v498 = vpop.f32.mrb[0].mxu0
      %499 = vmatprep.mubr.f32.mxu0 0.0
      %500 = vmatmul.mubr.f32.gmra.mrb[0].mxu0 %v296
      %v501 = vpop.f32.mrb[0].mxu0
      %v502 = vadd.f32 0.0, %v501
      %v503 = vpop.f32.mrb[0].mxu0
      %504 = vmatprep.mubr.f32.mxu0 0.0
      %505 = vmatmul.mubr.f32.gmra.mrb[0].mxu0 %v299
      %v506 = vpop.f32.mrb[0].mxu0
      %v507 = vadd.f32 0.0, %v506
      %v508 = vpop.f32.mrb[0].mxu0
      %509 = vmatprep.mubr.f32.mxu0 0.0
      %510 = vmatmul.mubr.f32.gmra.mrb[0].mxu0 %v302
      %v511 = vpop.f32.mrb[0].mxu0
      %v512 = vadd.f32 0.0, %v511
      %v513 = vpop.f32.mrb[0].mxu0
      %514 = vmatprep.mubr.f32.mxu0 0.0
      %515 = vmatmul.mubr.f32.gmra.mrb[0].mxu0 %v305
      %v516 = vpop.f32.mrb[0].mxu0
      %v517 = vadd.f32 0.0, %v516
      %v518 = vpop.f32.mrb[0].mxu0
      %519 = vmatprep.mubr.f32.mxu0 0.0
      %520 = vmatmul.mubr.f32.gmra.mrb[0].mxu0 %v308
      %v521 = vpop.f32.mrb[0].mxu0
      %v522 = vadd.f32 0.0, %v521
      %v523 = vpop.f32.mrb[0].mxu0
      %524 = vmatprep.mubr.f32.mxu0 0.0
      %525 = vmatmul.mubr.f32.gmra.mrb[0].mxu0 %v311
      %v526 = vpop.f32.mrb[0].mxu0
      %v527 = vadd.f32 0.0, %v526
      %v528 = vpop.f32.mrb[0].mxu0
      %529 = vmatprep.mubr.f32.mxu0 0.0
      %530 = vmatmul.mubr.f32.gmra.mrb[0].mxu0 %v314
      %v531 = vpop.f32.mrb[0].mxu0
      %v532 = vadd.f32 0.0, %v531
      %v533 = vpop.f32.mrb[0].mxu0
      %534 = vmatprep.mubr.f32.mxu0 0.0
      %535 = vmatmul.mubr.f32.gmra.mrb[0].mxu0 %v317
      %v536 = vpop.f32.mrb[0].mxu0
      %v537 = vadd.f32 0.0, %v536
      %v538 = vpop.f32.mrb[0].mxu0
      %539 = vmatprep.mubr.f32.mxu0 0.0
      %540 = vmatmul.mubr.f32.gmra.mrb[0].mxu0 %v320
      %v541 = vpop.f32.mrb[0].mxu0
      %v542 = vadd.f32 0.0, %v541
      %v543 = vpop.f32.mrb[0].mxu0
      %544 = vmatprep.mubr.f32.mxu0 0.0
      %545 = vmatmul.mubr.f32.gmra.mrb[0].mxu0 %v323
      %v546 = vpop.f32.mrb[0].mxu0
      %v547 = vadd.f32 0.0, %v546
      %v548 = vpop.f32.mrb[0].mxu0
      %549 = vmatprep.mubr.f32.mxu0 0.0
      %550 = vmatmul.mubr.f32.gmra.mrb[0].mxu0 %v326
      %v551 = vpop.f32.mrb[0].mxu0
      %v552 = vadd.f32 0.0, %v551
      %v553 = vpop.f32.mrb[0].mxu0
      %554 = vmatprep.mubr.f32.mxu0 0.0
      %555 = vmatmul.mubr.f32.gmra.mrb[0].mxu0 %v329
      %v556 = vpop.f32.mrb[0].mxu0
      %v557 = vadd.f32 0.0, %v556
      %v558 = vpop.f32.mrb[0].mxu0
      %559 = vmatprep.mubr.f32.mxu0 0.0
      %560 = vmatmul.mubr.f32.gmra.mrb[0].mxu0 %v332
      %v561 = vpop.f32.mrb[0].mxu0
      %v562 = vadd.f32 0.0, %v561
      %v563 = vpop.f32.mrb[0].mxu0
      %564 = vmatprep.mubr.f32.mxu0 0.0
      %565 = vmatmul.mubr.f32.gmra.mrb[0].mxu0 %v335
      %v566 = vpop.f32.mrb[0].mxu0
      %v567 = vadd.f32 0.0, %v566
      %v568 = vpop.f32.mrb[0].mxu0
      %569 = vmatprep.mubr.f32.mxu0 0.0
      %570 = vmatmul.mubr.f32.gmra.mrb[0].mxu0 %v338
      %v571 = vpop.f32.mrb[0].mxu0
      %v572 = vadd.f32 0.0, %v571
      %v573 = vpop.f32.mrb[0].mxu0
      %574 = vmatprep.mubr.f32.mxu0 0.0
      %575 = vmatmul.mubr.f32.gmra.mrb[0].mxu0 %v341
      %v576 = vpop.f32.mrb[0].mxu0
      %v577 = vadd.f32 0.0, %v576
      %v578 = vpop.f32.mrb[0].mxu0
      %579 = vmatprep.mubr.f32.mxu0 0.0
      %580 = vmatmul.mubr.f32.gmra.mrb[0].mxu0 %v344
      %v581 = vpop.f32.mrb[0].mxu0
      %v582 = vadd.f32 0.0, %v581
      %v583 = vpop.f32.mrb[0].mxu0
      %584 = vmatprep.mubr.f32.mxu0 0.0
      %585 = vmatmul.mubr.f32.gmra.mrb[0].mxu0 %v347
      %v586 = vpop.f32.mrb[0].mxu0
      %v587 = vadd.f32 0.0, %v586
      %v588 = vpop.f32.mrb[0].mxu0
      %589 = vmatprep.mubr.f32.mxu0 0.0
      %590 = vmatmul.mubr.f32.gmra.mrb[0].mxu0 %v350
      %v591 = vpop.f32.mrb[0].mxu0
      %v592 = vadd.f32 0.0, %v591
      %v593 = vpop.f32.mrb[0].mxu0
      %594 = vmatprep.mubr.f32.mxu0 0.0
      %595 = vmatmul.mubr.f32.gmra.mrb[0].mxu0 %v353
      %v596 = vpop.f32.mrb[0].mxu0
      %v597 = vadd.f32 0.0, %v596
      %v598 = vpop.f32.mrb[0].mxu0
      %599 = vdwg.mxu0
      %v601 = vsel %vm246, %v171, 0
      %v604 = vsel %vm246, %v172, 0
      %v607 = vsel %vm246, %v173, 0
      %v610 = vsel %vm246, %v174, 0
      %v613 = vsel %vm246, %v175, 0
      %v616 = vsel %vm246, %v176, 0
      %v619 = vsel %vm246, %v177, 0
      %v622 = vsel %vm246, %v178, 0
      %v625 = vsel %vm246, %v179, 0
      %v628 = vsel %vm246, %v180, 0
      %v631 = vsel %vm246, %v181, 0
      %v634 = vsel %vm246, %v182, 0
      %v637 = vsel %vm246, %v183, 0
      %v640 = vsel %vm246, %v184, 0
      %v643 = vsel %vm246, %v185, 0
      %v646 = vsel %vm246, %v186, 0
      %v649 = vsel %vm246, %v187, 0
      %v652 = vsel %vm246, %v188, 0
      %v655 = vsel %vm246, %v189, 0
      %v658 = vsel %vm246, %v190, 0
      %v661 = vsel %vm246, %v191, 0
      %v664 = vsel %vm246, %v192, 0
      %v667 = vsel %vm246, %v193, 0
      %v670 = vsel %vm246, %v194, 0
      %v673 = vsel %vm246, %v195, 0
      %v676 = vsel %vm246, %v196, 0
      %v679 = vsel %vm246, %v197, 0
      %v682 = vsel %vm246, %v198, 0
      %v685 = vsel %vm246, %v199, 0
      %v688 = vsel %vm246, %v200, 0
      %v691 = vsel %vm246, %v201, 0
      %v694 = vsel %vm246, %v202, 0
      %v697 = vsel %vm246, %v203, 0
      %v700 = vsel %vm246, %v204, 0
      %v703 = vsel %vm246, %v205, 0
      %v706 = vsel %vm246, %v206, 0
      %708 = vmatprep.subr.mxu0 0.0
      %709 = vmatpush1.msra.mxu0 %v207
      %710 = vmatprep.subr.mxu0 0.0
      %711 = vmatpush1.msra.mxu0 0.0
      %712 = vmatprep.subr.mxu0 0.0
      %713 = vmatpush1.msra.mxu0 0.0
      %714 = vmatprep.subr.mxu0 0.0
      %715 = vmatpush1.msra.mxu0 0.0
      %716 = vmatprep.subr.mxu0 0.0
      %717 = vmatpush1.msra.mxu0 0.0
      %718 = vmatprep.subr.mxu0 0.0
      %719 = vmatpush1.msra.mxu0 0.0
      %720 = vmatprep.subr.mxu0 0.0
      %721 = vmatpush1.msra.mxu0 0.0
      %722 = vmatprep.subr.mxu0 0.0
      %723 = vmatpush1.msra.mxu0 0.0
      %724 = vmatprep.subr.mxu0 0.0
      %725 = vmatpush1.msra.mxu0 0.0
      %726 = vmatprep.subr.mxu0 0.0
      %727 = vmatpush1.msra.mxu0 0.0
      %728 = vmatprep.subr.mxu0 0.0
      %729 = vmatpush1.msra.mxu0 0.0
      %730 = vmatprep.subr.mxu0 0.0
      %731 = vmatpush1.msra.mxu0 0.0
      %732 = vmatprep.subr.mxu0 0.0
      %733 = vmatpush1.msra.mxu0 0.0
      %734 = vmatprep.subr.mxu0 0.0
      %735 = vmatpush1.msra.mxu0 0.0
      %736 = vmatprep.subr.mxu0 0.0
      %737 = vmatpush1.msra.mxu0 0.0
      %738 = vmatprep.subr.mxu0 0.0
      %739 = vmatpush1.msra.mxu0 0.0
      %740 = vmatprep.subr.mxu0 0.0
      %741 = vmatpush1.msra.mxu0 0.0
      %742 = vmatprep.subr.mxu0 0.0
      %743 = vmatpush1.msra.mxu0 0.0
      %744 = vmatprep.subr.mxu0 0.0
      %745 = vmatpush1.msra.mxu0 0.0
      %746 = vmatprep.subr.mxu0 0.0
      %747 = vmatpush1.msra.mxu0 0.0
      %748 = vmatprep.subr.mxu0 0.0
      %749 = vmatpush1.msra.mxu0 0.0
      %750 = vmatprep.subr.mxu0 0.0
      %751 = vmatpush1.msra.mxu0 0.0
      %752 = vmatprep.subr.mxu0 0.0
      %753 = vmatpush1.msra.mxu0 0.0
      %754 = vmatprep.subr.mxu0 0.0
      %755 = vmatpush1.msra.mxu0 0.0
      %756 = vmatprep.subr.mxu0 0.0
      %757 = vmatpush1.msra.mxu0 0.0
      %758 = vmatprep.subr.mxu0 0.0
      %759 = vmatpush1.msra.mxu0 0.0
      %760 = vmatprep.subr.mxu0 0.0
      %761 = vmatpush1.msra.mxu0 0.0
      %762 = vmatprep.subr.mxu0 0.0
      %763 = vmatpush1.msra.mxu0 0.0
      %764 = vmatprep.subr.mxu0 0.0
      %765 = vmatpush1.msra.mxu0 0.0
      %766 = vmatprep.subr.mxu0 0.0
      %767 = vmatpush1.msra.mxu0 0.0
      %768 = vmatprep.subr.mxu0 0.0
      %769 = vmatpush1.msra.mxu0 0.0
      %770 = vmatprep.subr.mxu0 0.0
      %771 = vmatpush1.msra.mxu0 0.0
      %772 = vmatprep.mubr.f32.mxu0 0.0
      %773 = vmatmul.mubr.f32.gmra.mrb[0].mxu0 %v601
      %v774 = vpop.f32.mrb[0].mxu0
      %v775 = vadd.f32 %v422, %v774
      %v776 = vpop.f32.mrb[0].mxu0
      %777 = vmatprep.mubr.f32.mxu0 0.0
      %778 = vmatmul.mubr.f32.gmra.mrb[0].mxu0 %v604
      %v779 = vpop.f32.mrb[0].mxu0
      %v780 = vadd.f32 %v427, %v779
      %v781 = vpop.f32.mrb[0].mxu0
      %782 = vmatprep.mubr.f32.mxu0 0.0
      %783 = vmatmul.mubr.f32.gmra.mrb[0].mxu0 %v607
      %v784 = vpop.f32.mrb[0].mxu0
      %v785 = vadd.f32 %v432, %v784
      %v786 = vpop.f32.mrb[0].mxu0
      %787 = vmatprep.mubr.f32.mxu0 0.0
      %788 = vmatmul.mubr.f32.gmra.mrb[0].mxu0 %v610
      %v789 = vpop.f32.mrb[0].mxu0
      %v790 = vadd.f32 %v437, %v789
      %v791 = vpop.f32.mrb[0].mxu0
      %792 = vmatprep.mubr.f32.mxu0 0.0
      %793 = vmatmul.mubr.f32.gmra.mrb[0].mxu0 %v613
      %v794 = vpop.f32.mrb[0].mxu0
      %v795 = vadd.f32 %v442, %v794
      %v796 = vpop.f32.mrb[0].mxu0
      %797 = vmatprep.mubr.f32.mxu0 0.0
      %798 = vmatmul.mubr.f32.gmra.mrb[0].mxu0 %v616
      %v799 = vpop.f32.mrb[0].mxu0
      %v800 = vadd.f32 %v447, %v799
      %v801 = vpop.f32.mrb[0].mxu0
      %802 = vmatprep.mubr.f32.mxu0 0.0
      %803 = vmatmul.mubr.f32.gmra.mrb[0].mxu0 %v619
      %v804 = vpop.f32.mrb[0].mxu0
      %v805 = vadd.f32 %v452, %v804
      %v806 = vpop.f32.mrb[0].mxu0
      %807 = vmatprep.mubr.f32.mxu0 0.0
      %808 = vmatmul.mubr.f32.gmra.mrb[0].mxu0 %v622
      %v809 = vpop.f32.mrb[0].mxu0
      %v810 = vadd.f32 %v457, %v809
      %v811 = vpop.f32.mrb[0].mxu0
      %812 = vmatprep.mubr.f32.mxu0 0.0
      %813 = vmatmul.mubr.f32.gmra.mrb[0].mxu0 %v625
      %v814 = vpop.f32.mrb[0].mxu0
      %v815 = vadd.f32 %v462, %v814
      %v816 = vpop.f32.mrb[0].mxu0
      %817 = vmatprep.mubr.f32.mxu0 0.0
      %818 = vmatmul.mubr.f32.gmra.mrb[0].mxu0 %v628
      %v819 = vpop.f32.mrb[0].mxu0
      %v820 = vadd.f32 %v467, %v819
      %v821 = vpop.f32.mrb[0].mxu0
      %822 = vmatprep.mubr.f32.mxu0 0.0
      %823 = vmatmul.mubr.f32.gmra.mrb[0].mxu0 %v631
      %v824 = vpop.f32.mrb[0].mxu0
      %v825 = vadd.f32 %v472, %v824
      %v826 = vpop.f32.mrb[0].mxu0
      %827 = vmatprep.mubr.f32.mxu0 0.0
      %828 = vmatmul.mubr.f32.gmra.mrb[0].mxu0 %v634
      %v829 = vpop.f32.mrb[0].mxu0
      %v830 = vadd.f32 %v477, %v829
      %v831 = vpop.f32.mrb[0].mxu0
      %832 = vmatprep.mubr.f32.mxu0 0.0
      %833 = vmatmul.mubr.f32.gmra.mrb[0].mxu0 %v637
      %v834 = vpop.f32.mrb[0].mxu0
      %v835 = vadd.f32 %v482, %v834
      %v836 = vpop.f32.mrb[0].mxu0
      %837 = vmatprep.mubr.f32.mxu0 0.0
      %838 = vmatmul.mubr.f32.gmra.mrb[0].mxu0 %v640
      %v839 = vpop.f32.mrb[0].mxu0
      %v840 = vadd.f32 %v487, %v839
      %v841 = vpop.f32.mrb[0].mxu0
      %842 = vmatprep.mubr.f32.mxu0 0.0
      %843 = vmatmul.mubr.f32.gmra.mrb[0].mxu0 %v643
      %v844 = vpop.f32.mrb[0].mxu0
      %v845 = vadd.f32 %v492, %v844
      %v846 = vpop.f32.mrb[0].mxu0
      %847 = vmatprep.mubr.f32.mxu0 0.0
      %848 = vmatmul.mubr.f32.gmra.mrb[0].mxu0 %v646
      %v849 = vpop.f32.mrb[0].mxu0
      %v850 = vadd.f32 %v497, %v849
      %v851 = vpop.f32.mrb[0].mxu0
      %852 = vmatprep.mubr.f32.mxu0 0.0
      %853 = vmatmul.mubr.f32.gmra.mrb[0].mxu0 %v649
      %v854 = vpop.f32.mrb[0].mxu0
      %v855 = vadd.f32 %v502, %v854
      %v856 = vpop.f32.mrb[0].mxu0
      %857 = vmatprep.mubr.f32.mxu0 0.0
      %858 = vmatmul.mubr.f32.gmra.mrb[0].mxu0 %v652
      %v859 = vpop.f32.mrb[0].mxu0
      %v860 = vadd.f32 %v507, %v859
      %v861 = vpop.f32.mrb[0].mxu0
      %862 = vmatprep.mubr.f32.mxu0 0.0
      %863 = vmatmul.mubr.f32.gmra.mrb[0].mxu0 %v655
      %v864 = vpop.f32.mrb[0].mxu0
      %v865 = vadd.f32 %v512, %v864
      %v866 = vpop.f32.mrb[0].mxu0
      %867 = vmatprep.mubr.f32.mxu0 0.0
      %868 = vmatmul.mubr.f32.gmra.mrb[0].mxu0 %v658
      %v869 = vpop.f32.mrb[0].mxu0
      %v870 = vadd.f32 %v517, %v869
      %v871 = vpop.f32.mrb[0].mxu0
      %872 = vmatprep.mubr.f32.mxu0 0.0
      %873 = vmatmul.mubr.f32.gmra.mrb[0].mxu0 %v661
      %v874 = vpop.f32.mrb[0].mxu0
      %v875 = vadd.f32 %v522, %v874
      %v876 = vpop.f32.mrb[0].mxu0
      %877 = vmatprep.mubr.f32.mxu0 0.0
      %878 = vmatmul.mubr.f32.gmra.mrb[0].mxu0 %v664
      %v879 = vpop.f32.mrb[0].mxu0
      %v880 = vadd.f32 %v527, %v879
      %v881 = vpop.f32.mrb[0].mxu0
      %882 = vmatprep.mubr.f32.mxu0 0.0
      %883 = vmatmul.mubr.f32.gmra.mrb[0].mxu0 %v667
      %v884 = vpop.f32.mrb[0].mxu0
      %v885 = vadd.f32 %v532, %v884
      %v886 = vpop.f32.mrb[0].mxu0
      %887 = vmatprep.mubr.f32.mxu0 0.0
      %888 = vmatmul.mubr.f32.gmra.mrb[0].mxu0 %v670
      %v889 = vpop.f32.mrb[0].mxu0
      %v890 = vadd.f32 %v537, %v889
      %v891 = vpop.f32.mrb[0].mxu0
      %892 = vmatprep.mubr.f32.mxu0 0.0
      %893 = vmatmul.mubr.f32.gmra.mrb[0].mxu0 %v673
      %v894 = vpop.f32.mrb[0].mxu0
      %v895 = vadd.f32 %v542, %v894
      %v896 = vpop.f32.mrb[0].mxu0
      %897 = vmatprep.mubr.f32.mxu0 0.0
      %898 = vmatmul.mubr.f32.gmra.mrb[0].mxu0 %v676
      %v899 = vpop.f32.mrb[0].mxu0
      %v900 = vadd.f32 %v547, %v899
      %v901 = vpop.f32.mrb[0].mxu0
      %902 = vmatprep.mubr.f32.mxu0 0.0
      %903 = vmatmul.mubr.f32.gmra.mrb[0].mxu0 %v679
      %v904 = vpop.f32.mrb[0].mxu0
      %v905 = vadd.f32 %v552, %v904
      %v906 = vpop.f32.mrb[0].mxu0
      %907 = vmatprep.mubr.f32.mxu0 0.0
      %908 = vmatmul.mubr.f32.gmra.mrb[0].mxu0 %v682
      %v909 = vpop.f32.mrb[0].mxu0
      %v910 = vadd.f32 %v557, %v909
      %v911 = vpop.f32.mrb[0].mxu0
      %912 = vmatprep.mubr.f32.mxu0 0.0
      %913 = vmatmul.mubr.f32.gmra.mrb[0].mxu0 %v685
      %v914 = vpop.f32.mrb[0].mxu0
      %v915 = vadd.f32 %v562, %v914
      %v916 = vpop.f32.mrb[0].mxu0
      %917 = vmatprep.mubr.f32.mxu0 0.0
      %918 = vmatmul.mubr.f32.gmra.mrb[0].mxu0 %v688
      %v919 = vpop.f32.mrb[0].mxu0
      %v920 = vadd.f32 %v567, %v919
      %v921 = vpop.f32.mrb[0].mxu0
      %922 = vmatprep.mubr.f32.mxu0 0.0
      %923 = vmatmul.mubr.f32.gmra.mrb[0].mxu0 %v691
      %v924 = vpop.f32.mrb[0].mxu0
      %v925 = vadd.f32 %v572, %v924
      %v926 = vpop.f32.mrb[0].mxu0
      %927 = vmatprep.mubr.f32.mxu0 0.0
      %928 = vmatmul.mubr.f32.gmra.mrb[0].mxu0 %v694
      %v929 = vpop.f32.mrb[0].mxu0
      %v930 = vadd.f32 %v577, %v929
      %v931 = vpop.f32.mrb[0].mxu0
      %932 = vmatprep.mubr.f32.mxu0 0.0
      %933 = vmatmul.mubr.f32.gmra.mrb[0].mxu0 %v697
      %v934 = vpop.f32.mrb[0].mxu0
      %v935 = vadd.f32 %v582, %v934
      %v936 = vpop.f32.mrb[0].mxu0
      %937 = vmatprep.mubr.f32.mxu0 0.0
      %938 = vmatmul.mubr.f32.gmra.mrb[0].mxu0 %v700
      %v939 = vpop.f32.mrb[0].mxu0
      %v940 = vadd.f32 %v587, %v939
      %v941 = vpop.f32.mrb[0].mxu0
      %942 = vmatprep.mubr.f32.mxu0 0.0
      %943 = vmatmul.mubr.f32.gmra.mrb[0].mxu0 %v703
      %v944 = vpop.f32.mrb[0].mxu0
      %v945 = vadd.f32 %v592, %v944
      %v946 = vpop.f32.mrb[0].mxu0
      %947 = vmatprep.mubr.f32.mxu0 0.0
      %948 = vmatmul.mubr.f32.gmra.mrb[0].mxu0 %v706
      %v949 = vpop.f32.mrb[0].mxu0
      %v950 = vadd.f32 %v597, %v949
      %v951 = vpop.f32.mrb[0].mxu0
      %952 = vdwg.mxu0
      %v953 = vld [vmem:[%s165 + $0x2] sm:$0xff]
      %v954 = vld [vmem:[%s165 + $0xa] sm:$0xff]
      %v955 = vld [vmem:[%s165 + $0x12] sm:$0xff]
      %v956 = vld [vmem:[%s165 + $0x1a] sm:$0xff]
      %v957 = vld [vmem:[%s165 + $0x22] sm:$0xff]
      %v958 = vld [vmem:[%s165 + $0x2a] sm:$0xff]
      %v959 = vld [vmem:[%s165 + $0x32] sm:$0xff]
      %v960 = vld [vmem:[%s165 + $0x3a] sm:$0xff]
      %v961 = vld [vmem:[%s165 + $0x42] sm:$0xff]
      %v962 = vld [vmem:[%s165 + $0x4a] sm:$0xff]
      %v963 = vld [vmem:[%s165 + $0x52] sm:$0xff]
      %v964 = vld [vmem:[%s165 + $0x5a] sm:$0xff]
      %v965 = vld [vmem:[%s165 + $0x62] sm:$0xff]
      %v966 = vld [vmem:[%s165 + $0x6a] sm:$0xff]
      %v967 = vld [vmem:[%s165 + $0x72] sm:$0xff]
      %v968 = vld [vmem:[%s165 + $0x7a] sm:$0xff]
      %v969 = vld [vmem:[%s165 + $0x82] sm:$0xff]
      %v970 = vld [vmem:[%s165 + $0x8a] sm:$0xff]
      %v971 = vld [vmem:[%s165 + $0x92] sm:$0xff]
      %v972 = vld [vmem:[%s165 + $0x9a] sm:$0xff]
      %v973 = vld [vmem:[%s165 + $0xa2] sm:$0xff]
      %v974 = vld [vmem:[%s165 + $0xaa] sm:$0xff]
      %v975 = vld [vmem:[%s165 + $0xb2] sm:$0xff]
      %v976 = vld [vmem:[%s165 + $0xba] sm:$0xff]
      %v977 = vld [vmem:[%s165 + $0xc2] sm:$0xff]
      %v978 = vld [vmem:[%s165 + $0xca] sm:$0xff]
      %v979 = vld [vmem:[%s165 + $0xd2] sm:$0xff]
      %v980 = vld [vmem:[%s165 + $0xda] sm:$0xff]
      %v981 = vld [vmem:[%s165 + $0xe2] sm:$0xff]
      %v982 = vld [vmem:[%s165 + $0xea] sm:$0xff]
      %v983 = vld [vmem:[%s165 + $0xf2] sm:$0xff]
      %v984 = vld [vmem:[%s165 + $0xfa] sm:$0xff]
      %v985 = vld [vmem:[%s165 + $0x102] sm:$0xff]
      %v986 = vld [vmem:[%s165 + $0x10a] sm:$0xff]
      %v987 = vld [vmem:[%s165 + $0x112] sm:$0xff]
      %v988 = vld [vmem:[%s165 + $0x11a] sm:$0xff]
      %s989 = scalar_lea.vmem %s1, 16
      %v990 = vld [vmem:[%s989] sm:$0xff]
      %v992 = vsel %vm246, %v953, 0
      %v995 = vsel %vm246, %v954, 0
      %v998 = vsel %vm246, %v955, 0
      %v1001 = vsel %vm246, %v956, 0
      %v1004 = vsel %vm246, %v957, 0
      %v1007 = vsel %vm246, %v958, 0
      %v1010 = vsel %vm246, %v959, 0
      %v1013 = vsel %vm246, %v960, 0
      %v1016 = vsel %vm246, %v961, 0
      %v1019 = vsel %vm246, %v962, 0
      %v1022 = vsel %vm246, %v963, 0
      %v1025 = vsel %vm246, %v964, 0
      %v1028 = vsel %vm246, %v965, 0
      %v1031 = vsel %vm246, %v966, 0
      %v1034 = vsel %vm246, %v967, 0
      %v1037 = vsel %vm246, %v968, 0
      %v1040 = vsel %vm246, %v969, 0
      %v1043 = vsel %vm246, %v970, 0
      %v1046 = vsel %vm246, %v971, 0
      %v1049 = vsel %vm246, %v972, 0
      %v1052 = vsel %vm246, %v973, 0
      %v1055 = vsel %vm246, %v974, 0
      %v1058 = vsel %vm246, %v975, 0
      %v1061 = vsel %vm246, %v976, 0
      %v1064 = vsel %vm246, %v977, 0
      %v1067 = vsel %vm246, %v978, 0
      %v1070 = vsel %vm246, %v979, 0
      %v1073 = vsel %vm246, %v980, 0
      %v1076 = vsel %vm246, %v981, 0
      %v1079 = vsel %vm246, %v982, 0
      %v1082 = vsel %vm246, %v983, 0
      %v1085 = vsel %vm246, %v984, 0
      %v1088 = vsel %vm246, %v985, 0
      %v1091 = vsel %vm246, %v986, 0
      %v1094 = vsel %vm246, %v987, 0
      %v1097 = vsel %vm246, %v988, 0
      %1099 = vmatprep.subr.mxu0 0.0
      %1100 = vmatpush1.msra.mxu0 %v990
      %1101 = vmatprep.subr.mxu0 0.0
      %1102 = vmatpush1.msra.mxu0 0.0
      %1103 = vmatprep.subr.mxu0 0.0
      %1104 = vmatpush1.msra.mxu0 0.0
      %1105 = vmatprep.subr.mxu0 0.0
      %1106 = vmatpush1.msra.mxu0 0.0
      %1107 = vmatprep.subr.mxu0 0.0
      %1108 = vmatpush1.msra.mxu0 0.0
      %1109 = vmatprep.subr.mxu0 0.0
      %1110 = vmatpush1.msra.mxu0 0.0
      %1111 = vmatprep.subr.mxu0 0.0
      %1112 = vmatpush1.msra.mxu0 0.0
      %1113 = vmatprep.subr.mxu0 0.0
      %1114 = vmatpush1.msra.mxu0 0.0
      %1115 = vmatprep.subr.mxu0 0.0
      %1116 = vmatpush1.msra.mxu0 0.0
      %1117 = vmatprep.subr.mxu0 0.0
      %1118 = vmatpush1.msra.mxu0 0.0
      %1119 = vmatprep.subr.mxu0 0.0
      %1120 = vmatpush1.msra.mxu0 0.0
      %1121 = vmatprep.subr.mxu0 0.0
      %1122 = vmatpush1.msra.mxu0 0.0
      %1123 = vmatprep.subr.mxu0 0.0
      %1124 = vmatpush1.msra.mxu0 0.0
      %1125 = vmatprep.subr.mxu0 0.0
      %1126 = vmatpush1.msra.mxu0 0.0
      %1127 = vmatprep.subr.mxu0 0.0
      %1128 = vmatpush1.msra.mxu0 0.0
      %1129 = vmatprep.subr.mxu0 0.0
      %1130 = vmatpush1.msra.mxu0 0.0
      %1131 = vmatprep.subr.mxu0 0.0
      %1132 = vmatpush1.msra.mxu0 0.0
      %1133 = vmatprep.subr.mxu0 0.0
      %1134 = vmatpush1.msra.mxu0 0.0
      %1135 = vmatprep.subr.mxu0 0.0
      %1136 = vmatpush1.msra.mxu0 0.0
      %1137 = vmatprep.subr.mxu0 0.0
      %1138 = vmatpush1.msra.mxu0 0.0
      %1139 = vmatprep.subr.mxu0 0.0
      %1140 = vmatpush1.msra.mxu0 0.0
      %1141 = vmatprep.subr.mxu0 0.0
      %1142 = vmatpush1.msra.mxu0 0.0
      %1143 = vmatprep.subr.mxu0 0.0
      %1144 = vmatpush1.msra.mxu0 0.0
      %1145 = vmatprep.subr.mxu0 0.0
      %1146 = vmatpush1.msra.mxu0 0.0
      %1147 = vmatprep.subr.mxu0 0.0
      %1148 = vmatpush1.msra.mxu0 0.0
      %1149 = vmatprep.subr.mxu0 0.0
      %1150 = vmatpush1.msra.mxu0 0.0
      %1151 = vmatprep.subr.mxu0 0.0
      %1152 = vmatpush1.msra.mxu0 0.0
      %1153 = vmatprep.subr.mxu0 0.0
      %1154 = vmatpush1.msra.mxu0 0.0
      %1155 = vmatprep.subr.mxu0 0.0
      %1156 = vmatpush1.msra.mxu0 0.0
      %1157 = vmatprep.subr.mxu0 0.0
      %1158 = vmatpush1.msra.mxu0 0.0
      %1159 = vmatprep.subr.mxu0 0.0
      %1160 = vmatpush1.msra.mxu0 0.0
      %1161 = vmatprep.subr.mxu0 0.0
      %1162 = vmatpush1.msra.mxu0 0.0
      %1163 = vmatprep.mubr.f32.mxu0 0.0
      %1164 = vmatmul.mubr.f32.gmra.mrb[0].mxu0 %v992
      %v1165 = vpop.f32.mrb[0].mxu0
      %v1166 = vadd.f32 0.0, %v1165
      %v1167 = vpop.f32.mrb[0].mxu0
      %1168 = vmatprep.mubr.f32.mxu0 0.0
      %1169 = vmatmul.mubr.f32.gmra.mrb[0].mxu0 %v995
      %v1170 = vpop.f32.mrb[0].mxu0
      %v1171 = vadd.f32 0.0, %v1170
      %v1172 = vpop.f32.mrb[0].mxu0
      %1173 = vmatprep.mubr.f32.mxu0 0.0
      %1174 = vmatmul.mubr.f32.gmra.mrb[0].mxu0 %v998
      %v1175 = vpop.f32.mrb[0].mxu0
      %v1176 = vadd.f32 0.0, %v1175
      %v1177 = vpop.f32.mrb[0].mxu0
      %1178 = vmatprep.mubr.f32.mxu0 0.0
      %1179 = vmatmul.mubr.f32.gmra.mrb[0].mxu0 %v1001
      %v1180 = vpop.f32.mrb[0].mxu0
      %v1181 = vadd.f32 0.0, %v1180
      %v1182 = vpop.f32.mrb[0].mxu0
      %1183 = vmatprep.mubr.f32.mxu0 0.0
      %1184 = vmatmul.mubr.f32.gmra.mrb[0].mxu0 %v1004
      %v1185 = vpop.f32.mrb[0].mxu0
      %v1186 = vadd.f32 0.0, %v1185
      %v1187 = vpop.f32.mrb[0].mxu0
      %1188 = vmatprep.mubr.f32.mxu0 0.0
      %1189 = vmatmul.mubr.f32.gmra.mrb[0].mxu0 %v1007
      %v1190 = vpop.f32.mrb[0].mxu0
      %v1191 = vadd.f32 0.0, %v1190
      %v1192 = vpop.f32.mrb[0].mxu0
      %1193 = vmatprep.mubr.f32.mxu0 0.0
      %1194 = vmatmul.mubr.f32.gmra.mrb[0].mxu0 %v1010
      %v1195 = vpop.f32.mrb[0].mxu0
      %v1196 = vadd.f32 0.0, %v1195
      %v1197 = vpop.f32.mrb[0].mxu0
      %1198 = vmatprep.mubr.f32.mxu0 0.0
      %1199 = vmatmul.mubr.f32.gmra.mrb[0].mxu0 %v1013
      %v1200 = vpop.f32.mrb[0].mxu0
      %v1201 = vadd.f32 0.0, %v1200
      %v1202 = vpop.f32.mrb[0].mxu0
      %1203 = vmatprep.mubr.f32.mxu0 0.0
      %1204 = vmatmul.mubr.f32.gmra.mrb[0].mxu0 %v1016
      %v1205 = vpop.f32.mrb[0].mxu0
      %v1206 = vadd.f32 0.0, %v1205
      %v1207 = vpop.f32.mrb[0].mxu0
      %1208 = vmatprep.mubr.f32.mxu0 0.0
      %1209 = vmatmul.mubr.f32.gmra.mrb[0].mxu0 %v1019
      %v1210 = vpop.f32.mrb[0].mxu0
      %v1211 = vadd.f32 0.0, %v1210
      %v1212 = vpop.f32.mrb[0].mxu0
      %1213 = vmatprep.mubr.f32.mxu0 0.0
      %1214 = vmatmul.mubr.f32.gmra.mrb[0].mxu0 %v1022
      %v1215 = vpop.f32.mrb[0].mxu0
      %v1216 = vadd.f32 0.0, %v1215
      %v1217 = vpop.f32.mrb[0].mxu0
      %1218 = vmatprep.mubr.f32.mxu0 0.0
      %1219 = vmatmul.mubr.f32.gmra.mrb[0].mxu0 %v1025
      %v1220 = vpop.f32.mrb[0].mxu0
      %v1221 = vadd.f32 0.0, %v1220
      %v1222 = vpop.f32.mrb[0].mxu0
      %1223 = vmatprep.mubr.f32.mxu0 0.0
      %1224 = vmatmul.mubr.f32.gmra.mrb[0].mxu0 %v1028
      %v1225 = vpop.f32.mrb[0].mxu0
      %v1226 = vadd.f32 0.0, %v1225
      %v1227 = vpop.f32.mrb[0].mxu0
      %1228 = vmatprep.mubr.f32.mxu0 0.0
      %1229 = vmatmul.mubr.f32.gmra.mrb[0].mxu0 %v1031
      %v1230 = vpop.f32.mrb[0].mxu0
      %v1231 = vadd.f32 0.0, %v1230
      %v1232 = vpop.f32.mrb[0].mxu0
      %1233 = vmatprep.mubr.f32.mxu0 0.0
      %1234 = vmatmul.mubr.f32.gmra.mrb[0].mxu0 %v1034
      %v1235 = vpop.f32.mrb[0].mxu0
      %v1236 = vadd.f32 0.0, %v1235
      %v1237 = vpop.f32.mrb[0].mxu0
      %1238 = vmatprep.mubr.f32.mxu0 0.0
      %1239 = vmatmul.mubr.f32.gmra.mrb[0].mxu0 %v1037
      %v1240 = vpop.f32.mrb[0].mxu0
      %v1241 = vadd.f32 0.0, %v1240
      %v1242 = vpop.f32.mrb[0].mxu0
      %1243 = vmatprep.mubr.f32.mxu0 0.0
      %1244 = vmatmul.mubr.f32.gmra.mrb[0].mxu0 %v1040
      %v1245 = vpop.f32.mrb[0].mxu0
      %v1246 = vadd.f32 0.0, %v1245
      %v1247 = vpop.f32.mrb[0].mxu0
      %1248 = vmatprep.mubr.f32.mxu0 0.0
      %1249 = vmatmul.mubr.f32.gmra.mrb[0].mxu0 %v1043
      %v1250 = vpop.f32.mrb[0].mxu0
      %v1251 = vadd.f32 0.0, %v1250
      %v1252 = vpop.f32.mrb[0].mxu0
      %1253 = vmatprep.mubr.f32.mxu0 0.0
      %1254 = vmatmul.mubr.f32.gmra.mrb[0].mxu0 %v1046
      %v1255 = vpop.f32.mrb[0].mxu0
      %v1256 = vadd.f32 0.0, %v1255
      %v1257 = vpop.f32.mrb[0].mxu0
      %1258 = vmatprep.mubr.f32.mxu0 0.0
      %1259 = vmatmul.mubr.f32.gmra.mrb[0].mxu0 %v1049
      %v1260 = vpop.f32.mrb[0].mxu0
      %v1261 = vadd.f32 0.0, %v1260
      %v1262 = vpop.f32.mrb[0].mxu0
      %1263 = vmatprep.mubr.f32.mxu0 0.0
      %1264 = vmatmul.mubr.f32.gmra.mrb[0].mxu0 %v1052
      %v1265 = vpop.f32.mrb[0].mxu0
      %v1266 = vadd.f32 0.0, %v1265
      %v1267 = vpop.f32.mrb[0].mxu0
      %1268 = vmatprep.mubr.f32.mxu0 0.0
      %1269 = vmatmul.mubr.f32.gmra.mrb[0].mxu0 %v1055
      %v1270 = vpop.f32.mrb[0].mxu0
      %v1271 = vadd.f32 0.0, %v1270
      %v1272 = vpop.f32.mrb[0].mxu0
      %1273 = vmatprep.mubr.f32.mxu0 0.0
      %1274 = vmatmul.mubr.f32.gmra.mrb[0].mxu0 %v1058
      %v1275 = vpop.f32.mrb[0].mxu0
      %v1276 = vadd.f32 0.0, %v1275
      %v1277 = vpop.f32.mrb[0].mxu0
      %1278 = vmatprep.mubr.f32.mxu0 0.0
      %1279 = vmatmul.mubr.f32.gmra.mrb[0].mxu0 %v1061
      %v1280 = vpop.f32.mrb[0].mxu0
      %v1281 = vadd.f32 0.0, %v1280
      %v1282 = vpop.f32.mrb[0].mxu0
      %1283 = vmatprep.mubr.f32.mxu0 0.0
      %1284 = vmatmul.mubr.f32.gmra.mrb[0].mxu0 %v1064
      %v1285 = vpop.f32.mrb[0].mxu0
      %v1286 = vadd.f32 0.0, %v1285
      %v1287 = vpop.f32.mrb[0].mxu0
      %1288 = vmatprep.mubr.f32.mxu0 0.0
      %1289 = vmatmul.mubr.f32.gmra.mrb[0].mxu0 %v1067
      %v1290 = vpop.f32.mrb[0].mxu0
      %v1291 = vadd.f32 0.0, %v1290
      %v1292 = vpop.f32.mrb[0].mxu0
      %1293 = vmatprep.mubr.f32.mxu0 0.0
      %1294 = vmatmul.mubr.f32.gmra.mrb[0].mxu0 %v1070
      %v1295 = vpop.f32.mrb[0].mxu0
      %v1296 = vadd.f32 0.0, %v1295
      %v1297 = vpop.f32.mrb[0].mxu0
      %1298 = vmatprep.mubr.f32.mxu0 0.0
      %1299 = vmatmul.mubr.f32.gmra.mrb[0].mxu0 %v1073
      %v1300 = vpop.f32.mrb[0].mxu0
      %v1301 = vadd.f32 0.0, %v1300
      %v1302 = vpop.f32.mrb[0].mxu0
      %1303 = vmatprep.mubr.f32.mxu0 0.0
      %1304 = vmatmul.mubr.f32.gmra.mrb[0].mxu0 %v1076
      %v1305 = vpop.f32.mrb[0].mxu0
      %v1306 = vadd.f32 0.0, %v1305
      %v1307 = vpop.f32.mrb[0].mxu0
      %1308 = vmatprep.mubr.f32.mxu0 0.0
      %1309 = vmatmul.mubr.f32.gmra.mrb[0].mxu0 %v1079
      %v1310 = vpop.f32.mrb[0].mxu0
      %v1311 = vadd.f32 0.0, %v1310
      %v1312 = vpop.f32.mrb[0].mxu0
      %1313 = vmatprep.mubr.f32.mxu0 0.0
      %1314 = vmatmul.mubr.f32.gmra.mrb[0].mxu0 %v1082
      %v1315 = vpop.f32.mrb[0].mxu0
      %v1316 = vadd.f32 0.0, %v1315
      %v1317 = vpop.f32.mrb[0].mxu0
      %1318 = vmatprep.mubr.f32.mxu0 0.0
      %1319 = vmatmul.mubr.f32.gmra.mrb[0].mxu0 %v1085
      %v1320 = vpop.f32.mrb[0].mxu0
      %v1321 = vadd.f32 0.0, %v1320
      %v1322 = vpop.f32.mrb[0].mxu0
      %1323 = vmatprep.mubr.f32.mxu0 0.0
      %1324 = vmatmul.mubr.f32.gmra.mrb[0].mxu0 %v1088
      %v1325 = vpop.f32.mrb[0].mxu0
      %v1326 = vadd.f32 0.0, %v1325
      %v1327 = vpop.f32.mrb[0].mxu0
      %1328 = vmatprep.mubr.f32.mxu0 0.0
      %1329 = vmatmul.mubr.f32.gmra.mrb[0].mxu0 %v1091
      %v1330 = vpop.f32.mrb[0].mxu0
      %v1331 = vadd.f32 0.0, %v1330
      %v1332 = vpop.f32.mrb[0].mxu0
      %1333 = vmatprep.mubr.f32.mxu0 0.0
      %1334 = vmatmul.mubr.f32.gmra.mrb[0].mxu0 %v1094
      %v1335 = vpop.f32.mrb[0].mxu0
      %v1336 = vadd.f32 0.0, %v1335
      %v1337 = vpop.f32.mrb[0].mxu0
      %1338 = vmatprep.mubr.f32.mxu0 0.0
      %1339 = vmatmul.mubr.f32.gmra.mrb[0].mxu0 %v1097
      %v1340 = vpop.f32.mrb[0].mxu0
      %v1341 = vadd.f32 0.0, %v1340
      %v1342 = vpop.f32.mrb[0].mxu0
      %1343 = vdwg.mxu0
      %v1344 = vadd.f32 %v775, %v1166
      %v1345 = vadd.f32 %v780, %v1171
      %v1346 = vadd.f32 %v785, %v1176
      %v1347 = vadd.f32 %v790, %v1181
      %v1348 = vadd.f32 %v795, %v1186
      %v1349 = vadd.f32 %v800, %v1191
      %v1350 = vadd.f32 %v805, %v1196
      %v1351 = vadd.f32 %v810, %v1201
      %v1352 = vadd.f32 %v815, %v1206
      %v1353 = vadd.f32 %v820, %v1211
      %v1354 = vadd.f32 %v825, %v1216
      %v1355 = vadd.f32 %v830, %v1221
      %v1356 = vadd.f32 %v835, %v1226
      %v1357 = vadd.f32 %v840, %v1231
      %v1358 = vadd.f32 %v845, %v1236
      %v1359 = vadd.f32 %v850, %v1241
      %v1360 = vadd.f32 %v855, %v1246
      %v1361 = vadd.f32 %v860, %v1251
      %v1362 = vadd.f32 %v865, %v1256
      %v1363 = vadd.f32 %v870, %v1261
      %v1364 = vadd.f32 %v875, %v1266
      %v1365 = vadd.f32 %v880, %v1271
      %v1366 = vadd.f32 %v885, %v1276
      %v1367 = vadd.f32 %v890, %v1281
      %v1368 = vadd.f32 %v895, %v1286
      %v1369 = vadd.f32 %v900, %v1291
      %v1370 = vadd.f32 %v905, %v1296
      %v1371 = vadd.f32 %v910, %v1301
      %v1372 = vadd.f32 %v915, %v1306
      %v1373 = vadd.f32 %v920, %v1311
      %v1374 = vadd.f32 %v925, %v1316
      %v1375 = vadd.f32 %v930, %v1321
      %v1376 = vadd.f32 %v935, %v1326
      %v1377 = vadd.f32 %v940, %v1331
      %v1378 = vadd.f32 %v945, %v1336
      %v1379 = vadd.f32 %v950, %v1341
      %v1380 = vld [vmem:[%s165 + $0x12] sm:$0xff]
      %v1381 = vld [vmem:[%s165 + $0x1a] sm:$0xff]
      %v1382 = vld [vmem:[%s165 + $0x22] sm:$0xff]
      %v1383 = vld [vmem:[%s165 + $0x2a] sm:$0xff]
      %v1384 = vld [vmem:[%s165 + $0x32] sm:$0xff]
      %v1385 = vld [vmem:[%s165 + $0x3a] sm:$0xff]
      %v1386 = vld [vmem:[%s165 + $0x42] sm:$0xff]
      %v1387 = vld [vmem:[%s165 + $0x4a] sm:$0xff]
      %v1388 = vld [vmem:[%s165 + $0x52] sm:$0xff]
      %v1389 = vld [vmem:[%s165 + $0x5a] sm:$0xff]
      %v1390 = vld [vmem:[%s165 + $0x62] sm:$0xff]
      %v1391 = vld [vmem:[%s165 + $0x6a] sm:$0xff]
      %v1392 = vld [vmem:[%s165 + $0x72] sm:$0xff]
      %v1393 = vld [vmem:[%s165 + $0x7a] sm:$0xff]
      %v1394 = vld [vmem:[%s165 + $0x82] sm:$0xff]
      %v1395 = vld [vmem:[%s165 + $0x8a] sm:$0xff]
      %v1396 = vld [vmem:[%s165 + $0x92] sm:$0xff]
      %v1397 = vld [vmem:[%s165 + $0x9a] sm:$0xff]
      %v1398 = vld [vmem:[%s165 + $0xa2] sm:$0xff]
      %v1399 = vld [vmem:[%s165 + $0xaa] sm:$0xff]
      %v1400 = vld [vmem:[%s165 + $0xb2] sm:$0xff]
      %v1401 = vld [vmem:[%s165 + $0xba] sm:$0xff]
      %v1402 = vld [vmem:[%s165 + $0xc2] sm:$0xff]
      %v1403 = vld [vmem:[%s165 + $0xca] sm:$0xff]
      %v1404 = vld [vmem:[%s165 + $0xd2] sm:$0xff]
      %v1405 = vld [vmem:[%s165 + $0xda] sm:$0xff]
      %v1406 = vld [vmem:[%s165 + $0xe2] sm:$0xff]
      %v1407 = vld [vmem:[%s165 + $0xea] sm:$0xff]
      %v1408 = vld [vmem:[%s165 + $0xf2] sm:$0xff]
      %v1409 = vld [vmem:[%s165 + $0xfa] sm:$0xff]
      %v1410 = vld [vmem:[%s165 + $0x102] sm:$0xff]
      %v1411 = vld [vmem:[%s165 + $0x10a] sm:$0xff]
      %v1412 = vld [vmem:[%s165 + $0x112] sm:$0xff]
      %v1413 = vld [vmem:[%s165 + $0x11a] sm:$0xff]
      %v1414 = vld [vmem:[%s165 + $0x122] sm:$0xff]
      %v1415 = vld [vmem:[%s165 + $0x12a] sm:$0xff]
      %s1416 = scalar_lea.vmem %s1, 24
      %v1417 = vld [vmem:[%s1416] sm:$0xff]
      %v1419 = vsel %vm246, %v1380, 0
      %v1422 = vsel %vm246, %v1381, 0
      %v1425 = vsel %vm246, %v1382, 0
      %v1428 = vsel %vm246, %v1383, 0
      %v1431 = vsel %vm246, %v1384, 0
      %v1434 = vsel %vm246, %v1385, 0
      %v1437 = vsel %vm246, %v1386, 0
      %v1440 = vsel %vm246, %v1387, 0
      %v1443 = vsel %vm246, %v1388, 0
      %v1446 = vsel %vm246, %v1389, 0
      %v1449 = vsel %vm246, %v1390, 0
      %v1452 = vsel %vm246, %v1391, 0
      %v1455 = vsel %vm246, %v1392, 0
      %v1458 = vsel %vm246, %v1393, 0
      %v1461 = vsel %vm246, %v1394, 0
      %v1464 = vsel %vm246, %v1395, 0
      %v1467 = vsel %vm246, %v1396, 0
      %v1470 = vsel %vm246, %v1397, 0
      %v1473 = vsel %vm246, %v1398, 0
      %v1476 = vsel %vm246, %v1399, 0
      %v1479 = vsel %vm246, %v1400, 0
      %v1482 = vsel %vm246, %v1401, 0
      %v1485 = vsel %vm246, %v1402, 0
      %v1488 = vsel %vm246, %v1403, 0
      %v1491 = vsel %vm246, %v1404, 0
      %v1494 = vsel %vm246, %v1405, 0
      %v1497 = vsel %vm246, %v1406, 0
      %v1500 = vsel %vm246, %v1407, 0
      %v1503 = vsel %vm246, %v1408, 0
      %v1506 = vsel %vm246, %v1409, 0
      %v1509 = vsel %vm246, %v1410, 0
      %v1512 = vsel %vm246, %v1411, 0
      %v1515 = vsel %vm246, %v1412, 0
      %v1518 = vsel %vm246, %v1413, 0
      %v1521 = vsel %vm246, %v1414, 0
      %v1524 = vsel %vm246, %v1415, 0
      %1526 = vmatprep.subr.mxu0 0.0
      %1527 = vmatpush1.msra.mxu0 %v1417
      %1528 = vmatprep.subr.mxu0 0.0
      %1529 = vmatpush1.msra.mxu0 0.0
      %1530 = vmatprep.subr.mxu0 0.0
      %1531 = vmatpush1.msra.mxu0 0.0
      %1532 = vmatprep.subr.mxu0 0.0
      %1533 = vmatpush1.msra.mxu0 0.0
      %1534 = vmatprep.subr.mxu0 0.0
      %1535 = vmatpush1.msra.mxu0 0.0
      %1536 = vmatprep.subr.mxu0 0.0
      %1537 = vmatpush1.msra.mxu0 0.0
      %1538 = vmatprep.subr.mxu0 0.0
      %1539 = vmatpush1.msra.mxu0 0.0
      %1540 = vmatprep.subr.mxu0 0.0
      %1541 = vmatpush1.msra.mxu0 0.0
      %1542 = vmatprep.subr.mxu0 0.0
      %1543 = vmatpush1.msra.mxu0 0.0
      %1544 = vmatprep.subr.mxu0 0.0
      %1545 = vmatpush1.msra.mxu0 0.0
      %1546 = vmatprep.subr.mxu0 0.0
      %1547 = vmatpush1.msra.mxu0 0.0
      %1548 = vmatprep.subr.mxu0 0.0
      %1549 = vmatpush1.msra.mxu0 0.0
      %1550 = vmatprep.subr.mxu0 0.0
      %1551 = vmatpush1.msra.mxu0 0.0
      %1552 = vmatprep.subr.mxu0 0.0
      %1553 = vmatpush1.msra.mxu0 0.0
      %1554 = vmatprep.subr.mxu0 0.0
      %1555 = vmatpush1.msra.mxu0 0.0
      %1556 = vmatprep.subr.mxu0 0.0
      %1557 = vmatpush1.msra.mxu0 0.0
      %1558 = vmatprep.subr.mxu0 0.0
      %1559 = vmatpush1.msra.mxu0 0.0
      %1560 = vmatprep.subr.mxu0 0.0
      %1561 = vmatpush1.msra.mxu0 0.0
      %1562 = vmatprep.subr.mxu0 0.0
      %1563 = vmatpush1.msra.mxu0 0.0
      %1564 = vmatprep.subr.mxu0 0.0
      %1565 = vmatpush1.msra.mxu0 0.0
      %1566 = vmatprep.subr.mxu0 0.0
      %1567 = vmatpush1.msra.mxu0 0.0
      %1568 = vmatprep.subr.mxu0 0.0
      %1569 = vmatpush1.msra.mxu0 0.0
      %1570 = vmatprep.subr.mxu0 0.0
      %1571 = vmatpush1.msra.mxu0 0.0
      %1572 = vmatprep.subr.mxu0 0.0
      %1573 = vmatpush1.msra.mxu0 0.0
      %1574 = vmatprep.subr.mxu0 0.0
      %1575 = vmatpush1.msra.mxu0 0.0
      %1576 = vmatprep.subr.mxu0 0.0
      %1577 = vmatpush1.msra.mxu0 0.0
      %1578 = vmatprep.subr.mxu0 0.0
      %1579 = vmatpush1.msra.mxu0 0.0
      %1580 = vmatprep.subr.mxu0 0.0
      %1581 = vmatpush1.msra.mxu0 0.0
      %1582 = vmatprep.subr.mxu0 0.0
      %1583 = vmatpush1.msra.mxu0 0.0
      %1584 = vmatprep.subr.mxu0 0.0
      %1585 = vmatpush1.msra.mxu0 0.0
      %1586 = vmatprep.subr.mxu0 0.0
      %1587 = vmatpush1.msra.mxu0 0.0
      %1588 = vmatprep.subr.mxu0 0.0
      %1589 = vmatpush1.msra.mxu0 0.0
      %1590 = vmatprep.mubr.f32.mxu0 0.0
      %1591 = vmatmul.mubr.f32.gmra.mrb[0].mxu0 %v1419
      %v1592 = vpop.f32.mrb[0].mxu0
      %v1593 = vadd.f32 0.0, %v1592
      %v1594 = vpop.f32.mrb[0].mxu0
      %1595 = vmatprep.mubr.f32.mxu0 0.0
      %1596 = vmatmul.mubr.f32.gmra.mrb[0].mxu0 %v1422
      %v1597 = vpop.f32.mrb[0].mxu0
      %v1598 = vadd.f32 0.0, %v1597
      %v1599 = vpop.f32.mrb[0].mxu0
      %1600 = vmatprep.mubr.f32.mxu0 0.0
      %1601 = vmatmul.mubr.f32.gmra.mrb[0].mxu0 %v1425
      %v1602 = vpop.f32.mrb[0].mxu0
      %v1603 = vadd.f32 0.0, %v1602
      %v1604 = vpop.f32.mrb[0].mxu0
      %1605 = vmatprep.mubr.f32.mxu0 0.0
      %1606 = vmatmul.mubr.f32.gmra.mrb[0].mxu0 %v1428
      %v1607 = vpop.f32.mrb[0].mxu0
      %v1608 = vadd.f32 0.0, %v1607
      %v1609 = vpop.f32.mrb[0].mxu0
      %1610 = vmatprep.mubr.f32.mxu0 0.0
      %1611 = vmatmul.mubr.f32.gmra.mrb[0].mxu0 %v1431
      %v1612 = vpop.f32.mrb[0].mxu0
      %v1613 = vadd.f32 0.0, %v1612
      %v1614 = vpop.f32.mrb[0].mxu0
      %1615 = vmatprep.mubr.f32.mxu0 0.0
      %1616 = vmatmul.mubr.f32.gmra.mrb[0].mxu0 %v1434
      %v1617 = vpop.f32.mrb[0].mxu0
      %v1618 = vadd.f32 0.0, %v1617
      %v1619 = vpop.f32.mrb[0].mxu0
      %1620 = vmatprep.mubr.f32.mxu0 0.0
      %1621 = vmatmul.mubr.f32.gmra.mrb[0].mxu0 %v1437
      %v1622 = vpop.f32.mrb[0].mxu0
      %v1623 = vadd.f32 0.0, %v1622
      %v1624 = vpop.f32.mrb[0].mxu0
      %1625 = vmatprep.mubr.f32.mxu0 0.0
      %1626 = vmatmul.mubr.f32.gmra.mrb[0].mxu0 %v1440
      %v1627 = vpop.f32.mrb[0].mxu0
      %v1628 = vadd.f32 0.0, %v1627
      %v1629 = vpop.f32.mrb[0].mxu0
      %1630 = vmatprep.mubr.f32.mxu0 0.0
      %1631 = vmatmul.mubr.f32.gmra.mrb[0].mxu0 %v1443
      %v1632 = vpop.f32.mrb[0].mxu0
      %v1633 = vadd.f32 0.0, %v1632
      %v1634 = vpop.f32.mrb[0].mxu0
      %1635 = vmatprep.mubr.f32.mxu0 0.0
      %1636 = vmatmul.mubr.f32.gmra.mrb[0].mxu0 %v1446
      %v1637 = vpop.f32.mrb[0].mxu0
      %v1638 = vadd.f32 0.0, %v1637
      %v1639 = vpop.f32.mrb[0].mxu0
      %1640 = vmatprep.mubr.f32.mxu0 0.0
      %1641 = vmatmul.mubr.f32.gmra.mrb[0].mxu0 %v1449
      %v1642 = vpop.f32.mrb[0].mxu0
      %v1643 = vadd.f32 0.0, %v1642
      %v1644 = vpop.f32.mrb[0].mxu0
      %1645 = vmatprep.mubr.f32.mxu0 0.0
      %1646 = vmatmul.mubr.f32.gmra.mrb[0].mxu0 %v1452
      %v1647 = vpop.f32.mrb[0].mxu0
      %v1648 = vadd.f32 0.0, %v1647
      %v1649 = vpop.f32.mrb[0].mxu0
      %1650 = vmatprep.mubr.f32.mxu0 0.0
      %1651 = vmatmul.mubr.f32.gmra.mrb[0].mxu0 %v1455
      %v1652 = vpop.f32.mrb[0].mxu0
      %v1653 = vadd.f32 0.0, %v1652
      %v1654 = vpop.f32.mrb[0].mxu0
      %1655 = vmatprep.mubr.f32.mxu0 0.0
      %1656 = vmatmul.mubr.f32.gmra.mrb[0].mxu0 %v1458
      %v1657 = vpop.f32.mrb[0].mxu0
      %v1658 = vadd.f32 0.0, %v1657
      %v1659 = vpop.f32.mrb[0].mxu0
      %1660 = vmatprep.mubr.f32.mxu0 0.0
      %1661 = vmatmul.mubr.f32.gmra.mrb[0].mxu0 %v1461
      %v1662 = vpop.f32.mrb[0].mxu0
      %v1663 = vadd.f32 0.0, %v1662
      %v1664 = vpop.f32.mrb[0].mxu0
      %1665 = vmatprep.mubr.f32.mxu0 0.0
      %1666 = vmatmul.mubr.f32.gmra.mrb[0].mxu0 %v1464
      %v1667 = vpop.f32.mrb[0].mxu0
      %v1668 = vadd.f32 0.0, %v1667
      %v1669 = vpop.f32.mrb[0].mxu0
      %1670 = vmatprep.mubr.f32.mxu0 0.0
      %1671 = vmatmul.mubr.f32.gmra.mrb[0].mxu0 %v1467
      %v1672 = vpop.f32.mrb[0].mxu0
      %v1673 = vadd.f32 0.0, %v1672
      %v1674 = vpop.f32.mrb[0].mxu0
      %1675 = vmatprep.mubr.f32.mxu0 0.0
      %1676 = vmatmul.mubr.f32.gmra.mrb[0].mxu0 %v1470
      %v1677 = vpop.f32.mrb[0].mxu0
      %v1678 = vadd.f32 0.0, %v1677
      %v1679 = vpop.f32.mrb[0].mxu0
      %1680 = vmatprep.mubr.f32.mxu0 0.0
      %1681 = vmatmul.mubr.f32.gmra.mrb[0].mxu0 %v1473
      %v1682 = vpop.f32.mrb[0].mxu0
      %v1683 = vadd.f32 0.0, %v1682
      %v1684 = vpop.f32.mrb[0].mxu0
      %1685 = vmatprep.mubr.f32.mxu0 0.0
      %1686 = vmatmul.mubr.f32.gmra.mrb[0].mxu0 %v1476
      %v1687 = vpop.f32.mrb[0].mxu0
      %v1688 = vadd.f32 0.0, %v1687
      %v1689 = vpop.f32.mrb[0].mxu0
      %1690 = vmatprep.mubr.f32.mxu0 0.0
      %1691 = vmatmul.mubr.f32.gmra.mrb[0].mxu0 %v1479
      %v1692 = vpop.f32.mrb[0].mxu0
      %v1693 = vadd.f32 0.0, %v1692
      %v1694 = vpop.f32.mrb[0].mxu0
      %1695 = vmatprep.mubr.f32.mxu0 0.0
      %1696 = vmatmul.mubr.f32.gmra.mrb[0].mxu0 %v1482
      %v1697 = vpop.f32.mrb[0].mxu0
      %v1698 = vadd.f32 0.0, %v1697
      %v1699 = vpop.f32.mrb[0].mxu0
      %1700 = vmatprep.mubr.f32.mxu0 0.0
      %1701 = vmatmul.mubr.f32.gmra.mrb[0].mxu0 %v1485
      %v1702 = vpop.f32.mrb[0].mxu0
      %v1703 = vadd.f32 0.0, %v1702
      %v1704 = vpop.f32.mrb[0].mxu0
      %1705 = vmatprep.mubr.f32.mxu0 0.0
      %1706 = vmatmul.mubr.f32.gmra.mrb[0].mxu0 %v1488
      %v1707 = vpop.f32.mrb[0].mxu0
      %v1708 = vadd.f32 0.0, %v1707
      %v1709 = vpop.f32.mrb[0].mxu0
      %1710 = vmatprep.mubr.f32.mxu0 0.0
      %1711 = vmatmul.mubr.f32.gmra.mrb[0].mxu0 %v1491
      %v1712 = vpop.f32.mrb[0].mxu0
      %v1713 = vadd.f32 0.0, %v1712
      %v1714 = vpop.f32.mrb[0].mxu0
      %1715 = vmatprep.mubr.f32.mxu0 0.0
      %1716 = vmatmul.mubr.f32.gmra.mrb[0].mxu0 %v1494
      %v1717 = vpop.f32.mrb[0].mxu0
      %v1718 = vadd.f32 0.0, %v1717
      %v1719 = vpop.f32.mrb[0].mxu0
      %1720 = vmatprep.mubr.f32.mxu0 0.0
      %1721 = vmatmul.mubr.f32.gmra.mrb[0].mxu0 %v1497
      %v1722 = vpop.f32.mrb[0].mxu0
      %v1723 = vadd.f32 0.0, %v1722
      %v1724 = vpop.f32.mrb[0].mxu0
      %1725 = vmatprep.mubr.f32.mxu0 0.0
      %1726 = vmatmul.mubr.f32.gmra.mrb[0].mxu0 %v1500
      %v1727 = vpop.f32.mrb[0].mxu0
      %v1728 = vadd.f32 0.0, %v1727
      %v1729 = vpop.f32.mrb[0].mxu0
      %1730 = vmatprep.mubr.f32.mxu0 0.0
      %1731 = vmatmul.mubr.f32.gmra.mrb[0].mxu0 %v1503
      %v1732 = vpop.f32.mrb[0].mxu0
      %v1733 = vadd.f32 0.0, %v1732
      %v1734 = vpop.f32.mrb[0].mxu0
      %1735 = vmatprep.mubr.f32.mxu0 0.0
      %1736 = vmatmul.mubr.f32.gmra.mrb[0].mxu0 %v1506
      %v1737 = vpop.f32.mrb[0].mxu0
      %v1738 = vadd.f32 0.0, %v1737
      %v1739 = vpop.f32.mrb[0].mxu0
      %1740 = vmatprep.mubr.f32.mxu0 0.0
      %1741 = vmatmul.mubr.f32.gmra.mrb[0].mxu0 %v1509
      %v1742 = vpop.f32.mrb[0].mxu0
      %v1743 = vadd.f32 0.0, %v1742
      %v1744 = vpop.f32.mrb[0].mxu0
      %1745 = vmatprep.mubr.f32.mxu0 0.0
      %1746 = vmatmul.mubr.f32.gmra.mrb[0].mxu0 %v1512
      %v1747 = vpop.f32.mrb[0].mxu0
      %v1748 = vadd.f32 0.0, %v1747
      %v1749 = vpop.f32.mrb[0].mxu0
      %1750 = vmatprep.mubr.f32.mxu0 0.0
      %1751 = vmatmul.mubr.f32.gmra.mrb[0].mxu0 %v1515
      %v1752 = vpop.f32.mrb[0].mxu0
      %v1753 = vadd.f32 0.0, %v1752
      %v1754 = vpop.f32.mrb[0].mxu0
      %1755 = vmatprep.mubr.f32.mxu0 0.0
      %1756 = vmatmul.mubr.f32.gmra.mrb[0].mxu0 %v1518
      %v1757 = vpop.f32.mrb[0].mxu0
      %v1758 = vadd.f32 0.0, %v1757
      %v1759 = vpop.f32.mrb[0].mxu0
      %1760 = vmatprep.mubr.f32.mxu0 0.0
      %1761 = vmatmul.mubr.f32.gmra.mrb[0].mxu0 %v1521
      %v1762 = vpop.f32.mrb[0].mxu0
      %v1763 = vadd.f32 0.0, %v1762
      %v1764 = vpop.f32.mrb[0].mxu0
      %1765 = vmatprep.mubr.f32.mxu0 0.0
      %1766 = vmatmul.mubr.f32.gmra.mrb[0].mxu0 %v1524
      %v1767 = vpop.f32.mrb[0].mxu0
      %v1768 = vadd.f32 0.0, %v1767
      %v1769 = vpop.f32.mrb[0].mxu0
      %1770 = vdwg.mxu0
      %v1771 = vadd.f32 %v1344, %v1593
      %v1772 = vadd.f32 %v1345, %v1598
      %v1773 = vadd.f32 %v1346, %v1603
      %v1774 = vadd.f32 %v1347, %v1608
      %v1775 = vadd.f32 %v1348, %v1613
      %v1776 = vadd.f32 %v1349, %v1618
      %v1777 = vadd.f32 %v1350, %v1623
      %v1778 = vadd.f32 %v1351, %v1628
      %v1779 = vadd.f32 %v1352, %v1633
      %v1780 = vadd.f32 %v1353, %v1638
      %v1781 = vadd.f32 %v1354, %v1643
      %v1782 = vadd.f32 %v1355, %v1648
      %v1783 = vadd.f32 %v1356, %v1653
      %v1784 = vadd.f32 %v1357, %v1658
      %v1785 = vadd.f32 %v1358, %v1663
      %v1786 = vadd.f32 %v1359, %v1668
      %v1787 = vadd.f32 %v1360, %v1673
      %v1788 = vadd.f32 %v1361, %v1678
      %v1789 = vadd.f32 %v1362, %v1683
      %v1790 = vadd.f32 %v1363, %v1688
      %v1791 = vadd.f32 %v1364, %v1693
      %v1792 = vadd.f32 %v1365, %v1698
      %v1793 = vadd.f32 %v1366, %v1703
      %v1794 = vadd.f32 %v1367, %v1708
      %v1795 = vadd.f32 %v1368, %v1713
      %v1796 = vadd.f32 %v1369, %v1718
      %v1797 = vadd.f32 %v1370, %v1723
      %v1798 = vadd.f32 %v1371, %v1728
      %v1799 = vadd.f32 %v1372, %v1733
      %v1800 = vadd.f32 %v1373, %v1738
      %v1801 = vadd.f32 %v1374, %v1743
      %v1802 = vadd.f32 %v1375, %v1748
      %v1803 = vadd.f32 %v1376, %v1753
      %v1804 = vadd.f32 %v1377, %v1758
      %v1805 = vadd.f32 %v1378, %v1763
      %v1806 = vadd.f32 %v1379, %v1768
      %v1807 = vld [vmem:[%s165 + $0x13] sm:$0xff]
      %v1808 = vld [vmem:[%s165 + $0x1b] sm:$0xff]
      %v1809 = vld [vmem:[%s165 + $0x23] sm:$0xff]
      %v1810 = vld [vmem:[%s165 + $0x2b] sm:$0xff]
      %v1811 = vld [vmem:[%s165 + $0x33] sm:$0xff]
      %v1812 = vld [vmem:[%s165 + $0x3b] sm:$0xff]
      %v1813 = vld [vmem:[%s165 + $0x43] sm:$0xff]
      %v1814 = vld [vmem:[%s165 + $0x4b] sm:$0xff]
      %v1815 = vld [vmem:[%s165 + $0x53] sm:$0xff]
      %v1816 = vld [vmem:[%s165 + $0x5b] sm:$0xff]
      %v1817 = vld [vmem:[%s165 + $0x63] sm:$0xff]
      %v1818 = vld [vmem:[%s165 + $0x6b] sm:$0xff]
      %v1819 = vld [vmem:[%s165 + $0x73] sm:$0xff]
      %v1820 = vld [vmem:[%s165 + $0x7b] sm:$0xff]
      %v1821 = vld [vmem:[%s165 + $0x83] sm:$0xff]
      %v1822 = vld [vmem:[%s165 + $0x8b] sm:$0xff]
      %v1823 = vld [vmem:[%s165 + $0x93] sm:$0xff]
      %v1824 = vld [vmem:[%s165 + $0x9b] sm:$0xff]
      %v1825 = vld [vmem:[%s165 + $0xa3] sm:$0xff]
      %v1826 = vld [vmem:[%s165 + $0xab] sm:$0xff]
      %v1827 = vld [vmem:[%s165 + $0xb3] sm:$0xff]
      %v1828 = vld [vmem:[%s165 + $0xbb] sm:$0xff]
      %v1829 = vld [vmem:[%s165 + $0xc3] sm:$0xff]
      %v1830 = vld [vmem:[%s165 + $0xcb] sm:$0xff]
      %v1831 = vld [vmem:[%s165 + $0xd3] sm:$0xff]
      %v1832 = vld [vmem:[%s165 + $0xdb] sm:$0xff]
      %v1833 = vld [vmem:[%s165 + $0xe3] sm:$0xff]
      %v1834 = vld [vmem:[%s165 + $0xeb] sm:$0xff]
      %v1835 = vld [vmem:[%s165 + $0xf3] sm:$0xff]
      %v1836 = vld [vmem:[%s165 + $0xfb] sm:$0xff]
      %v1837 = vld [vmem:[%s165 + $0x103] sm:$0xff]
      %v1838 = vld [vmem:[%s165 + $0x10b] sm:$0xff]
      %v1839 = vld [vmem:[%s165 + $0x113] sm:$0xff]
      %v1840 = vld [vmem:[%s165 + $0x11b] sm:$0xff]
      %v1841 = vld [vmem:[%s165 + $0x123] sm:$0xff]
      %v1842 = vld [vmem:[%s165 + $0x12b] sm:$0xff]
      %s1843 = scalar_lea.vmem %s1, 32
      %v1844 = vld [vmem:[%s1843] sm:$0xff]
      %v1846 = vsel %vm246, %v1807, 0
      %v1849 = vsel %vm246, %v1808, 0
      %v1852 = vsel %vm246, %v1809, 0
      %v1855 = vsel %vm246, %v1810, 0
      %v1858 = vsel %vm246, %v1811, 0
      %v1861 = vsel %vm246, %v1812, 0
      %v1864 = vsel %vm246, %v1813, 0
      %v1867 = vsel %vm246, %v1814, 0
      %v1870 = vsel %vm246, %v1815, 0
      %v1873 = vsel %vm246, %v1816, 0
      %v1876 = vsel %vm246, %v1817, 0
      %v1879 = vsel %vm246, %v1818, 0
      %v1882 = vsel %vm246, %v1819, 0
      %v1885 = vsel %vm246, %v1820, 0
      %v1888 = vsel %vm246, %v1821, 0
      %v1891 = vsel %vm246, %v1822, 0
      %v1894 = vsel %vm246, %v1823, 0
      %v1897 = vsel %vm246, %v1824, 0
      %v1900 = vsel %vm246, %v1825, 0
      %v1903 = vsel %vm246, %v1826, 0
      %v1906 = vsel %vm246, %v1827, 0
      %v1909 = vsel %vm246, %v1828, 0
      %v1912 = vsel %vm246, %v1829, 0
      %v1915 = vsel %vm246, %v1830, 0
      %v1918 = vsel %vm246, %v1831, 0
      %v1921 = vsel %vm246, %v1832, 0
      %v1924 = vsel %vm246, %v1833, 0
      %v1927 = vsel %vm246, %v1834, 0
      %v1930 = vsel %vm246, %v1835, 0
      %v1933 = vsel %vm246, %v1836, 0
      %v1936 = vsel %vm246, %v1837, 0
      %v1939 = vsel %vm246, %v1838, 0
      %v1942 = vsel %vm246, %v1839, 0
      %v1945 = vsel %vm246, %v1840, 0
      %v1948 = vsel %vm246, %v1841, 0
      %v1951 = vsel %vm246, %v1842, 0
      %1953 = vmatprep.subr.mxu0 0.0
      %1954 = vmatpush1.msra.mxu0 %v1844
      %1955 = vmatprep.subr.mxu0 0.0
      %1956 = vmatpush1.msra.mxu0 0.0
      %1957 = vmatprep.subr.mxu0 0.0
      %1958 = vmatpush1.msra.mxu0 0.0
      %1959 = vmatprep.subr.mxu0 0.0
      %1960 = vmatpush1.msra.mxu0 0.0
      %1961 = vmatprep.subr.mxu0 0.0
      %1962 = vmatpush1.msra.mxu0 0.0
      %1963 = vmatprep.subr.mxu0 0.0
      %1964 = vmatpush1.msra.mxu0 0.0
      %1965 = vmatprep.subr.mxu0 0.0
      %1966 = vmatpush1.msra.mxu0 0.0
      %1967 = vmatprep.subr.mxu0 0.0
      %1968 = vmatpush1.msra.mxu0 0.0
      %1969 = vmatprep.subr.mxu0 0.0
      %1970 = vmatpush1.msra.mxu0 0.0
      %1971 = vmatprep.subr.mxu0 0.0
      %1972 = vmatpush1.msra.mxu0 0.0
      %1973 = vmatprep.subr.mxu0 0.0
      %1974 = vmatpush1.msra.mxu0 0.0
      %1975 = vmatprep.subr.mxu0 0.0
      %1976 = vmatpush1.msra.mxu0 0.0
      %1977 = vmatprep.subr.mxu0 0.0
      %1978 = vmatpush1.msra.mxu0 0.0
      %1979 = vmatprep.subr.mxu0 0.0
      %1980 = vmatpush1.msra.mxu0 0.0
      %1981 = vmatprep.subr.mxu0 0.0
      %1982 = vmatpush1.msra.mxu0 0.0
      %1983 = vmatprep.subr.mxu0 0.0
      %1984 = vmatpush1.msra.mxu0 0.0
      %1985 = vmatprep.subr.mxu0 0.0
      %1986 = vmatpush1.msra.mxu0 0.0
      %1987 = vmatprep.subr.mxu0 0.0
      %1988 = vmatpush1.msra.mxu0 0.0
      %1989 = vmatprep.subr.mxu0 0.0
      %1990 = vmatpush1.msra.mxu0 0.0
      %1991 = vmatprep.subr.mxu0 0.0
      %1992 = vmatpush1.msra.mxu0 0.0
      %1993 = vmatprep.subr.mxu0 0.0
      %1994 = vmatpush1.msra.mxu0 0.0
      %1995 = vmatprep.subr.mxu0 0.0
      %1996 = vmatpush1.msra.mxu0 0.0
      %1997 = vmatprep.subr.mxu0 0.0
      %1998 = vmatpush1.msra.mxu0 0.0
      %1999 = vmatprep.subr.mxu0 0.0
      %2000 = vmatpush1.msra.mxu0 0.0
      %2001 = vmatprep.subr.mxu0 0.0
      %2002 = vmatpush1.msra.mxu0 0.0
      %2003 = vmatprep.subr.mxu0 0.0
      %2004 = vmatpush1.msra.mxu0 0.0
      %2005 = vmatprep.subr.mxu0 0.0
      %2006 = vmatpush1.msra.mxu0 0.0
      %2007 = vmatprep.subr.mxu0 0.0
      %2008 = vmatpush1.msra.mxu0 0.0
      %2009 = vmatprep.subr.mxu0 0.0
      %2010 = vmatpush1.msra.mxu0 0.0
      %2011 = vmatprep.subr.mxu0 0.0
      %2012 = vmatpush1.msra.mxu0 0.0
      %2013 = vmatprep.subr.mxu0 0.0
      %2014 = vmatpush1.msra.mxu0 0.0
      %2015 = vmatprep.subr.mxu0 0.0
      %2016 = vmatpush1.msra.mxu0 0.0
      %2017 = vmatprep.mubr.f32.mxu0 0.0
      %2018 = vmatmul.mubr.f32.gmra.mrb[0].mxu0 %v1846
      %v2019 = vpop.f32.mrb[0].mxu0
      %v2020 = vadd.f32 0.0, %v2019
      %v2021 = vpop.f32.mrb[0].mxu0
      %2022 = vmatprep.mubr.f32.mxu0 0.0
      %2023 = vmatmul.mubr.f32.gmra.mrb[0].mxu0 %v1849
      %v2024 = vpop.f32.mrb[0].mxu0
      %v2025 = vadd.f32 0.0, %v2024
      %v2026 = vpop.f32.mrb[0].mxu0
      %2027 = vmatprep.mubr.f32.mxu0 0.0
      %2028 = vmatmul.mubr.f32.gmra.mrb[0].mxu0 %v1852
      %v2029 = vpop.f32.mrb[0].mxu0
      %v2030 = vadd.f32 0.0, %v2029
      %v2031 = vpop.f32.mrb[0].mxu0
      %2032 = vmatprep.mubr.f32.mxu0 0.0
      %2033 = vmatmul.mubr.f32.gmra.mrb[0].mxu0 %v1855
      %v2034 = vpop.f32.mrb[0].mxu0
      %v2035 = vadd.f32 0.0, %v2034
      %v2036 = vpop.f32.mrb[0].mxu0
      %2037 = vmatprep.mubr.f32.mxu0 0.0
      %2038 = vmatmul.mubr.f32.gmra.mrb[0].mxu0 %v1858
      %v2039 = vpop.f32.mrb[0].mxu0
      %v2040 = vadd.f32 0.0, %v2039
      %v2041 = vpop.f32.mrb[0].mxu0
      %2042 = vmatprep.mubr.f32.mxu0 0.0
      %2043 = vmatmul.mubr.f32.gmra.mrb[0].mxu0 %v1861
      %v2044 = vpop.f32.mrb[0].mxu0
      %v2045 = vadd.f32 0.0, %v2044
      %v2046 = vpop.f32.mrb[0].mxu0
      %2047 = vmatprep.mubr.f32.mxu0 0.0
      %2048 = vmatmul.mubr.f32.gmra.mrb[0].mxu0 %v1864
      %v2049 = vpop.f32.mrb[0].mxu0
      %v2050 = vadd.f32 0.0, %v2049
      %v2051 = vpop.f32.mrb[0].mxu0
      %2052 = vmatprep.mubr.f32.mxu0 0.0
      %2053 = vmatmul.mubr.f32.gmra.mrb[0].mxu0 %v1867
      %v2054 = vpop.f32.mrb[0].mxu0
      %v2055 = vadd.f32 0.0, %v2054
      %v2056 = vpop.f32.mrb[0].mxu0
      %2057 = vmatprep.mubr.f32.mxu0 0.0
      %2058 = vmatmul.mubr.f32.gmra.mrb[0].mxu0 %v1870
      %v2059 = vpop.f32.mrb[0].mxu0
      %v2060 = vadd.f32 0.0, %v2059
      %v2061 = vpop.f32.mrb[0].mxu0
      %2062 = vmatprep.mubr.f32.mxu0 0.0
      %2063 = vmatmul.mubr.f32.gmra.mrb[0].mxu0 %v1873
      %v2064 = vpop.f32.mrb[0].mxu0
      %v2065 = vadd.f32 0.0, %v2064
      %v2066 = vpop.f32.mrb[0].mxu0
      %2067 = vmatprep.mubr.f32.mxu0 0.0
      %2068 = vmatmul.mubr.f32.gmra.mrb[0].mxu0 %v1876
      %v2069 = vpop.f32.mrb[0].mxu0
      %v2070 = vadd.f32 0.0, %v2069
      %v2071 = vpop.f32.mrb[0].mxu0
      %2072 = vmatprep.mubr.f32.mxu0 0.0
      %2073 = vmatmul.mubr.f32.gmra.mrb[0].mxu0 %v1879
      %v2074 = vpop.f32.mrb[0].mxu0
      %v2075 = vadd.f32 0.0, %v2074
      %v2076 = vpop.f32.mrb[0].mxu0
      %2077 = vmatprep.mubr.f32.mxu0 0.0
      %2078 = vmatmul.mubr.f32.gmra.mrb[0].mxu0 %v1882
      %v2079 = vpop.f32.mrb[0].mxu0
      %v2080 = vadd.f32 0.0, %v2079
      %v2081 = vpop.f32.mrb[0].mxu0
      %2082 = vmatprep.mubr.f32.mxu0 0.0
      %2083 = vmatmul.mubr.f32.gmra.mrb[0].mxu0 %v1885
      %v2084 = vpop.f32.mrb[0].mxu0
      %v2085 = vadd.f32 0.0, %v2084
      %v2086 = vpop.f32.mrb[0].mxu0
      %2087 = vmatprep.mubr.f32.mxu0 0.0
      %2088 = vmatmul.mubr.f32.gmra.mrb[0].mxu0 %v1888
      %v2089 = vpop.f32.mrb[0].mxu0
      %v2090 = vadd.f32 0.0, %v2089
      %v2091 = vpop.f32.mrb[0].mxu0
      %2092 = vmatprep.mubr.f32.mxu0 0.0
      %2093 = vmatmul.mubr.f32.gmra.mrb[0].mxu0 %v1891
      %v2094 = vpop.f32.mrb[0].mxu0
      %v2095 = vadd.f32 0.0, %v2094
      %v2096 = vpop.f32.mrb[0].mxu0
      %2097 = vmatprep.mubr.f32.mxu0 0.0
      %2098 = vmatmul.mubr.f32.gmra.mrb[0].mxu0 %v1894
      %v2099 = vpop.f32.mrb[0].mxu0
      %v2100 = vadd.f32 0.0, %v2099
      %v2101 = vpop.f32.mrb[0].mxu0
      %2102 = vmatprep.mubr.f32.mxu0 0.0
      %2103 = vmatmul.mubr.f32.gmra.mrb[0].mxu0 %v1897
      %v2104 = vpop.f32.mrb[0].mxu0
      %v2105 = vadd.f32 0.0, %v2104
      %v2106 = vpop.f32.mrb[0].mxu0
      %2107 = vmatprep.mubr.f32.mxu0 0.0
      %2108 = vmatmul.mubr.f32.gmra.mrb[0].mxu0 %v1900
      %v2109 = vpop.f32.mrb[0].mxu0
      %v2110 = vadd.f32 0.0, %v2109
      %v2111 = vpop.f32.mrb[0].mxu0
      %2112 = vmatprep.mubr.f32.mxu0 0.0
      %2113 = vmatmul.mubr.f32.gmra.mrb[0].mxu0 %v1903
      %v2114 = vpop.f32.mrb[0].mxu0
      %v2115 = vadd.f32 0.0, %v2114
      %v2116 = vpop.f32.mrb[0].mxu0
      %2117 = vmatprep.mubr.f32.mxu0 0.0
      %2118 = vmatmul.mubr.f32.gmra.mrb[0].mxu0 %v1906
      %v2119 = vpop.f32.mrb[0].mxu0
      %v2120 = vadd.f32 0.0, %v2119
      %v2121 = vpop.f32.mrb[0].mxu0
      %2122 = vmatprep.mubr.f32.mxu0 0.0
      %2123 = vmatmul.mubr.f32.gmra.mrb[0].mxu0 %v1909
      %v2124 = vpop.f32.mrb[0].mxu0
      %v2125 = vadd.f32 0.0, %v2124
      %v2126 = vpop.f32.mrb[0].mxu0
      %2127 = vmatprep.mubr.f32.mxu0 0.0
      %2128 = vmatmul.mubr.f32.gmra.mrb[0].mxu0 %v1912
      %v2129 = vpop.f32.mrb[0].mxu0
      %v2130 = vadd.f32 0.0, %v2129
      %v2131 = vpop.f32.mrb[0].mxu0
      %2132 = vmatprep.mubr.f32.mxu0 0.0
      %2133 = vmatmul.mubr.f32.gmra.mrb[0].mxu0 %v1915
      %v2134 = vpop.f32.mrb[0].mxu0
      %v2135 = vadd.f32 0.0, %v2134
      %v2136 = vpop.f32.mrb[0].mxu0
      %2137 = vmatprep.mubr.f32.mxu0 0.0
      %2138 = vmatmul.mubr.f32.gmra.mrb[0].mxu0 %v1918
      %v2139 = vpop.f32.mrb[0].mxu0
      %v2140 = vadd.f32 0.0, %v2139
      %v2141 = vpop.f32.mrb[0].mxu0
      %2142 = vmatprep.mubr.f32.mxu0 0.0
      %2143 = vmatmul.mubr.f32.gmra.mrb[0].mxu0 %v1921
      %v2144 = vpop.f32.mrb[0].mxu0
      %v2145 = vadd.f32 0.0, %v2144
      %v2146 = vpop.f32.mrb[0].mxu0
      %2147 = vmatprep.mubr.f32.mxu0 0.0
      %2148 = vmatmul.mubr.f32.gmra.mrb[0].mxu0 %v1924
      %v2149 = vpop.f32.mrb[0].mxu0
      %v2150 = vadd.f32 0.0, %v2149
      %v2151 = vpop.f32.mrb[0].mxu0
      %2152 = vmatprep.mubr.f32.mxu0 0.0
      %2153 = vmatmul.mubr.f32.gmra.mrb[0].mxu0 %v1927
      %v2154 = vpop.f32.mrb[0].mxu0
      %v2155 = vadd.f32 0.0, %v2154
      %v2156 = vpop.f32.mrb[0].mxu0
      %2157 = vmatprep.mubr.f32.mxu0 0.0
      %2158 = vmatmul.mubr.f32.gmra.mrb[0].mxu0 %v1930
      %v2159 = vpop.f32.mrb[0].mxu0
      %v2160 = vadd.f32 0.0, %v2159
      %v2161 = vpop.f32.mrb[0].mxu0
      %2162 = vmatprep.mubr.f32.mxu0 0.0
      %2163 = vmatmul.mubr.f32.gmra.mrb[0].mxu0 %v1933
      %v2164 = vpop.f32.mrb[0].mxu0
      %v2165 = vadd.f32 0.0, %v2164
      %v2166 = vpop.f32.mrb[0].mxu0
      %2167 = vmatprep.mubr.f32.mxu0 0.0
      %2168 = vmatmul.mubr.f32.gmra.mrb[0].mxu0 %v1936
      %v2169 = vpop.f32.mrb[0].mxu0
      %v2170 = vadd.f32 0.0, %v2169
      %v2171 = vpop.f32.mrb[0].mxu0
      %2172 = vmatprep.mubr.f32.mxu0 0.0
      %2173 = vmatmul.mubr.f32.gmra.mrb[0].mxu0 %v1939
      %v2174 = vpop.f32.mrb[0].mxu0
      %v2175 = vadd.f32 0.0, %v2174
      %v2176 = vpop.f32.mrb[0].mxu0
      %2177 = vmatprep.mubr.f32.mxu0 0.0
      %2178 = vmatmul.mubr.f32.gmra.mrb[0].mxu0 %v1942
      %v2179 = vpop.f32.mrb[0].mxu0
      %v2180 = vadd.f32 0.0, %v2179
      %v2181 = vpop.f32.mrb[0].mxu0
      %2182 = vmatprep.mubr.f32.mxu0 0.0
      %2183 = vmatmul.mubr.f32.gmra.mrb[0].mxu0 %v1945
      %v2184 = vpop.f32.mrb[0].mxu0
      %v2185 = vadd.f32 0.0, %v2184
      %v2186 = vpop.f32.mrb[0].mxu0
      %2187 = vmatprep.mubr.f32.mxu0 0.0
      %2188 = vmatmul.mubr.f32.gmra.mrb[0].mxu0 %v1948
      %v2189 = vpop.f32.mrb[0].mxu0
      %v2190 = vadd.f32 0.0, %v2189
      %v2191 = vpop.f32.mrb[0].mxu0
      %2192 = vmatprep.mubr.f32.mxu0 0.0
      %2193 = vmatmul.mubr.f32.gmra.mrb[0].mxu0 %v1951
      %v2194 = vpop.f32.mrb[0].mxu0
      %v2195 = vadd.f32 0.0, %v2194
      %v2196 = vpop.f32.mrb[0].mxu0
      %2197 = vdwg.mxu0
      %v2198 = vadd.f32 %v1771, %v2020
      %v2199 = vadd.f32 %v1772, %v2025
      %v2200 = vadd.f32 %v1773, %v2030
      %v2201 = vadd.f32 %v1774, %v2035
      %v2202 = vadd.f32 %v1775, %v2040
      %v2203 = vadd.f32 %v1776, %v2045
      %v2204 = vadd.f32 %v1777, %v2050
      %v2205 = vadd.f32 %v1778, %v2055
      %v2206 = vadd.f32 %v1779, %v2060
      %v2207 = vadd.f32 %v1780, %v2065
      %v2208 = vadd.f32 %v1781, %v2070
      %v2209 = vadd.f32 %v1782, %v2075
      %v2210 = vadd.f32 %v1783, %v2080
      %v2211 = vadd.f32 %v1784, %v2085
      %v2212 = vadd.f32 %v1785, %v2090
      %v2213 = vadd.f32 %v1786, %v2095
      %v2214 = vadd.f32 %v1787, %v2100
      %v2215 = vadd.f32 %v1788, %v2105
      %v2216 = vadd.f32 %v1789, %v2110
      %v2217 = vadd.f32 %v1790, %v2115
      %v2218 = vadd.f32 %v1791, %v2120
      %v2219 = vadd.f32 %v1792, %v2125
      %v2220 = vadd.f32 %v1793, %v2130
      %v2221 = vadd.f32 %v1794, %v2135
      %v2222 = vadd.f32 %v1795, %v2140
      %v2223 = vadd.f32 %v1796, %v2145
      %v2224 = vadd.f32 %v1797, %v2150
      %v2225 = vadd.f32 %v1798, %v2155
      %v2226 = vadd.f32 %v1799, %v2160
      %v2227 = vadd.f32 %v1800, %v2165
      %v2228 = vadd.f32 %v1801, %v2170
      %v2229 = vadd.f32 %v1802, %v2175
      %v2230 = vadd.f32 %v1803, %v2180
      %v2231 = vadd.f32 %v1804, %v2185
      %v2232 = vadd.f32 %v1805, %v2190
      %v2233 = vadd.f32 %v1806, %v2195
      %v2234 = vld [vmem:[%s165 + $0x14] sm:$0xff]
      %v2235 = vld [vmem:[%s165 + $0x1c] sm:$0xff]
      %v2236 = vld [vmem:[%s165 + $0x24] sm:$0xff]
      %v2237 = vld [vmem:[%s165 + $0x2c] sm:$0xff]
      %v2238 = vld [vmem:[%s165 + $0x34] sm:$0xff]
      %v2239 = vld [vmem:[%s165 + $0x3c] sm:$0xff]
      %v2240 = vld [vmem:[%s165 + $0x44] sm:$0xff]
      %v2241 = vld [vmem:[%s165 + $0x4c] sm:$0xff]
      %v2242 = vld [vmem:[%s165 + $0x54] sm:$0xff]
      %v2243 = vld [vmem:[%s165 + $0x5c] sm:$0xff]
      %v2244 = vld [vmem:[%s165 + $0x64] sm:$0xff]
      %v2245 = vld [vmem:[%s165 + $0x6c] sm:$0xff]
      %v2246 = vld [vmem:[%s165 + $0x74] sm:$0xff]
      %v2247 = vld [vmem:[%s165 + $0x7c] sm:$0xff]
      %v2248 = vld [vmem:[%s165 + $0x84] sm:$0xff]
      %v2249 = vld [vmem:[%s165 + $0x8c] sm:$0xff]
      %v2250 = vld [vmem:[%s165 + $0x94] sm:$0xff]
      %v2251 = vld [vmem:[%s165 + $0x9c] sm:$0xff]
      %v2252 = vld [vmem:[%s165 + $0xa4] sm:$0xff]
      %v2253 = vld [vmem:[%s165 + $0xac] sm:$0xff]
      %v2254 = vld [vmem:[%s165 + $0xb4] sm:$0xff]
      %v2255 = vld [vmem:[%s165 + $0xbc] sm:$0xff]
      %v2256 = vld [vmem:[%s165 + $0xc4] sm:$0xff]
      %v2257 = vld [vmem:[%s165 + $0xcc] sm:$0xff]
      %v2258 = vld [vmem:[%s165 + $0xd4] sm:$0xff]
      %v2259 = vld [vmem:[%s165 + $0xdc] sm:$0xff]
      %v2260 = vld [vmem:[%s165 + $0xe4] sm:$0xff]
      %v2261 = vld [vmem:[%s165 + $0xec] sm:$0xff]
      %v2262 = vld [vmem:[%s165 + $0xf4] sm:$0xff]
      %v2263 = vld [vmem:[%s165 + $0xfc] sm:$0xff]
      %v2264 = vld [vmem:[%s165 + $0x104] sm:$0xff]
      %v2265 = vld [vmem:[%s165 + $0x10c] sm:$0xff]
      %v2266 = vld [vmem:[%s165 + $0x114] sm:$0xff]
      %v2267 = vld [vmem:[%s165 + $0x11c] sm:$0xff]
      %v2268 = vld [vmem:[%s165 + $0x124] sm:$0xff]
      %v2269 = vld [vmem:[%s165 + $0x12c] sm:$0xff]
      %s2270 = scalar_lea.vmem %s1, 40
      %v2271 = vld [vmem:[%s2270] sm:$0xff]
      %v2273 = vsel %vm246, %v2234, 0
      %v2276 = vsel %vm246, %v2235, 0
      %v2279 = vsel %vm246, %v2236, 0
      %v2282 = vsel %vm246, %v2237, 0
      %v2285 = vsel %vm246, %v2238, 0
      %v2288 = vsel %vm246, %v2239, 0
      %v2291 = vsel %vm246, %v2240, 0
      %v2294 = vsel %vm246, %v2241, 0
      %v2297 = vsel %vm246, %v2242, 0
      %v2300 = vsel %vm246, %v2243, 0
      %v2303 = vsel %vm246, %v2244, 0
      %v2306 = vsel %vm246, %v2245, 0
      %v2309 = vsel %vm246, %v2246, 0
      %v2312 = vsel %vm246, %v2247, 0
      %v2315 = vsel %vm246, %v2248, 0
      %v2318 = vsel %vm246, %v2249, 0
      %v2321 = vsel %vm246, %v2250, 0
      %v2324 = vsel %vm246, %v2251, 0
      %v2327 = vsel %vm246, %v2252, 0
      %v2330 = vsel %vm246, %v2253, 0
      %v2333 = vsel %vm246, %v2254, 0
      %v2336 = vsel %vm246, %v2255, 0
      %v2339 = vsel %vm246, %v2256, 0
      %v2342 = vsel %vm246, %v2257, 0
      %v2345 = vsel %vm246, %v2258, 0
      %v2348 = vsel %vm246, %v2259, 0
      %v2351 = vsel %vm246, %v2260, 0
      %v2354 = vsel %vm246, %v2261, 0
      %v2357 = vsel %vm246, %v2262, 0
      %v2360 = vsel %vm246, %v2263, 0
      %v2363 = vsel %vm246, %v2264, 0
      %v2366 = vsel %vm246, %v2265, 0
      %v2369 = vsel %vm246, %v2266, 0
      %v2372 = vsel %vm246, %v2267, 0
      %v2375 = vsel %vm246, %v2268, 0
      %v2378 = vsel %vm246, %v2269, 0
      %2380 = vmatprep.subr.mxu0 0.0
      %2381 = vmatpush1.msra.mxu0 %v2271
      %2382 = vmatprep.subr.mxu0 0.0
      %2383 = vmatpush1.msra.mxu0 0.0
      %2384 = vmatprep.subr.mxu0 0.0
      %2385 = vmatpush1.msra.mxu0 0.0
      %2386 = vmatprep.subr.mxu0 0.0
      %2387 = vmatpush1.msra.mxu0 0.0
      %2388 = vmatprep.subr.mxu0 0.0
      %2389 = vmatpush1.msra.mxu0 0.0
      %2390 = vmatprep.subr.mxu0 0.0
      %2391 = vmatpush1.msra.mxu0 0.0
      %2392 = vmatprep.subr.mxu0 0.0
      %2393 = vmatpush1.msra.mxu0 0.0
      %2394 = vmatprep.subr.mxu0 0.0
      %2395 = vmatpush1.msra.mxu0 0.0
      %2396 = vmatprep.subr.mxu0 0.0
      %2397 = vmatpush1.msra.mxu0 0.0
      %2398 = vmatprep.subr.mxu0 0.0
      %2399 = vmatpush1.msra.mxu0 0.0
      %2400 = vmatprep.subr.mxu0 0.0
      %2401 = vmatpush1.msra.mxu0 0.0
      %2402 = vmatprep.subr.mxu0 0.0
      %2403 = vmatpush1.msra.mxu0 0.0
      %2404 = vmatprep.subr.mxu0 0.0
      %2405 = vmatpush1.msra.mxu0 0.0
      %2406 = vmatprep.subr.mxu0 0.0
      %2407 = vmatpush1.msra.mxu0 0.0
      %2408 = vmatprep.subr.mxu0 0.0
      %2409 = vmatpush1.msra.mxu0 0.0
      %2410 = vmatprep.subr.mxu0 0.0
      %2411 = vmatpush1.msra.mxu0 0.0
      %2412 = vmatprep.subr.mxu0 0.0
      %2413 = vmatpush1.msra.mxu0 0.0
      %2414 = vmatprep.subr.mxu0 0.0
      %2415 = vmatpush1.msra.mxu0 0.0
      %2416 = vmatprep.subr.mxu0 0.0
      %2417 = vmatpush1.msra.mxu0 0.0
      %2418 = vmatprep.subr.mxu0 0.0
      %2419 = vmatpush1.msra.mxu0 0.0
      %2420 = vmatprep.subr.mxu0 0.0
      %2421 = vmatpush1.msra.mxu0 0.0
      %2422 = vmatprep.subr.mxu0 0.0
      %2423 = vmatpush1.msra.mxu0 0.0
      %2424 = vmatprep.subr.mxu0 0.0
      %2425 = vmatpush1.msra.mxu0 0.0
      %2426 = vmatprep.subr.mxu0 0.0
      %2427 = vmatpush1.msra.mxu0 0.0
      %2428 = vmatprep.subr.mxu0 0.0
      %2429 = vmatpush1.msra.mxu0 0.0
      %2430 = vmatprep.subr.mxu0 0.0
      %2431 = vmatpush1.msra.mxu0 0.0
      %2432 = vmatprep.subr.mxu0 0.0
      %2433 = vmatpush1.msra.mxu0 0.0
      %2434 = vmatprep.subr.mxu0 0.0
      %2435 = vmatpush1.msra.mxu0 0.0
      %2436 = vmatprep.subr.mxu0 0.0
      %2437 = vmatpush1.msra.mxu0 0.0
      %2438 = vmatprep.subr.mxu0 0.0
      %2439 = vmatpush1.msra.mxu0 0.0
      %2440 = vmatprep.subr.mxu0 0.0
      %2441 = vmatpush1.msra.mxu0 0.0
      %2442 = vmatprep.subr.mxu0 0.0
      %2443 = vmatpush1.msra.mxu0 0.0
      %2444 = vmatprep.mubr.f32.mxu0 0.0
      %2445 = vmatmul.mubr.f32.gmra.mrb[0].mxu0 %v2273
      %v2446 = vpop.f32.mrb[0].mxu0
      %v2447 = vadd.f32 0.0, %v2446
      %v2448 = vpop.f32.mrb[0].mxu0
      %2449 = vmatprep.mubr.f32.mxu0 0.0
      %2450 = vmatmul.mubr.f32.gmra.mrb[0].mxu0 %v2276
      %v2451 = vpop.f32.mrb[0].mxu0
      %v2452 = vadd.f32 0.0, %v2451
      %v2453 = vpop.f32.mrb[0].mxu0
      %2454 = vmatprep.mubr.f32.mxu0 0.0
      %2455 = vmatmul.mubr.f32.gmra.mrb[0].mxu0 %v2279
      %v2456 = vpop.f32.mrb[0].mxu0
      %v2457 = vadd.f32 0.0, %v2456
      %v2458 = vpop.f32.mrb[0].mxu0
      %2459 = vmatprep.mubr.f32.mxu0 0.0
      %2460 = vmatmul.mubr.f32.gmra.mrb[0].mxu0 %v2282
      %v2461 = vpop.f32.mrb[0].mxu0
      %v2462 = vadd.f32 0.0, %v2461
      %v2463 = vpop.f32.mrb[0].mxu0
      %2464 = vmatprep.mubr.f32.mxu0 0.0
      %2465 = vmatmul.mubr.f32.gmra.mrb[0].mxu0 %v2285
      %v2466 = vpop.f32.mrb[0].mxu0
      %v2467 = vadd.f32 0.0, %v2466
      %v2468 = vpop.f32.mrb[0].mxu0
      %2469 = vmatprep.mubr.f32.mxu0 0.0
      %2470 = vmatmul.mubr.f32.gmra.mrb[0].mxu0 %v2288
      %v2471 = vpop.f32.mrb[0].mxu0
      %v2472 = vadd.f32 0.0, %v2471
      %v2473 = vpop.f32.mrb[0].mxu0
      %2474 = vmatprep.mubr.f32.mxu0 0.0
      %2475 = vmatmul.mubr.f32.gmra.mrb[0].mxu0 %v2291
      %v2476 = vpop.f32.mrb[0].mxu0
      %v2477 = vadd.f32 0.0, %v2476
      %v2478 = vpop.f32.mrb[0].mxu0
      %2479 = vmatprep.mubr.f32.mxu0 0.0
      %2480 = vmatmul.mubr.f32.gmra.mrb[0].mxu0 %v2294
      %v2481 = vpop.f32.mrb[0].mxu0
      %v2482 = vadd.f32 0.0, %v2481
      %v2483 = vpop.f32.mrb[0].mxu0
      %2484 = vmatprep.mubr.f32.mxu0 0.0
      %2485 = vmatmul.mubr.f32.gmra.mrb[0].mxu0 %v2297
      %v2486 = vpop.f32.mrb[0].mxu0
      %v2487 = vadd.f32 0.0, %v2486
      %v2488 = vpop.f32.mrb[0].mxu0
      %2489 = vmatprep.mubr.f32.mxu0 0.0
      %2490 = vmatmul.mubr.f32.gmra.mrb[0].mxu0 %v2300
      %v2491 = vpop.f32.mrb[0].mxu0
      %v2492 = vadd.f32 0.0, %v2491
      %v2493 = vpop.f32.mrb[0].mxu0
      %2494 = vmatprep.mubr.f32.mxu0 0.0
      %2495 = vmatmul.mubr.f32.gmra.mrb[0].mxu0 %v2303
      %v2496 = vpop.f32.mrb[0].mxu0
      %v2497 = vadd.f32 0.0, %v2496
      %v2498 = vpop.f32.mrb[0].mxu0
      %2499 = vmatprep.mubr.f32.mxu0 0.0
      %2500 = vmatmul.mubr.f32.gmra.mrb[0].mxu0 %v2306
      %v2501 = vpop.f32.mrb[0].mxu0
      %v2502 = vadd.f32 0.0, %v2501
      %v2503 = vpop.f32.mrb[0].mxu0
      %2504 = vmatprep.mubr.f32.mxu0 0.0
      %2505 = vmatmul.mubr.f32.gmra.mrb[0].mxu0 %v2309
      %v2506 = vpop.f32.mrb[0].mxu0
      %v2507 = vadd.f32 0.0, %v2506
      %v2508 = vpop.f32.mrb[0].mxu0
      %2509 = vmatprep.mubr.f32.mxu0 0.0
      %2510 = vmatmul.mubr.f32.gmra.mrb[0].mxu0 %v2312
      %v2511 = vpop.f32.mrb[0].mxu0
      %v2512 = vadd.f32 0.0, %v2511
      %v2513 = vpop.f32.mrb[0].mxu0
      %2514 = vmatprep.mubr.f32.mxu0 0.0
      %2515 = vmatmul.mubr.f32.gmra.mrb[0].mxu0 %v2315
      %v2516 = vpop.f32.mrb[0].mxu0
      %v2517 = vadd.f32 0.0, %v2516
      %v2518 = vpop.f32.mrb[0].mxu0
      %2519 = vmatprep.mubr.f32.mxu0 0.0
      %2520 = vmatmul.mubr.f32.gmra.mrb[0].mxu0 %v2318
      %v2521 = vpop.f32.mrb[0].mxu0
      %v2522 = vadd.f32 0.0, %v2521
      %v2523 = vpop.f32.mrb[0].mxu0
      %2524 = vmatprep.mubr.f32.mxu0 0.0
      %2525 = vmatmul.mubr.f32.gmra.mrb[0].mxu0 %v2321
      %v2526 = vpop.f32.mrb[0].mxu0
      %v2527 = vadd.f32 0.0, %v2526
      %v2528 = vpop.f32.mrb[0].mxu0
      %2529 = vmatprep.mubr.f32.mxu0 0.0
      %2530 = vmatmul.mubr.f32.gmra.mrb[0].mxu0 %v2324
      %v2531 = vpop.f32.mrb[0].mxu0
      %v2532 = vadd.f32 0.0, %v2531
      %v2533 = vpop.f32.mrb[0].mxu0
      %2534 = vmatprep.mubr.f32.mxu0 0.0
      %2535 = vmatmul.mubr.f32.gmra.mrb[0].mxu0 %v2327
      %v2536 = vpop.f32.mrb[0].mxu0
      %v2537 = vadd.f32 0.0, %v2536
      %v2538 = vpop.f32.mrb[0].mxu0
      %2539 = vmatprep.mubr.f32.mxu0 0.0
      %2540 = vmatmul.mubr.f32.gmra.mrb[0].mxu0 %v2330
      %v2541 = vpop.f32.mrb[0].mxu0
      %v2542 = vadd.f32 0.0, %v2541
      %v2543 = vpop.f32.mrb[0].mxu0
      %2544 = vmatprep.mubr.f32.mxu0 0.0
      %2545 = vmatmul.mubr.f32.gmra.mrb[0].mxu0 %v2333
      %v2546 = vpop.f32.mrb[0].mxu0
      %v2547 = vadd.f32 0.0, %v2546
      %v2548 = vpop.f32.mrb[0].mxu0
      %2549 = vmatprep.mubr.f32.mxu0 0.0
      %2550 = vmatmul.mubr.f32.gmra.mrb[0].mxu0 %v2336
      %v2551 = vpop.f32.mrb[0].mxu0
      %v2552 = vadd.f32 0.0, %v2551
      %v2553 = vpop.f32.mrb[0].mxu0
      %2554 = vmatprep.mubr.f32.mxu0 0.0
      %2555 = vmatmul.mubr.f32.gmra.mrb[0].mxu0 %v2339
      %v2556 = vpop.f32.mrb[0].mxu0
      %v2557 = vadd.f32 0.0, %v2556
      %v2558 = vpop.f32.mrb[0].mxu0
      %2559 = vmatprep.mubr.f32.mxu0 0.0
      %2560 = vmatmul.mubr.f32.gmra.mrb[0].mxu0 %v2342
      %v2561 = vpop.f32.mrb[0].mxu0
      %v2562 = vadd.f32 0.0, %v2561
      %v2563 = vpop.f32.mrb[0].mxu0
      %2564 = vmatprep.mubr.f32.mxu0 0.0
      %2565 = vmatmul.mubr.f32.gmra.mrb[0].mxu0 %v2345
      %v2566 = vpop.f32.mrb[0].mxu0
      %v2567 = vadd.f32 0.0, %v2566
      %v2568 = vpop.f32.mrb[0].mxu0
      %2569 = vmatprep.mubr.f32.mxu0 0.0
      %2570 = vmatmul.mubr.f32.gmra.mrb[0].mxu0 %v2348
      %v2571 = vpop.f32.mrb[0].mxu0
      %v2572 = vadd.f32 0.0, %v2571
      %v2573 = vpop.f32.mrb[0].mxu0
      %2574 = vmatprep.mubr.f32.mxu0 0.0
      %2575 = vmatmul.mubr.f32.gmra.mrb[0].mxu0 %v2351
      %v2576 = vpop.f32.mrb[0].mxu0
      %v2577 = vadd.f32 0.0, %v2576
      %v2578 = vpop.f32.mrb[0].mxu0
      %2579 = vmatprep.mubr.f32.mxu0 0.0
      %2580 = vmatmul.mubr.f32.gmra.mrb[0].mxu0 %v2354
      %v2581 = vpop.f32.mrb[0].mxu0
      %v2582 = vadd.f32 0.0, %v2581
      %v2583 = vpop.f32.mrb[0].mxu0
      %2584 = vmatprep.mubr.f32.mxu0 0.0
      %2585 = vmatmul.mubr.f32.gmra.mrb[0].mxu0 %v2357
      %v2586 = vpop.f32.mrb[0].mxu0
      %v2587 = vadd.f32 0.0, %v2586
      %v2588 = vpop.f32.mrb[0].mxu0
      %2589 = vmatprep.mubr.f32.mxu0 0.0
      %2590 = vmatmul.mubr.f32.gmra.mrb[0].mxu0 %v2360
      %v2591 = vpop.f32.mrb[0].mxu0
      %v2592 = vadd.f32 0.0, %v2591
      %v2593 = vpop.f32.mrb[0].mxu0
      %2594 = vmatprep.mubr.f32.mxu0 0.0
      %2595 = vmatmul.mubr.f32.gmra.mrb[0].mxu0 %v2363
      %v2596 = vpop.f32.mrb[0].mxu0
      %v2597 = vadd.f32 0.0, %v2596
      %v2598 = vpop.f32.mrb[0].mxu0
      %2599 = vmatprep.mubr.f32.mxu0 0.0
      %2600 = vmatmul.mubr.f32.gmra.mrb[0].mxu0 %v2366
      %v2601 = vpop.f32.mrb[0].mxu0
      %v2602 = vadd.f32 0.0, %v2601
      %v2603 = vpop.f32.mrb[0].mxu0
      %2604 = vmatprep.mubr.f32.mxu0 0.0
      %2605 = vmatmul.mubr.f32.gmra.mrb[0].mxu0 %v2369
      %v2606 = vpop.f32.mrb[0].mxu0
      %v2607 = vadd.f32 0.0, %v2606
      %v2608 = vpop.f32.mrb[0].mxu0
      %2609 = vmatprep.mubr.f32.mxu0 0.0
      %2610 = vmatmul.mubr.f32.gmra.mrb[0].mxu0 %v2372
      %v2611 = vpop.f32.mrb[0].mxu0
      %v2612 = vadd.f32 0.0, %v2611
      %v2613 = vpop.f32.mrb[0].mxu0
      %2614 = vmatprep.mubr.f32.mxu0 0.0
      %2615 = vmatmul.mubr.f32.gmra.mrb[0].mxu0 %v2375
      %v2616 = vpop.f32.mrb[0].mxu0
      %v2617 = vadd.f32 0.0, %v2616
      %v2618 = vpop.f32.mrb[0].mxu0
      %2619 = vmatprep.mubr.f32.mxu0 0.0
      %2620 = vmatmul.mubr.f32.gmra.mrb[0].mxu0 %v2378
      %v2621 = vpop.f32.mrb[0].mxu0
      %v2622 = vadd.f32 0.0, %v2621
      %v2623 = vpop.f32.mrb[0].mxu0
      %2624 = vdwg.mxu0
      %v2625 = vadd.f32 %v2198, %v2447
      %v2626 = vadd.f32 %v2199, %v2452
      %v2627 = vadd.f32 %v2200, %v2457
      %v2628 = vadd.f32 %v2201, %v2462
      %v2629 = vadd.f32 %v2202, %v2467
      %v2630 = vadd.f32 %v2203, %v2472
      %v2631 = vadd.f32 %v2204, %v2477
      %v2632 = vadd.f32 %v2205, %v2482
      %v2633 = vadd.f32 %v2206, %v2487
      %v2634 = vadd.f32 %v2207, %v2492
      %v2635 = vadd.f32 %v2208, %v2497
      %v2636 = vadd.f32 %v2209, %v2502
      %v2637 = vadd.f32 %v2210, %v2507
      %v2638 = vadd.f32 %v2211, %v2512
      %v2639 = vadd.f32 %v2212, %v2517
      %v2640 = vadd.f32 %v2213, %v2522
      %v2641 = vadd.f32 %v2214, %v2527
      %v2642 = vadd.f32 %v2215, %v2532
      %v2643 = vadd.f32 %v2216, %v2537
      %v2644 = vadd.f32 %v2217, %v2542
      %v2645 = vadd.f32 %v2218, %v2547
      %v2646 = vadd.f32 %v2219, %v2552
      %v2647 = vadd.f32 %v2220, %v2557
      %v2648 = vadd.f32 %v2221, %v2562
      %v2649 = vadd.f32 %v2222, %v2567
      %v2650 = vadd.f32 %v2223, %v2572
      %v2651 = vadd.f32 %v2224, %v2577
      %v2652 = vadd.f32 %v2225, %v2582
      %v2653 = vadd.f32 %v2226, %v2587
      %v2654 = vadd.f32 %v2227, %v2592
      %v2655 = vadd.f32 %v2228, %v2597
      %v2656 = vadd.f32 %v2229, %v2602
      %v2657 = vadd.f32 %v2230, %v2607
      %v2658 = vadd.f32 %v2231, %v2612
      %v2659 = vadd.f32 %v2232, %v2617
      %v2660 = vadd.f32 %v2233, %v2622
      %v2661 = vld [vmem:[%s165 + $0x24] sm:$0xff]
      %v2662 = vld [vmem:[%s165 + $0x2c] sm:$0xff]
      %v2663 = vld [vmem:[%s165 + $0x34] sm:$0xff]
      %v2664 = vld [vmem:[%s165 + $0x3c] sm:$0xff]
      %v2665 = vld [vmem:[%s165 + $0x44] sm:$0xff]
      %v2666 = vld [vmem:[%s165 + $0x4c] sm:$0xff]
      %v2667 = vld [vmem:[%s165 + $0x54] sm:$0xff]
      %v2668 = vld [vmem:[%s165 + $0x5c] sm:$0xff]
      %v2669 = vld [vmem:[%s165 + $0x64] sm:$0xff]
      %v2670 = vld [vmem:[%s165 + $0x6c] sm:$0xff]
      %v2671 = vld [vmem:[%s165 + $0x74] sm:$0xff]
      %v2672 = vld [vmem:[%s165 + $0x7c] sm:$0xff]
      %v2673 = vld [vmem:[%s165 + $0x84] sm:$0xff]
      %v2674 = vld [vmem:[%s165 + $0x8c] sm:$0xff]
      %v2675 = vld [vmem:[%s165 + $0x94] sm:$0xff]
      %v2676 = vld [vmem:[%s165 + $0x9c] sm:$0xff]
      %v2677 = vld [vmem:[%s165 + $0xa4] sm:$0xff]
      %v2678 = vld [vmem:[%s165 + $0xac] sm:$0xff]
      %v2679 = vld [vmem:[%s165 + $0xb4] sm:$0xff]
      %v2680 = vld [vmem:[%s165 + $0xbc] sm:$0xff]
      %v2681 = vld [vmem:[%s165 + $0xc4] sm:$0xff]
      %v2682 = vld [vmem:[%s165 + $0xcc] sm:$0xff]
      %v2683 = vld [vmem:[%s165 + $0xd4] sm:$0xff]
      %v2684 = vld [vmem:[%s165 + $0xdc] sm:$0xff]
      %v2685 = vld [vmem:[%s165 + $0xe4] sm:$0xff]
      %v2686 = vld [vmem:[%s165 + $0xec] sm:$0xff]
      %v2687 = vld [vmem:[%s165 + $0xf4] sm:$0xff]
      %v2688 = vld [vmem:[%s165 + $0xfc] sm:$0xff]
      %v2689 = vld [vmem:[%s165 + $0x104] sm:$0xff]
      %v2690 = vld [vmem:[%s165 + $0x10c] sm:$0xff]
      %v2691 = vld [vmem:[%s165 + $0x114] sm:$0xff]
      %v2692 = vld [vmem:[%s165 + $0x11c] sm:$0xff]
      %v2693 = vld [vmem:[%s165 + $0x124] sm:$0xff]
      %v2694 = vld [vmem:[%s165 + $0x12c] sm:$0xff]
      %v2695 = vld [vmem:[%s165 + $0x134] sm:$0xff]
      %v2696 = vld [vmem:[%s165 + $0x13c] sm:$0xff]
      %s2697 = scalar_lea.vmem %s1, 48
      %v2698 = vld [vmem:[%s2697] sm:$0xff]
      %v2700 = vsel %vm246, %v2661, 0
      %v2703 = vsel %vm246, %v2662, 0
      %v2706 = vsel %vm246, %v2663, 0
      %v2709 = vsel %vm246, %v2664, 0
      %v2712 = vsel %vm246, %v2665, 0
      %v2715 = vsel %vm246, %v2666, 0
      %v2718 = vsel %vm246, %v2667, 0
      %v2721 = vsel %vm246, %v2668, 0
      %v2724 = vsel %vm246, %v2669, 0
      %v2727 = vsel %vm246, %v2670, 0
      %v2730 = vsel %vm246, %v2671, 0
      %v2733 = vsel %vm246, %v2672, 0
      %v2736 = vsel %vm246, %v2673, 0
      %v2739 = vsel %vm246, %v2674, 0
      %v2742 = vsel %vm246, %v2675, 0
      %v2745 = vsel %vm246, %v2676, 0
      %v2748 = vsel %vm246, %v2677, 0
      %v2751 = vsel %vm246, %v2678, 0
      %v2754 = vsel %vm246, %v2679, 0
      %v2757 = vsel %vm246, %v2680, 0
      %v2760 = vsel %vm246, %v2681, 0
      %v2763 = vsel %vm246, %v2682, 0
      %v2766 = vsel %vm246, %v2683, 0
      %v2769 = vsel %vm246, %v2684, 0
      %v2772 = vsel %vm246, %v2685, 0
      %v2775 = vsel %vm246, %v2686, 0
      %v2778 = vsel %vm246, %v2687, 0
      %v2781 = vsel %vm246, %v2688, 0
      %v2784 = vsel %vm246, %v2689, 0
      %v2787 = vsel %vm246, %v2690, 0
      %v2790 = vsel %vm246, %v2691, 0
      %v2793 = vsel %vm246, %v2692, 0
      %v2796 = vsel %vm246, %v2693, 0
      %v2799 = vsel %vm246, %v2694, 0
      %v2802 = vsel %vm246, %v2695, 0
      %v2805 = vsel %vm246, %v2696, 0
      %2807 = vmatprep.subr.mxu0 0.0
      %2808 = vmatpush1.msra.mxu0 %v2698
      %2809 = vmatprep.subr.mxu0 0.0
      %2810 = vmatpush1.msra.mxu0 0.0
      %2811 = vmatprep.subr.mxu0 0.0
      %2812 = vmatpush1.msra.mxu0 0.0
      %2813 = vmatprep.subr.mxu0 0.0
      %2814 = vmatpush1.msra.mxu0 0.0
      %2815 = vmatprep.subr.mxu0 0.0
      %2816 = vmatpush1.msra.mxu0 0.0
      %2817 = vmatprep.subr.mxu0 0.0
      %2818 = vmatpush1.msra.mxu0 0.0
      %2819 = vmatprep.subr.mxu0 0.0
      %2820 = vmatpush1.msra.mxu0 0.0
      %2821 = vmatprep.subr.mxu0 0.0
      %2822 = vmatpush1.msra.mxu0 0.0
      %2823 = vmatprep.subr.mxu0 0.0
      %2824 = vmatpush1.msra.mxu0 0.0
      %2825 = vmatprep.subr.mxu0 0.0
      %2826 = vmatpush1.msra.mxu0 0.0
      %2827 = vmatprep.subr.mxu0 0.0
      %2828 = vmatpush1.msra.mxu0 0.0
      %2829 = vmatprep.subr.mxu0 0.0
      %2830 = vmatpush1.msra.mxu0 0.0
      %2831 = vmatprep.subr.mxu0 0.0
      %2832 = vmatpush1.msra.mxu0 0.0
      %2833 = vmatprep.subr.mxu0 0.0
      %2834 = vmatpush1.msra.mxu0 0.0
      %2835 = vmatprep.subr.mxu0 0.0
      %2836 = vmatpush1.msra.mxu0 0.0
      %2837 = vmatprep.subr.mxu0 0.0
      %2838 = vmatpush1.msra.mxu0 0.0
      %2839 = vmatprep.subr.mxu0 0.0
      %2840 = vmatpush1.msra.mxu0 0.0
      %2841 = vmatprep.subr.mxu0 0.0
      %2842 = vmatpush1.msra.mxu0 0.0
      %2843 = vmatprep.subr.mxu0 0.0
      %2844 = vmatpush1.msra.mxu0 0.0
      %2845 = vmatprep.subr.mxu0 0.0
      %2846 = vmatpush1.msra.mxu0 0.0
      %2847 = vmatprep.subr.mxu0 0.0
      %2848 = vmatpush1.msra.mxu0 0.0
      %2849 = vmatprep.subr.mxu0 0.0
      %2850 = vmatpush1.msra.mxu0 0.0
      %2851 = vmatprep.subr.mxu0 0.0
      %2852 = vmatpush1.msra.mxu0 0.0
      %2853 = vmatprep.subr.mxu0 0.0
      %2854 = vmatpush1.msra.mxu0 0.0
      %2855 = vmatprep.subr.mxu0 0.0
      %2856 = vmatpush1.msra.mxu0 0.0
      %2857 = vmatprep.subr.mxu0 0.0
      %2858 = vmatpush1.msra.mxu0 0.0
      %2859 = vmatprep.subr.mxu0 0.0
      %2860 = vmatpush1.msra.mxu0 0.0
      %2861 = vmatprep.subr.mxu0 0.0
      %2862 = vmatpush1.msra.mxu0 0.0
      %2863 = vmatprep.subr.mxu0 0.0
      %2864 = vmatpush1.msra.mxu0 0.0
      %2865 = vmatprep.subr.mxu0 0.0
      %2866 = vmatpush1.msra.mxu0 0.0
      %2867 = vmatprep.subr.mxu0 0.0
      %2868 = vmatpush1.msra.mxu0 0.0
      %2869 = vmatprep.subr.mxu0 0.0
      %2870 = vmatpush1.msra.mxu0 0.0
      %2871 = vmatprep.mubr.f32.mxu0 0.0
      %2872 = vmatmul.mubr.f32.gmra.mrb[0].mxu0 %v2700
      %v2873 = vpop.f32.mrb[0].mxu0
      %v2874 = vadd.f32 0.0, %v2873
      %v2875 = vpop.f32.mrb[0].mxu0
      %2876 = vmatprep.mubr.f32.mxu0 0.0
      %2877 = vmatmul.mubr.f32.gmra.mrb[0].mxu0 %v2703
      %v2878 = vpop.f32.mrb[0].mxu0
      %v2879 = vadd.f32 0.0, %v2878
      %v2880 = vpop.f32.mrb[0].mxu0
      %2881 = vmatprep.mubr.f32.mxu0 0.0
      %2882 = vmatmul.mubr.f32.gmra.mrb[0].mxu0 %v2706
      %v2883 = vpop.f32.mrb[0].mxu0
      %v2884 = vadd.f32 0.0, %v2883
      %v2885 = vpop.f32.mrb[0].mxu0
      %2886 = vmatprep.mubr.f32.mxu0 0.0
      %2887 = vmatmul.mubr.f32.gmra.mrb[0].mxu0 %v2709
      %v2888 = vpop.f32.mrb[0].mxu0
      %v2889 = vadd.f32 0.0, %v2888
      %v2890 = vpop.f32.mrb[0].mxu0
      %2891 = vmatprep.mubr.f32.mxu0 0.0
      %2892 = vmatmul.mubr.f32.gmra.mrb[0].mxu0 %v2712
      %v2893 = vpop.f32.mrb[0].mxu0
      %v2894 = vadd.f32 0.0, %v2893
      %v2895 = vpop.f32.mrb[0].mxu0
      %2896 = vmatprep.mubr.f32.mxu0 0.0
      %2897 = vmatmul.mubr.f32.gmra.mrb[0].mxu0 %v2715
      %v2898 = vpop.f32.mrb[0].mxu0
      %v2899 = vadd.f32 0.0, %v2898
      %v2900 = vpop.f32.mrb[0].mxu0
      %2901 = vmatprep.mubr.f32.mxu0 0.0
      %2902 = vmatmul.mubr.f32.gmra.mrb[0].mxu0 %v2718
      %v2903 = vpop.f32.mrb[0].mxu0
      %v2904 = vadd.f32 0.0, %v2903
      %v2905 = vpop.f32.mrb[0].mxu0
      %2906 = vmatprep.mubr.f32.mxu0 0.0
      %2907 = vmatmul.mubr.f32.gmra.mrb[0].mxu0 %v2721
      %v2908 = vpop.f32.mrb[0].mxu0
      %v2909 = vadd.f32 0.0, %v2908
      %v2910 = vpop.f32.mrb[0].mxu0
      %2911 = vmatprep.mubr.f32.mxu0 0.0
      %2912 = vmatmul.mubr.f32.gmra.mrb[0].mxu0 %v2724
      %v2913 = vpop.f32.mrb[0].mxu0
      %v2914 = vadd.f32 0.0, %v2913
      %v2915 = vpop.f32.mrb[0].mxu0
      %2916 = vmatprep.mubr.f32.mxu0 0.0
      %2917 = vmatmul.mubr.f32.gmra.mrb[0].mxu0 %v2727
      %v2918 = vpop.f32.mrb[0].mxu0
      %v2919 = vadd.f32 0.0, %v2918
      %v2920 = vpop.f32.mrb[0].mxu0
      %2921 = vmatprep.mubr.f32.mxu0 0.0
      %2922 = vmatmul.mubr.f32.gmra.mrb[0].mxu0 %v2730
      %v2923 = vpop.f32.mrb[0].mxu0
      %v2924 = vadd.f32 0.0, %v2923
      %v2925 = vpop.f32.mrb[0].mxu0
      %2926 = vmatprep.mubr.f32.mxu0 0.0
      %2927 = vmatmul.mubr.f32.gmra.mrb[0].mxu0 %v2733
      %v2928 = vpop.f32.mrb[0].mxu0
      %v2929 = vadd.f32 0.0, %v2928
      %v2930 = vpop.f32.mrb[0].mxu0
      %2931 = vmatprep.mubr.f32.mxu0 0.0
      %2932 = vmatmul.mubr.f32.gmra.mrb[0].mxu0 %v2736
      %v2933 = vpop.f32.mrb[0].mxu0
      %v2934 = vadd.f32 0.0, %v2933
      %v2935 = vpop.f32.mrb[0].mxu0
      %2936 = vmatprep.mubr.f32.mxu0 0.0
      %2937 = vmatmul.mubr.f32.gmra.mrb[0].mxu0 %v2739
      %v2938 = vpop.f32.mrb[0].mxu0
      %v2939 = vadd.f32 0.0, %v2938
      %v2940 = vpop.f32.mrb[0].mxu0
      %2941 = vmatprep.mubr.f32.mxu0 0.0
      %2942 = vmatmul.mubr.f32.gmra.mrb[0].mxu0 %v2742
      %v2943 = vpop.f32.mrb[0].mxu0
      %v2944 = vadd.f32 0.0, %v2943
      %v2945 = vpop.f32.mrb[0].mxu0
      %2946 = vmatprep.mubr.f32.mxu0 0.0
      %2947 = vmatmul.mubr.f32.gmra.mrb[0].mxu0 %v2745
      %v2948 = vpop.f32.mrb[0].mxu0
      %v2949 = vadd.f32 0.0, %v2948
      %v2950 = vpop.f32.mrb[0].mxu0
      %2951 = vmatprep.mubr.f32.mxu0 0.0
      %2952 = vmatmul.mubr.f32.gmra.mrb[0].mxu0 %v2748
      %v2953 = vpop.f32.mrb[0].mxu0
      %v2954 = vadd.f32 0.0, %v2953
      %v2955 = vpop.f32.mrb[0].mxu0
      %2956 = vmatprep.mubr.f32.mxu0 0.0
      %2957 = vmatmul.mubr.f32.gmra.mrb[0].mxu0 %v2751
      %v2958 = vpop.f32.mrb[0].mxu0
      %v2959 = vadd.f32 0.0, %v2958
      %v2960 = vpop.f32.mrb[0].mxu0
      %2961 = vmatprep.mubr.f32.mxu0 0.0
      %2962 = vmatmul.mubr.f32.gmra.mrb[0].mxu0 %v2754
      %v2963 = vpop.f32.mrb[0].mxu0
      %v2964 = vadd.f32 0.0, %v2963
      %v2965 = vpop.f32.mrb[0].mxu0
      %2966 = vmatprep.mubr.f32.mxu0 0.0
      %2967 = vmatmul.mubr.f32.gmra.mrb[0].mxu0 %v2757
      %v2968 = vpop.f32.mrb[0].mxu0
      %v2969 = vadd.f32 0.0, %v2968
      %v2970 = vpop.f32.mrb[0].mxu0
      %2971 = vmatprep.mubr.f32.mxu0 0.0
      %2972 = vmatmul.mubr.f32.gmra.mrb[0].mxu0 %v2760
      %v2973 = vpop.f32.mrb[0].mxu0
      %v2974 = vadd.f32 0.0, %v2973
      %v2975 = vpop.f32.mrb[0].mxu0
      %2976 = vmatprep.mubr.f32.mxu0 0.0
      %2977 = vmatmul.mubr.f32.gmra.mrb[0].mxu0 %v2763
      %v2978 = vpop.f32.mrb[0].mxu0
      %v2979 = vadd.f32 0.0, %v2978
      %v2980 = vpop.f32.mrb[0].mxu0
      %2981 = vmatprep.mubr.f32.mxu0 0.0
      %2982 = vmatmul.mubr.f32.gmra.mrb[0].mxu0 %v2766
      %v2983 = vpop.f32.mrb[0].mxu0
      %v2984 = vadd.f32 0.0, %v2983
      %v2985 = vpop.f32.mrb[0].mxu0
      %2986 = vmatprep.mubr.f32.mxu0 0.0
      %2987 = vmatmul.mubr.f32.gmra.mrb[0].mxu0 %v2769
      %v2988 = vpop.f32.mrb[0].mxu0
      %v2989 = vadd.f32 0.0, %v2988
      %v2990 = vpop.f32.mrb[0].mxu0
      %2991 = vmatprep.mubr.f32.mxu0 0.0
      %2992 = vmatmul.mubr.f32.gmra.mrb[0].mxu0 %v2772
      %v2993 = vpop.f32.mrb[0].mxu0
      %v2994 = vadd.f32 0.0, %v2993
      %v2995 = vpop.f32.mrb[0].mxu0
      %2996 = vmatprep.mubr.f32.mxu0 0.0
      %2997 = vmatmul.mubr.f32.gmra.mrb[0].mxu0 %v2775
      %v2998 = vpop.f32.mrb[0].mxu0
      %v2999 = vadd.f32 0.0, %v2998
      %v3000 = vpop.f32.mrb[0].mxu0
      %3001 = vmatprep.mubr.f32.mxu0 0.0
      %3002 = vmatmul.mubr.f32.gmra.mrb[0].mxu0 %v2778
      %v3003 = vpop.f32.mrb[0].mxu0
      %v3004 = vadd.f32 0.0, %v3003
      %v3005 = vpop.f32.mrb[0].mxu0
      %3006 = vmatprep.mubr.f32.mxu0 0.0
      %3007 = vmatmul.mubr.f32.gmra.mrb[0].mxu0 %v2781
      %v3008 = vpop.f32.mrb[0].mxu0
      %v3009 = vadd.f32 0.0, %v3008
      %v3010 = vpop.f32.mrb[0].mxu0
      %3011 = vmatprep.mubr.f32.mxu0 0.0
      %3012 = vmatmul.mubr.f32.gmra.mrb[0].mxu0 %v2784
      %v3013 = vpop.f32.mrb[0].mxu0
      %v3014 = vadd.f32 0.0, %v3013
      %v3015 = vpop.f32.mrb[0].mxu0
      %3016 = vmatprep.mubr.f32.mxu0 0.0
      %3017 = vmatmul.mubr.f32.gmra.mrb[0].mxu0 %v2787
      %v3018 = vpop.f32.mrb[0].mxu0
      %v3019 = vadd.f32 0.0, %v3018
      %v3020 = vpop.f32.mrb[0].mxu0
      %3021 = vmatprep.mubr.f32.mxu0 0.0
      %3022 = vmatmul.mubr.f32.gmra.mrb[0].mxu0 %v2790
      %v3023 = vpop.f32.mrb[0].mxu0
      %v3024 = vadd.f32 0.0, %v3023
      %v3025 = vpop.f32.mrb[0].mxu0
      %3026 = vmatprep.mubr.f32.mxu0 0.0
      %3027 = vmatmul.mubr.f32.gmra.mrb[0].mxu0 %v2793
      %v3028 = vpop.f32.mrb[0].mxu0
      %v3029 = vadd.f32 0.0, %v3028
      %v3030 = vpop.f32.mrb[0].mxu0
      %3031 = vmatprep.mubr.f32.mxu0 0.0
      %3032 = vmatmul.mubr.f32.gmra.mrb[0].mxu0 %v2796
      %v3033 = vpop.f32.mrb[0].mxu0
      %v3034 = vadd.f32 0.0, %v3033
      %v3035 = vpop.f32.mrb[0].mxu0
      %3036 = vmatprep.mubr.f32.mxu0 0.0
      %3037 = vmatmul.mubr.f32.gmra.mrb[0].mxu0 %v2799
      %v3038 = vpop.f32.mrb[0].mxu0
      %v3039 = vadd.f32 0.0, %v3038
      %v3040 = vpop.f32.mrb[0].mxu0
      %3041 = vmatprep.mubr.f32.mxu0 0.0
      %3042 = vmatmul.mubr.f32.gmra.mrb[0].mxu0 %v2802
      %v3043 = vpop.f32.mrb[0].mxu0
      %v3044 = vadd.f32 0.0, %v3043
      %v3045 = vpop.f32.mrb[0].mxu0
      %3046 = vmatprep.mubr.f32.mxu0 0.0
      %3047 = vmatmul.mubr.f32.gmra.mrb[0].mxu0 %v2805
      %v3048 = vpop.f32.mrb[0].mxu0
      %v3049 = vadd.f32 0.0, %v3048
      %v3050 = vpop.f32.mrb[0].mxu0
      %3051 = vdwg.mxu0
      %v3052 = vadd.f32 %v2625, %v2874
      %v3053 = vadd.f32 %v2626, %v2879
      %v3054 = vadd.f32 %v2627, %v2884
      %v3055 = vadd.f32 %v2628, %v2889
      %v3056 = vadd.f32 %v2629, %v2894
      %v3057 = vadd.f32 %v2630, %v2899
      %v3058 = vadd.f32 %v2631, %v2904
      %v3059 = vadd.f32 %v2632, %v2909
      %v3060 = vadd.f32 %v2633, %v2914
      %v3061 = vadd.f32 %v2634, %v2919
      %v3062 = vadd.f32 %v2635, %v2924
      %v3063 = vadd.f32 %v2636, %v2929
      %v3064 = vadd.f32 %v2637, %v2934
      %v3065 = vadd.f32 %v2638, %v2939
      %v3066 = vadd.f32 %v2639, %v2944
      %v3067 = vadd.f32 %v2640, %v2949
      %v3068 = vadd.f32 %v2641, %v2954
      %v3069 = vadd.f32 %v2642, %v2959
      %v3070 = vadd.f32 %v2643, %v2964
      %v3071 = vadd.f32 %v2644, %v2969
      %v3072 = vadd.f32 %v2645, %v2974
      %v3073 = vadd.f32 %v2646, %v2979
      %v3074 = vadd.f32 %v2647, %v2984
      %v3075 = vadd.f32 %v2648, %v2989
      %v3076 = vadd.f32 %v2649, %v2994
      %v3077 = vadd.f32 %v2650, %v2999
      %v3078 = vadd.f32 %v2651, %v3004
      %v3079 = vadd.f32 %v2652, %v3009
      %v3080 = vadd.f32 %v2653, %v3014
      %v3081 = vadd.f32 %v2654, %v3019
      %v3082 = vadd.f32 %v2655, %v3024
      %v3083 = vadd.f32 %v2656, %v3029
      %v3084 = vadd.f32 %v2657, %v3034
      %v3085 = vadd.f32 %v2658, %v3039
      %v3086 = vadd.f32 %v2659, %v3044
      %v3087 = vadd.f32 %v2660, %v3049
      %v3088 = vld [vmem:[%s165 + $0x25] sm:$0xff]
      %v3089 = vld [vmem:[%s165 + $0x2d] sm:$0xff]
      %v3090 = vld [vmem:[%s165 + $0x35] sm:$0xff]
      %v3091 = vld [vmem:[%s165 + $0x3d] sm:$0xff]
      %v3092 = vld [vmem:[%s165 + $0x45] sm:$0xff]
      %v3093 = vld [vmem:[%s165 + $0x4d] sm:$0xff]
      %v3094 = vld [vmem:[%s165 + $0x55] sm:$0xff]
      %v3095 = vld [vmem:[%s165 + $0x5d] sm:$0xff]
      %v3096 = vld [vmem:[%s165 + $0x65] sm:$0xff]
      %v3097 = vld [vmem:[%s165 + $0x6d] sm:$0xff]
      %v3098 = vld [vmem:[%s165 + $0x75] sm:$0xff]
      %v3099 = vld [vmem:[%s165 + $0x7d] sm:$0xff]
      %v3100 = vld [vmem:[%s165 + $0x85] sm:$0xff]
      %v3101 = vld [vmem:[%s165 + $0x8d] sm:$0xff]
      %v3102 = vld [vmem:[%s165 + $0x95] sm:$0xff]
      %v3103 = vld [vmem:[%s165 + $0x9d] sm:$0xff]
      %v3104 = vld [vmem:[%s165 + $0xa5] sm:$0xff]
      %v3105 = vld [vmem:[%s165 + $0xad] sm:$0xff]
      %v3106 = vld [vmem:[%s165 + $0xb5] sm:$0xff]
      %v3107 = vld [vmem:[%s165 + $0xbd] sm:$0xff]
      %v3108 = vld [vmem:[%s165 + $0xc5] sm:$0xff]
      %v3109 = vld [vmem:[%s165 + $0xcd] sm:$0xff]
      %v3110 = vld [vmem:[%s165 + $0xd5] sm:$0xff]
      %v3111 = vld [vmem:[%s165 + $0xdd] sm:$0xff]
      %v3112 = vld [vmem:[%s165 + $0xe5] sm:$0xff]
      %v3113 = vld [vmem:[%s165 + $0xed] sm:$0xff]
      %v3114 = vld [vmem:[%s165 + $0xf5] sm:$0xff]
      %v3115 = vld [vmem:[%s165 + $0xfd] sm:$0xff]
      %v3116 = vld [vmem:[%s165 + $0x105] sm:$0xff]
      %v3117 = vld [vmem:[%s165 + $0x10d] sm:$0xff]
      %v3118 = vld [vmem:[%s165 + $0x115] sm:$0xff]
      %v3119 = vld [vmem:[%s165 + $0x11d] sm:$0xff]
      %v3120 = vld [vmem:[%s165 + $0x125] sm:$0xff]
      %v3121 = vld [vmem:[%s165 + $0x12d] sm:$0xff]
      %v3122 = vld [vmem:[%s165 + $0x135] sm:$0xff]
      %v3123 = vld [vmem:[%s165 + $0x13d] sm:$0xff]
      %s3124 = scalar_lea.vmem %s1, 56
      %v3125 = vld [vmem:[%s3124] sm:$0xff]
      %v3127 = vsel %vm246, %v3088, 0
      %v3130 = vsel %vm246, %v3089, 0
      %v3133 = vsel %vm246, %v3090, 0
      %v3136 = vsel %vm246, %v3091, 0
      %v3139 = vsel %vm246, %v3092, 0
      %v3142 = vsel %vm246, %v3093, 0
      %v3145 = vsel %vm246, %v3094, 0
      %v3148 = vsel %vm246, %v3095, 0
      %v3151 = vsel %vm246, %v3096, 0
      %v3154 = vsel %vm246, %v3097, 0
      %v3157 = vsel %vm246, %v3098, 0
      %v3160 = vsel %vm246, %v3099, 0
      %v3163 = vsel %vm246, %v3100, 0
      %v3166 = vsel %vm246, %v3101, 0
      %v3169 = vsel %vm246, %v3102, 0
      %v3172 = vsel %vm246, %v3103, 0
      %v3175 = vsel %vm246, %v3104, 0
      %v3178 = vsel %vm246, %v3105, 0
      %v3181 = vsel %vm246, %v3106, 0
      %v3184 = vsel %vm246, %v3107, 0
      %v3187 = vsel %vm246, %v3108, 0
      %v3190 = vsel %vm246, %v3109, 0
      %v3193 = vsel %vm246, %v3110, 0
      %v3196 = vsel %vm246, %v3111, 0
      %v3199 = vsel %vm246, %v3112, 0
      %v3202 = vsel %vm246, %v3113, 0
      %v3205 = vsel %vm246, %v3114, 0
      %v3208 = vsel %vm246, %v3115, 0
      %v3211 = vsel %vm246, %v3116, 0
      %v3214 = vsel %vm246, %v3117, 0
      %v3217 = vsel %vm246, %v3118, 0
      %v3220 = vsel %vm246, %v3119, 0
      %v3223 = vsel %vm246, %v3120, 0
      %v3226 = vsel %vm246, %v3121, 0
      %v3229 = vsel %vm246, %v3122, 0
      %v3232 = vsel %vm246, %v3123, 0
      %3234 = vmatprep.subr.mxu0 0.0
      %3235 = vmatpush1.msra.mxu0 %v3125
      %3236 = vmatprep.subr.mxu0 0.0
      %3237 = vmatpush1.msra.mxu0 0.0
      %3238 = vmatprep.subr.mxu0 0.0
      %3239 = vmatpush1.msra.mxu0 0.0
      %3240 = vmatprep.subr.mxu0 0.0
      %3241 = vmatpush1.msra.mxu0 0.0
      %3242 = vmatprep.subr.mxu0 0.0
      %3243 = vmatpush1.msra.mxu0 0.0
      %3244 = vmatprep.subr.mxu0 0.0
      %3245 = vmatpush1.msra.mxu0 0.0
      %3246 = vmatprep.subr.mxu0 0.0
      %3247 = vmatpush1.msra.mxu0 0.0
      %3248 = vmatprep.subr.mxu0 0.0
      %3249 = vmatpush1.msra.mxu0 0.0
      %3250 = vmatprep.subr.mxu0 0.0
      %3251 = vmatpush1.msra.mxu0 0.0
      %3252 = vmatprep.subr.mxu0 0.0
      %3253 = vmatpush1.msra.mxu0 0.0
      %3254 = vmatprep.subr.mxu0 0.0
      %3255 = vmatpush1.msra.mxu0 0.0
      %3256 = vmatprep.subr.mxu0 0.0
      %3257 = vmatpush1.msra.mxu0 0.0
      %3258 = vmatprep.subr.mxu0 0.0
      %3259 = vmatpush1.msra.mxu0 0.0
      %3260 = vmatprep.subr.mxu0 0.0
      %3261 = vmatpush1.msra.mxu0 0.0
      %3262 = vmatprep.subr.mxu0 0.0
      %3263 = vmatpush1.msra.mxu0 0.0
      %3264 = vmatprep.subr.mxu0 0.0
      %3265 = vmatpush1.msra.mxu0 0.0
      %3266 = vmatprep.subr.mxu0 0.0
      %3267 = vmatpush1.msra.mxu0 0.0
      %3268 = vmatprep.subr.mxu0 0.0
      %3269 = vmatpush1.msra.mxu0 0.0
      %3270 = vmatprep.subr.mxu0 0.0
      %3271 = vmatpush1.msra.mxu0 0.0
      %3272 = vmatprep.subr.mxu0 0.0
      %3273 = vmatpush1.msra.mxu0 0.0
      %3274 = vmatprep.subr.mxu0 0.0
      %3275 = vmatpush1.msra.mxu0 0.0
      %3276 = vmatprep.subr.mxu0 0.0
      %3277 = vmatpush1.msra.mxu0 0.0
      %3278 = vmatprep.subr.mxu0 0.0
      %3279 = vmatpush1.msra.mxu0 0.0
      %3280 = vmatprep.subr.mxu0 0.0
      %3281 = vmatpush1.msra.mxu0 0.0
      %3282 = vmatprep.subr.mxu0 0.0
      %3283 = vmatpush1.msra.mxu0 0.0
      %3284 = vmatprep.subr.mxu0 0.0
      %3285 = vmatpush1.msra.mxu0 0.0
      %3286 = vmatprep.subr.mxu0 0.0
      %3287 = vmatpush1.msra.mxu0 0.0
      %3288 = vmatprep.subr.mxu0 0.0
      %3289 = vmatpush1.msra.mxu0 0.0
      %3290 = vmatprep.subr.mxu0 0.0
      %3291 = vmatpush1.msra.mxu0 0.0
      %3292 = vmatprep.subr.mxu0 0.0
      %3293 = vmatpush1.msra.mxu0 0.0
      %3294 = vmatprep.subr.mxu0 0.0
      %3295 = vmatpush1.msra.mxu0 0.0
      %3296 = vmatprep.subr.mxu0 0.0
      %3297 = vmatpush1.msra.mxu0 0.0
      %3298 = vmatprep.mubr.f32.mxu0 0.0
      %3299 = vmatmul.mubr.f32.gmra.mrb[0].mxu0 %v3127
      %v3300 = vpop.f32.mrb[0].mxu0
      %v3301 = vadd.f32 0.0, %v3300
      %v3302 = vpop.f32.mrb[0].mxu0
      %3303 = vmatprep.mubr.f32.mxu0 0.0
      %3304 = vmatmul.mubr.f32.gmra.mrb[0].mxu0 %v3130
      %v3305 = vpop.f32.mrb[0].mxu0
      %v3306 = vadd.f32 0.0, %v3305
      %v3307 = vpop.f32.mrb[0].mxu0
      %3308 = vmatprep.mubr.f32.mxu0 0.0
      %3309 = vmatmul.mubr.f32.gmra.mrb[0].mxu0 %v3133
      %v3310 = vpop.f32.mrb[0].mxu0
      %v3311 = vadd.f32 0.0, %v3310
      %v3312 = vpop.f32.mrb[0].mxu0
      %3313 = vmatprep.mubr.f32.mxu0 0.0
      %3314 = vmatmul.mubr.f32.gmra.mrb[0].mxu0 %v3136
      %v3315 = vpop.f32.mrb[0].mxu0
      %v3316 = vadd.f32 0.0, %v3315
      %v3317 = vpop.f32.mrb[0].mxu0
      %3318 = vmatprep.mubr.f32.mxu0 0.0
      %3319 = vmatmul.mubr.f32.gmra.mrb[0].mxu0 %v3139
      %v3320 = vpop.f32.mrb[0].mxu0
      %v3321 = vadd.f32 0.0, %v3320
      %v3322 = vpop.f32.mrb[0].mxu0
      %3323 = vmatprep.mubr.f32.mxu0 0.0
      %3324 = vmatmul.mubr.f32.gmra.mrb[0].mxu0 %v3142
      %v3325 = vpop.f32.mrb[0].mxu0
      %v3326 = vadd.f32 0.0, %v3325
      %v3327 = vpop.f32.mrb[0].mxu0
      %3328 = vmatprep.mubr.f32.mxu0 0.0
      %3329 = vmatmul.mubr.f32.gmra.mrb[0].mxu0 %v3145
      %v3330 = vpop.f32.mrb[0].mxu0
      %v3331 = vadd.f32 0.0, %v3330
      %v3332 = vpop.f32.mrb[0].mxu0
      %3333 = vmatprep.mubr.f32.mxu0 0.0
      %3334 = vmatmul.mubr.f32.gmra.mrb[0].mxu0 %v3148
      %v3335 = vpop.f32.mrb[0].mxu0
      %v3336 = vadd.f32 0.0, %v3335
      %v3337 = vpop.f32.mrb[0].mxu0
      %3338 = vmatprep.mubr.f32.mxu0 0.0
      %3339 = vmatmul.mubr.f32.gmra.mrb[0].mxu0 %v3151
      %v3340 = vpop.f32.mrb[0].mxu0
      %v3341 = vadd.f32 0.0, %v3340
      %v3342 = vpop.f32.mrb[0].mxu0
      %3343 = vmatprep.mubr.f32.mxu0 0.0
      %3344 = vmatmul.mubr.f32.gmra.mrb[0].mxu0 %v3154
      %v3345 = vpop.f32.mrb[0].mxu0
      %v3346 = vadd.f32 0.0, %v3345
      %v3347 = vpop.f32.mrb[0].mxu0
      %3348 = vmatprep.mubr.f32.mxu0 0.0
      %3349 = vmatmul.mubr.f32.gmra.mrb[0].mxu0 %v3157
      %v3350 = vpop.f32.mrb[0].mxu0
      %v3351 = vadd.f32 0.0, %v3350
      %v3352 = vpop.f32.mrb[0].mxu0
      %3353 = vmatprep.mubr.f32.mxu0 0.0
      %3354 = vmatmul.mubr.f32.gmra.mrb[0].mxu0 %v3160
      %v3355 = vpop.f32.mrb[0].mxu0
      %v3356 = vadd.f32 0.0, %v3355
      %v3357 = vpop.f32.mrb[0].mxu0
      %3358 = vmatprep.mubr.f32.mxu0 0.0
      %3359 = vmatmul.mubr.f32.gmra.mrb[0].mxu0 %v3163
      %v3360 = vpop.f32.mrb[0].mxu0
      %v3361 = vadd.f32 0.0, %v3360
      %v3362 = vpop.f32.mrb[0].mxu0
      %3363 = vmatprep.mubr.f32.mxu0 0.0
      %3364 = vmatmul.mubr.f32.gmra.mrb[0].mxu0 %v3166
      %v3365 = vpop.f32.mrb[0].mxu0
      %v3366 = vadd.f32 0.0, %v3365
      %v3367 = vpop.f32.mrb[0].mxu0
      %3368 = vmatprep.mubr.f32.mxu0 0.0
      %3369 = vmatmul.mubr.f32.gmra.mrb[0].mxu0 %v3169
      %v3370 = vpop.f32.mrb[0].mxu0
      %v3371 = vadd.f32 0.0, %v3370
      %v3372 = vpop.f32.mrb[0].mxu0
      %3373 = vmatprep.mubr.f32.mxu0 0.0
      %3374 = vmatmul.mubr.f32.gmra.mrb[0].mxu0 %v3172
      %v3375 = vpop.f32.mrb[0].mxu0
      %v3376 = vadd.f32 0.0, %v3375
      %v3377 = vpop.f32.mrb[0].mxu0
      %3378 = vmatprep.mubr.f32.mxu0 0.0
      %3379 = vmatmul.mubr.f32.gmra.mrb[0].mxu0 %v3175
      %v3380 = vpop.f32.mrb[0].mxu0
      %v3381 = vadd.f32 0.0, %v3380
      %v3382 = vpop.f32.mrb[0].mxu0
      %3383 = vmatprep.mubr.f32.mxu0 0.0
      %3384 = vmatmul.mubr.f32.gmra.mrb[0].mxu0 %v3178
      %v3385 = vpop.f32.mrb[0].mxu0
      %v3386 = vadd.f32 0.0, %v3385
      %v3387 = vpop.f32.mrb[0].mxu0
      %3388 = vmatprep.mubr.f32.mxu0 0.0
      %3389 = vmatmul.mubr.f32.gmra.mrb[0].mxu0 %v3181
      %v3390 = vpop.f32.mrb[0].mxu0
      %v3391 = vadd.f32 0.0, %v3390
      %v3392 = vpop.f32.mrb[0].mxu0
      %3393 = vmatprep.mubr.f32.mxu0 0.0
      %3394 = vmatmul.mubr.f32.gmra.mrb[0].mxu0 %v3184
      %v3395 = vpop.f32.mrb[0].mxu0
      %v3396 = vadd.f32 0.0, %v3395
      %v3397 = vpop.f32.mrb[0].mxu0
      %3398 = vmatprep.mubr.f32.mxu0 0.0
      %3399 = vmatmul.mubr.f32.gmra.mrb[0].mxu0 %v3187
      %v3400 = vpop.f32.mrb[0].mxu0
      %v3401 = vadd.f32 0.0, %v3400
      %v3402 = vpop.f32.mrb[0].mxu0
      %3403 = vmatprep.mubr.f32.mxu0 0.0
      %3404 = vmatmul.mubr.f32.gmra.mrb[0].mxu0 %v3190
      %v3405 = vpop.f32.mrb[0].mxu0
      %v3406 = vadd.f32 0.0, %v3405
      %v3407 = vpop.f32.mrb[0].mxu0
      %3408 = vmatprep.mubr.f32.mxu0 0.0
      %3409 = vmatmul.mubr.f32.gmra.mrb[0].mxu0 %v3193
      %v3410 = vpop.f32.mrb[0].mxu0
      %v3411 = vadd.f32 0.0, %v3410
      %v3412 = vpop.f32.mrb[0].mxu0
      %3413 = vmatprep.mubr.f32.mxu0 0.0
      %3414 = vmatmul.mubr.f32.gmra.mrb[0].mxu0 %v3196
      %v3415 = vpop.f32.mrb[0].mxu0
      %v3416 = vadd.f32 0.0, %v3415
      %v3417 = vpop.f32.mrb[0].mxu0
      %3418 = vmatprep.mubr.f32.mxu0 0.0
      %3419 = vmatmul.mubr.f32.gmra.mrb[0].mxu0 %v3199
      %v3420 = vpop.f32.mrb[0].mxu0
      %v3421 = vadd.f32 0.0, %v3420
      %v3422 = vpop.f32.mrb[0].mxu0
      %3423 = vmatprep.mubr.f32.mxu0 0.0
      %3424 = vmatmul.mubr.f32.gmra.mrb[0].mxu0 %v3202
      %v3425 = vpop.f32.mrb[0].mxu0
      %v3426 = vadd.f32 0.0, %v3425
      %v3427 = vpop.f32.mrb[0].mxu0
      %3428 = vmatprep.mubr.f32.mxu0 0.0
      %3429 = vmatmul.mubr.f32.gmra.mrb[0].mxu0 %v3205
      %v3430 = vpop.f32.mrb[0].mxu0
      %v3431 = vadd.f32 0.0, %v3430
      %v3432 = vpop.f32.mrb[0].mxu0
      %3433 = vmatprep.mubr.f32.mxu0 0.0
      %3434 = vmatmul.mubr.f32.gmra.mrb[0].mxu0 %v3208
      %v3435 = vpop.f32.mrb[0].mxu0
      %v3436 = vadd.f32 0.0, %v3435
      %v3437 = vpop.f32.mrb[0].mxu0
      %3438 = vmatprep.mubr.f32.mxu0 0.0
      %3439 = vmatmul.mubr.f32.gmra.mrb[0].mxu0 %v3211
      %v3440 = vpop.f32.mrb[0].mxu0
      %v3441 = vadd.f32 0.0, %v3440
      %v3442 = vpop.f32.mrb[0].mxu0
      %3443 = vmatprep.mubr.f32.mxu0 0.0
      %3444 = vmatmul.mubr.f32.gmra.mrb[0].mxu0 %v3214
      %v3445 = vpop.f32.mrb[0].mxu0
      %v3446 = vadd.f32 0.0, %v3445
      %v3447 = vpop.f32.mrb[0].mxu0
      %3448 = vmatprep.mubr.f32.mxu0 0.0
      %3449 = vmatmul.mubr.f32.gmra.mrb[0].mxu0 %v3217
      %v3450 = vpop.f32.mrb[0].mxu0
      %v3451 = vadd.f32 0.0, %v3450
      %v3452 = vpop.f32.mrb[0].mxu0
      %3453 = vmatprep.mubr.f32.mxu0 0.0
      %3454 = vmatmul.mubr.f32.gmra.mrb[0].mxu0 %v3220
      %v3455 = vpop.f32.mrb[0].mxu0
      %v3456 = vadd.f32 0.0, %v3455
      %v3457 = vpop.f32.mrb[0].mxu0
      %3458 = vmatprep.mubr.f32.mxu0 0.0
      %3459 = vmatmul.mubr.f32.gmra.mrb[0].mxu0 %v3223
      %v3460 = vpop.f32.mrb[0].mxu0
      %v3461 = vadd.f32 0.0, %v3460
      %v3462 = vpop.f32.mrb[0].mxu0
      %3463 = vmatprep.mubr.f32.mxu0 0.0
      %3464 = vmatmul.mubr.f32.gmra.mrb[0].mxu0 %v3226
      %v3465 = vpop.f32.mrb[0].mxu0
      %v3466 = vadd.f32 0.0, %v3465
      %v3467 = vpop.f32.mrb[0].mxu0
      %3468 = vmatprep.mubr.f32.mxu0 0.0
      %3469 = vmatmul.mubr.f32.gmra.mrb[0].mxu0 %v3229
      %v3470 = vpop.f32.mrb[0].mxu0
      %v3471 = vadd.f32 0.0, %v3470
      %v3472 = vpop.f32.mrb[0].mxu0
      %3473 = vmatprep.mubr.f32.mxu0 0.0
      %3474 = vmatmul.mubr.f32.gmra.mrb[0].mxu0 %v3232
      %v3475 = vpop.f32.mrb[0].mxu0
      %v3476 = vadd.f32 0.0, %v3475
      %v3477 = vpop.f32.mrb[0].mxu0
      %3478 = vdwg.mxu0
      %v3479 = vadd.f32 %v3052, %v3301
      %v3480 = vadd.f32 %v3053, %v3306
      %v3481 = vadd.f32 %v3054, %v3311
      %v3482 = vadd.f32 %v3055, %v3316
      %v3483 = vadd.f32 %v3056, %v3321
      %v3484 = vadd.f32 %v3057, %v3326
      %v3485 = vadd.f32 %v3058, %v3331
      %v3486 = vadd.f32 %v3059, %v3336
      %v3487 = vadd.f32 %v3060, %v3341
      %v3488 = vadd.f32 %v3061, %v3346
      %v3489 = vadd.f32 %v3062, %v3351
      %v3490 = vadd.f32 %v3063, %v3356
      %v3491 = vadd.f32 %v3064, %v3361
      %v3492 = vadd.f32 %v3065, %v3366
      %v3493 = vadd.f32 %v3066, %v3371
      %v3494 = vadd.f32 %v3067, %v3376
      %v3495 = vadd.f32 %v3068, %v3381
      %v3496 = vadd.f32 %v3069, %v3386
      %v3497 = vadd.f32 %v3070, %v3391
      %v3498 = vadd.f32 %v3071, %v3396
      %v3499 = vadd.f32 %v3072, %v3401
      %v3500 = vadd.f32 %v3073, %v3406
      %v3501 = vadd.f32 %v3074, %v3411
      %v3502 = vadd.f32 %v3075, %v3416
      %v3503 = vadd.f32 %v3076, %v3421
      %v3504 = vadd.f32 %v3077, %v3426
      %v3505 = vadd.f32 %v3078, %v3431
      %v3506 = vadd.f32 %v3079, %v3436
      %v3507 = vadd.f32 %v3080, %v3441
      %v3508 = vadd.f32 %v3081, %v3446
      %v3509 = vadd.f32 %v3082, %v3451
      %v3510 = vadd.f32 %v3083, %v3456
      %v3511 = vadd.f32 %v3084, %v3461
      %v3512 = vadd.f32 %v3085, %v3466
      %v3513 = vadd.f32 %v3086, %v3471
      %v3514 = vadd.f32 %v3087, %v3476
      %v3515 = vld [vmem:[%s165 + $0x26] sm:$0xff]
      %v3516 = vld [vmem:[%s165 + $0x2e] sm:$0xff]
      %v3517 = vld [vmem:[%s165 + $0x36] sm:$0xff]
      %v3518 = vld [vmem:[%s165 + $0x3e] sm:$0xff]
      %v3519 = vld [vmem:[%s165 + $0x46] sm:$0xff]
      %v3520 = vld [vmem:[%s165 + $0x4e] sm:$0xff]
      %v3521 = vld [vmem:[%s165 + $0x56] sm:$0xff]
      %v3522 = vld [vmem:[%s165 + $0x5e] sm:$0xff]
      %v3523 = vld [vmem:[%s165 + $0x66] sm:$0xff]
      %v3524 = vld [vmem:[%s165 + $0x6e] sm:$0xff]
      %v3525 = vld [vmem:[%s165 + $0x76] sm:$0xff]
      %v3526 = vld [vmem:[%s165 + $0x7e] sm:$0xff]
      %v3527 = vld [vmem:[%s165 + $0x86] sm:$0xff]
      %v3528 = vld [vmem:[%s165 + $0x8e] sm:$0xff]
      %v3529 = vld [vmem:[%s165 + $0x96] sm:$0xff]
      %v3530 = vld [vmem:[%s165 + $0x9e] sm:$0xff]
      %v3531 = vld [vmem:[%s165 + $0xa6] sm:$0xff]
      %v3532 = vld [vmem:[%s165 + $0xae] sm:$0xff]
      %v3533 = vld [vmem:[%s165 + $0xb6] sm:$0xff]
      %v3534 = vld [vmem:[%s165 + $0xbe] sm:$0xff]
      %v3535 = vld [vmem:[%s165 + $0xc6] sm:$0xff]
      %v3536 = vld [vmem:[%s165 + $0xce] sm:$0xff]
      %v3537 = vld [vmem:[%s165 + $0xd6] sm:$0xff]
      %v3538 = vld [vmem:[%s165 + $0xde] sm:$0xff]
      %v3539 = vld [vmem:[%s165 + $0xe6] sm:$0xff]
      %v3540 = vld [vmem:[%s165 + $0xee] sm:$0xff]
      %v3541 = vld [vmem:[%s165 + $0xf6] sm:$0xff]
      %v3542 = vld [vmem:[%s165 + $0xfe] sm:$0xff]
      %v3543 = vld [vmem:[%s165 + $0x106] sm:$0xff]
      %v3544 = vld [vmem:[%s165 + $0x10e] sm:$0xff]
      %v3545 = vld [vmem:[%s165 + $0x116] sm:$0xff]
      %v3546 = vld [vmem:[%s165 + $0x11e] sm:$0xff]
      %v3547 = vld [vmem:[%s165 + $0x126] sm:$0xff]
      %v3548 = vld [vmem:[%s165 + $0x12e] sm:$0xff]
      %v3549 = vld [vmem:[%s165 + $0x136] sm:$0xff]
      %v3550 = vld [vmem:[%s165 + $0x13e] sm:$0xff]
      %s3551 = scalar_lea.vmem %s1, 64
      %v3552 = vld [vmem:[%s3551] sm:$0xff]
      %v3554 = vsel %vm246, %v3515, 0
      %v3557 = vsel %vm246, %v3516, 0
      %v3560 = vsel %vm246, %v3517, 0
      %v3563 = vsel %vm246, %v3518, 0
      %v3566 = vsel %vm246, %v3519, 0
      %v3569 = vsel %vm246, %v3520, 0
      %v3572 = vsel %vm246, %v3521, 0
      %v3575 = vsel %vm246, %v3522, 0
      %v3578 = vsel %vm246, %v3523, 0
      %v3581 = vsel %vm246, %v3524, 0
      %v3584 = vsel %vm246, %v3525, 0
      %v3587 = vsel %vm246, %v3526, 0
      %v3590 = vsel %vm246, %v3527, 0
      %v3593 = vsel %vm246, %v3528, 0
      %v3596 = vsel %vm246, %v3529, 0
      %v3599 = vsel %vm246, %v3530, 0
      %v3602 = vsel %vm246, %v3531, 0
      %v3605 = vsel %vm246, %v3532, 0
      %v3608 = vsel %vm246, %v3533, 0
      %v3611 = vsel %vm246, %v3534, 0
      %v3614 = vsel %vm246, %v3535, 0
      %v3617 = vsel %vm246, %v3536, 0
      %v3620 = vsel %vm246, %v3537, 0
      %v3623 = vsel %vm246, %v3538, 0
      %v3626 = vsel %vm246, %v3539, 0
      %v3629 = vsel %vm246, %v3540, 0
      %v3632 = vsel %vm246, %v3541, 0
      %v3635 = vsel %vm246, %v3542, 0
      %v3638 = vsel %vm246, %v3543, 0
      %v3641 = vsel %vm246, %v3544, 0
      %v3644 = vsel %vm246, %v3545, 0
      %v3647 = vsel %vm246, %v3546, 0
      %v3650 = vsel %vm246, %v3547, 0
      %v3653 = vsel %vm246, %v3548, 0
      %v3656 = vsel %vm246, %v3549, 0
      %v3659 = vsel %vm246, %v3550, 0
      %3661 = vmatprep.subr.mxu0 0.0
      %3662 = vmatpush1.msra.mxu0 %v3552
      %3663 = vmatprep.subr.mxu0 0.0
      %3664 = vmatpush1.msra.mxu0 0.0
      %3665 = vmatprep.subr.mxu0 0.0
      %3666 = vmatpush1.msra.mxu0 0.0
      %3667 = vmatprep.subr.mxu0 0.0
      %3668 = vmatpush1.msra.mxu0 0.0
      %3669 = vmatprep.subr.mxu0 0.0
      %3670 = vmatpush1.msra.mxu0 0.0
      %3671 = vmatprep.subr.mxu0 0.0
      %3672 = vmatpush1.msra.mxu0 0.0
      %3673 = vmatprep.subr.mxu0 0.0
      %3674 = vmatpush1.msra.mxu0 0.0
      %3675 = vmatprep.subr.mxu0 0.0
      %3676 = vmatpush1.msra.mxu0 0.0
      %3677 = vmatprep.subr.mxu0 0.0
      %3678 = vmatpush1.msra.mxu0 0.0
      %3679 = vmatprep.subr.mxu0 0.0
      %3680 = vmatpush1.msra.mxu0 0.0
      %3681 = vmatprep.subr.mxu0 0.0
      %3682 = vmatpush1.msra.mxu0 0.0
      %3683 = vmatprep.subr.mxu0 0.0
      %3684 = vmatpush1.msra.mxu0 0.0
      %3685 = vmatprep.subr.mxu0 0.0
      %3686 = vmatpush1.msra.mxu0 0.0
      %3687 = vmatprep.subr.mxu0 0.0
      %3688 = vmatpush1.msra.mxu0 0.0
      %3689 = vmatprep.subr.mxu0 0.0
      %3690 = vmatpush1.msra.mxu0 0.0
      %3691 = vmatprep.subr.mxu0 0.0
      %3692 = vmatpush1.msra.mxu0 0.0
      %3693 = vmatprep.subr.mxu0 0.0
      %3694 = vmatpush1.msra.mxu0 0.0
      %3695 = vmatprep.subr.mxu0 0.0
      %3696 = vmatpush1.msra.mxu0 0.0
      %3697 = vmatprep.subr.mxu0 0.0
      %3698 = vmatpush1.msra.mxu0 0.0
      %3699 = vmatprep.subr.mxu0 0.0
      %3700 = vmatpush1.msra.mxu0 0.0
      %3701 = vmatprep.subr.mxu0 0.0
      %3702 = vmatpush1.msra.mxu0 0.0
      %3703 = vmatprep.subr.mxu0 0.0
      %3704 = vmatpush1.msra.mxu0 0.0
      %3705 = vmatprep.subr.mxu0 0.0
      %3706 = vmatpush1.msra.mxu0 0.0
      %3707 = vmatprep.subr.mxu0 0.0
      %3708 = vmatpush1.msra.mxu0 0.0
      %3709 = vmatprep.subr.mxu0 0.0
      %3710 = vmatpush1.msra.mxu0 0.0
      %3711 = vmatprep.subr.mxu0 0.0
      %3712 = vmatpush1.msra.mxu0 0.0
      %3713 = vmatprep.subr.mxu0 0.0
      %3714 = vmatpush1.msra.mxu0 0.0
      %3715 = vmatprep.subr.mxu0 0.0
      %3716 = vmatpush1.msra.mxu0 0.0
      %3717 = vmatprep.subr.mxu0 0.0
      %3718 = vmatpush1.msra.mxu0 0.0
      %3719 = vmatprep.subr.mxu0 0.0
      %3720 = vmatpush1.msra.mxu0 0.0
      %3721 = vmatprep.subr.mxu0 0.0
      %3722 = vmatpush1.msra.mxu0 0.0
      %3723 = vmatprep.subr.mxu0 0.0
      %3724 = vmatpush1.msra.mxu0 0.0
      %3725 = vmatprep.mubr.f32.mxu0 0.0
      %3726 = vmatmul.mubr.f32.gmra.mrb[0].mxu0 %v3554
      %v3727 = vpop.f32.mrb[0].mxu0
      %v3728 = vadd.f32 0.0, %v3727
      %v3729 = vpop.f32.mrb[0].mxu0
      %3730 = vmatprep.mubr.f32.mxu0 0.0
      %3731 = vmatmul.mubr.f32.gmra.mrb[0].mxu0 %v3557
      %v3732 = vpop.f32.mrb[0].mxu0
      %v3733 = vadd.f32 0.0, %v3732
      %v3734 = vpop.f32.mrb[0].mxu0
      %3735 = vmatprep.mubr.f32.mxu0 0.0
      %3736 = vmatmul.mubr.f32.gmra.mrb[0].mxu0 %v3560
      %v3737 = vpop.f32.mrb[0].mxu0
      %v3738 = vadd.f32 0.0, %v3737
      %v3739 = vpop.f32.mrb[0].mxu0
      %3740 = vmatprep.mubr.f32.mxu0 0.0
      %3741 = vmatmul.mubr.f32.gmra.mrb[0].mxu0 %v3563
      %v3742 = vpop.f32.mrb[0].mxu0
      %v3743 = vadd.f32 0.0, %v3742
      %v3744 = vpop.f32.mrb[0].mxu0
      %3745 = vmatprep.mubr.f32.mxu0 0.0
      %3746 = vmatmul.mubr.f32.gmra.mrb[0].mxu0 %v3566
      %v3747 = vpop.f32.mrb[0].mxu0
      %v3748 = vadd.f32 0.0, %v3747
      %v3749 = vpop.f32.mrb[0].mxu0
      %3750 = vmatprep.mubr.f32.mxu0 0.0
      %3751 = vmatmul.mubr.f32.gmra.mrb[0].mxu0 %v3569
      %v3752 = vpop.f32.mrb[0].mxu0
      %v3753 = vadd.f32 0.0, %v3752
      %v3754 = vpop.f32.mrb[0].mxu0
      %3755 = vmatprep.mubr.f32.mxu0 0.0
      %3756 = vmatmul.mubr.f32.gmra.mrb[0].mxu0 %v3572
      %v3757 = vpop.f32.mrb[0].mxu0
      %v3758 = vadd.f32 0.0, %v3757
      %v3759 = vpop.f32.mrb[0].mxu0
      %3760 = vmatprep.mubr.f32.mxu0 0.0
      %3761 = vmatmul.mubr.f32.gmra.mrb[0].mxu0 %v3575
      %v3762 = vpop.f32.mrb[0].mxu0
      %v3763 = vadd.f32 0.0, %v3762
      %v3764 = vpop.f32.mrb[0].mxu0
      %3765 = vmatprep.mubr.f32.mxu0 0.0
      %3766 = vmatmul.mubr.f32.gmra.mrb[0].mxu0 %v3578
      %v3767 = vpop.f32.mrb[0].mxu0
      %v3768 = vadd.f32 0.0, %v3767
      %v3769 = vpop.f32.mrb[0].mxu0
      %3770 = vmatprep.mubr.f32.mxu0 0.0
      %3771 = vmatmul.mubr.f32.gmra.mrb[0].mxu0 %v3581
      %v3772 = vpop.f32.mrb[0].mxu0
      %v3773 = vadd.f32 0.0, %v3772
      %v3774 = vpop.f32.mrb[0].mxu0
      %3775 = vmatprep.mubr.f32.mxu0 0.0
      %3776 = vmatmul.mubr.f32.gmra.mrb[0].mxu0 %v3584
      %v3777 = vpop.f32.mrb[0].mxu0
      %v3778 = vadd.f32 0.0, %v3777
      %v3779 = vpop.f32.mrb[0].mxu0
      %3780 = vmatprep.mubr.f32.mxu0 0.0
      %3781 = vmatmul.mubr.f32.gmra.mrb[0].mxu0 %v3587
      %v3782 = vpop.f32.mrb[0].mxu0
      %v3783 = vadd.f32 0.0, %v3782
      %v3784 = vpop.f32.mrb[0].mxu0
      %3785 = vmatprep.mubr.f32.mxu0 0.0
      %3786 = vmatmul.mubr.f32.gmra.mrb[0].mxu0 %v3590
      %v3787 = vpop.f32.mrb[0].mxu0
      %v3788 = vadd.f32 0.0, %v3787
      %v3789 = vpop.f32.mrb[0].mxu0
      %3790 = vmatprep.mubr.f32.mxu0 0.0
      %3791 = vmatmul.mubr.f32.gmra.mrb[0].mxu0 %v3593
      %v3792 = vpop.f32.mrb[0].mxu0
      %v3793 = vadd.f32 0.0, %v3792
      %v3794 = vpop.f32.mrb[0].mxu0
      %3795 = vmatprep.mubr.f32.mxu0 0.0
      %3796 = vmatmul.mubr.f32.gmra.mrb[0].mxu0 %v3596
      %v3797 = vpop.f32.mrb[0].mxu0
      %v3798 = vadd.f32 0.0, %v3797
      %v3799 = vpop.f32.mrb[0].mxu0
      %3800 = vmatprep.mubr.f32.mxu0 0.0
      %3801 = vmatmul.mubr.f32.gmra.mrb[0].mxu0 %v3599
      %v3802 = vpop.f32.mrb[0].mxu0
      %v3803 = vadd.f32 0.0, %v3802
      %v3804 = vpop.f32.mrb[0].mxu0
      %3805 = vmatprep.mubr.f32.mxu0 0.0
      %3806 = vmatmul.mubr.f32.gmra.mrb[0].mxu0 %v3602
      %v3807 = vpop.f32.mrb[0].mxu0
      %v3808 = vadd.f32 0.0, %v3807
      %v3809 = vpop.f32.mrb[0].mxu0
      %3810 = vmatprep.mubr.f32.mxu0 0.0
      %3811 = vmatmul.mubr.f32.gmra.mrb[0].mxu0 %v3605
      %v3812 = vpop.f32.mrb[0].mxu0
      %v3813 = vadd.f32 0.0, %v3812
      %v3814 = vpop.f32.mrb[0].mxu0
      %3815 = vmatprep.mubr.f32.mxu0 0.0
      %3816 = vmatmul.mubr.f32.gmra.mrb[0].mxu0 %v3608
      %v3817 = vpop.f32.mrb[0].mxu0
      %v3818 = vadd.f32 0.0, %v3817
      %v3819 = vpop.f32.mrb[0].mxu0
      %3820 = vmatprep.mubr.f32.mxu0 0.0
      %3821 = vmatmul.mubr.f32.gmra.mrb[0].mxu0 %v3611
      %v3822 = vpop.f32.mrb[0].mxu0
      %v3823 = vadd.f32 0.0, %v3822
      %v3824 = vpop.f32.mrb[0].mxu0
      %3825 = vmatprep.mubr.f32.mxu0 0.0
      %3826 = vmatmul.mubr.f32.gmra.mrb[0].mxu0 %v3614
      %v3827 = vpop.f32.mrb[0].mxu0
      %v3828 = vadd.f32 0.0, %v3827
      %v3829 = vpop.f32.mrb[0].mxu0
      %3830 = vmatprep.mubr.f32.mxu0 0.0
      %3831 = vmatmul.mubr.f32.gmra.mrb[0].mxu0 %v3617
      %v3832 = vpop.f32.mrb[0].mxu0
      %v3833 = vadd.f32 0.0, %v3832
      %v3834 = vpop.f32.mrb[0].mxu0
      %3835 = vmatprep.mubr.f32.mxu0 0.0
      %3836 = vmatmul.mubr.f32.gmra.mrb[0].mxu0 %v3620
      %v3837 = vpop.f32.mrb[0].mxu0
      %v3838 = vadd.f32 0.0, %v3837
      %v3839 = vpop.f32.mrb[0].mxu0
      %3840 = vmatprep.mubr.f32.mxu0 0.0
      %3841 = vmatmul.mubr.f32.gmra.mrb[0].mxu0 %v3623
      %v3842 = vpop.f32.mrb[0].mxu0
      %v3843 = vadd.f32 0.0, %v3842
      %v3844 = vpop.f32.mrb[0].mxu0
      %3845 = vmatprep.mubr.f32.mxu0 0.0
      %3846 = vmatmul.mubr.f32.gmra.mrb[0].mxu0 %v3626
      %v3847 = vpop.f32.mrb[0].mxu0
      %v3848 = vadd.f32 0.0, %v3847
      %v3849 = vpop.f32.mrb[0].mxu0
      %3850 = vmatprep.mubr.f32.mxu0 0.0
      %3851 = vmatmul.mubr.f32.gmra.mrb[0].mxu0 %v3629
      %v3852 = vpop.f32.mrb[0].mxu0
      %v3853 = vadd.f32 0.0, %v3852
      %v3854 = vpop.f32.mrb[0].mxu0
      %3855 = vmatprep.mubr.f32.mxu0 0.0
      %3856 = vmatmul.mubr.f32.gmra.mrb[0].mxu0 %v3632
      %v3857 = vpop.f32.mrb[0].mxu0
      %v3858 = vadd.f32 0.0, %v3857
      %v3859 = vpop.f32.mrb[0].mxu0
      %3860 = vmatprep.mubr.f32.mxu0 0.0
      %3861 = vmatmul.mubr.f32.gmra.mrb[0].mxu0 %v3635
      %v3862 = vpop.f32.mrb[0].mxu0
      %v3863 = vadd.f32 0.0, %v3862
      %v3864 = vpop.f32.mrb[0].mxu0
      %3865 = vmatprep.mubr.f32.mxu0 0.0
      %3866 = vmatmul.mubr.f32.gmra.mrb[0].mxu0 %v3638
      %v3867 = vpop.f32.mrb[0].mxu0
      %v3868 = vadd.f32 0.0, %v3867
      %v3869 = vpop.f32.mrb[0].mxu0
      %3870 = vmatprep.mubr.f32.mxu0 0.0
      %3871 = vmatmul.mubr.f32.gmra.mrb[0].mxu0 %v3641
      %v3872 = vpop.f32.mrb[0].mxu0
      %v3873 = vadd.f32 0.0, %v3872
      %v3874 = vpop.f32.mrb[0].mxu0
      %3875 = vmatprep.mubr.f32.mxu0 0.0
      %3876 = vmatmul.mubr.f32.gmra.mrb[0].mxu0 %v3644
      %v3877 = vpop.f32.mrb[0].mxu0
      %v3878 = vadd.f32 0.0, %v3877
      %v3879 = vpop.f32.mrb[0].mxu0
      %3880 = vmatprep.mubr.f32.mxu0 0.0
      %3881 = vmatmul.mubr.f32.gmra.mrb[0].mxu0 %v3647
      %v3882 = vpop.f32.mrb[0].mxu0
      %v3883 = vadd.f32 0.0, %v3882
      %v3884 = vpop.f32.mrb[0].mxu0
      %3885 = vmatprep.mubr.f32.mxu0 0.0
      %3886 = vmatmul.mubr.f32.gmra.mrb[0].mxu0 %v3650
      %v3887 = vpop.f32.mrb[0].mxu0
      %v3888 = vadd.f32 0.0, %v3887
      %v3889 = vpop.f32.mrb[0].mxu0
      %3890 = vmatprep.mubr.f32.mxu0 0.0
      %3891 = vmatmul.mubr.f32.gmra.mrb[0].mxu0 %v3653
      %v3892 = vpop.f32.mrb[0].mxu0
      %v3893 = vadd.f32 0.0, %v3892
      %v3894 = vpop.f32.mrb[0].mxu0
      %3895 = vmatprep.mubr.f32.mxu0 0.0
      %3896 = vmatmul.mubr.f32.gmra.mrb[0].mxu0 %v3656
      %v3897 = vpop.f32.mrb[0].mxu0
      %v3898 = vadd.f32 0.0, %v3897
      %v3899 = vpop.f32.mrb[0].mxu0
      %3900 = vmatprep.mubr.f32.mxu0 0.0
      %3901 = vmatmul.mubr.f32.gmra.mrb[0].mxu0 %v3659
      %v3902 = vpop.f32.mrb[0].mxu0
      %v3903 = vadd.f32 0.0, %v3902
      %v3904 = vpop.f32.mrb[0].mxu0
      %3905 = vdwg.mxu0
      %v3906 = vadd.f32 %v3479, %v3728
      %v3907 = vadd.f32 %v3480, %v3733
      %v3908 = vadd.f32 %v3481, %v3738
      %v3909 = vadd.f32 %v3482, %v3743
      %v3910 = vadd.f32 %v3483, %v3748
      %v3911 = vadd.f32 %v3484, %v3753
      %v3912 = vadd.f32 %v3485, %v3758
      %v3913 = vadd.f32 %v3486, %v3763
      %v3914 = vadd.f32 %v3487, %v3768
      %v3915 = vadd.f32 %v3488, %v3773
      %v3916 = vadd.f32 %v3489, %v3778
      %v3917 = vadd.f32 %v3490, %v3783
      %v3918 = vadd.f32 %v3491, %v3788
      %v3919 = vadd.f32 %v3492, %v3793
      %v3920 = vadd.f32 %v3493, %v3798
      %v3921 = vadd.f32 %v3494, %v3803
      %v3922 = vadd.f32 %v3495, %v3808
      %v3923 = vadd.f32 %v3496, %v3813
      %v3924 = vadd.f32 %v3497, %v3818
      %v3925 = vadd.f32 %v3498, %v3823
      %v3926 = vadd.f32 %v3499, %v3828
      %v3927 = vadd.f32 %v3500, %v3833
      %v3928 = vadd.f32 %v3501, %v3838
      %v3929 = vadd.f32 %v3502, %v3843
      %v3930 = vadd.f32 %v3503, %v3848
      %v3931 = vadd.f32 %v3504, %v3853
      %v3932 = vadd.f32 %v3505, %v3858
      %v3933 = vadd.f32 %v3506, %v3863
      %v3934 = vadd.f32 %v3507, %v3868
      %v3935 = vadd.f32 %v3508, %v3873
      %v3936 = vadd.f32 %v3509, %v3878
      %v3937 = vadd.f32 %v3510, %v3883
      %v3938 = vadd.f32 %v3511, %v3888
      %v3939 = vadd.f32 %v3512, %v3893
      %v3940 = vadd.f32 %v3513, %v3898
      %v3941 = vadd.f32 %v3514, %v3903
      %v3942 = vld [vmem:[%s2] sm:$0x1]
      %v3944 = vlaneseq
      %v3945 = vshrl.u32 %v3944, 7
      %v3946 = vsub.s32 0, %v3945
      %v3947 = vrot.slane %v3942, %v3946
      %v3949 = vadd.f32 %v3906, %v3947
      %v3950 = vadd.f32 %v3907, %v3947
      %v3951 = vadd.f32 %v3908, %v3947
      %v3952 = vadd.f32 %v3909, %v3947
      %v3953 = vadd.f32 %v3910, %v3947
      %v3954 = vadd.f32 %v3911, %v3947
      %v3955 = vadd.f32 %v3912, %v3947
      %v3956 = vadd.f32 %v3913, %v3947
      %v3957 = vadd.f32 %v3914, %v3947
      %v3958 = vadd.f32 %v3915, %v3947
      %v3959 = vadd.f32 %v3916, %v3947
      %v3960 = vadd.f32 %v3917, %v3947
      %v3961 = vadd.f32 %v3918, %v3947
      %v3962 = vadd.f32 %v3919, %v3947
      %v3963 = vadd.f32 %v3920, %v3947
      %v3964 = vadd.f32 %v3921, %v3947
      %v3965 = vadd.f32 %v3922, %v3947
      %v3966 = vadd.f32 %v3923, %v3947
      %v3967 = vadd.f32 %v3924, %v3947
      %v3968 = vadd.f32 %v3925, %v3947
      %v3969 = vadd.f32 %v3926, %v3947
      %v3970 = vadd.f32 %v3927, %v3947
      %v3971 = vadd.f32 %v3928, %v3947
      %v3972 = vadd.f32 %v3929, %v3947
      %v3973 = vadd.f32 %v3930, %v3947
      %v3974 = vadd.f32 %v3931, %v3947
      %v3975 = vadd.f32 %v3932, %v3947
      %v3976 = vadd.f32 %v3933, %v3947
      %v3977 = vadd.f32 %v3934, %v3947
      %v3978 = vadd.f32 %v3935, %v3947
      %v3979 = vadd.f32 %v3936, %v3947
      %v3980 = vadd.f32 %v3937, %v3947
      %v3981 = vadd.f32 %v3938, %v3947
      %v3982 = vadd.f32 %v3939, %v3947
      %v3983 = vadd.f32 %v3940, %v3947
      %v3984 = vadd.f32 %v3941, %v3947
      %v3985 = vmax.f32 %v3949, 0.0
      %v3986 = vmax.f32 %v3950, 0.0
      %v3987 = vmax.f32 %v3951, 0.0
      %v3988 = vmax.f32 %v3952, 0.0
      %v3989 = vmax.f32 %v3953, 0.0
      %v3990 = vmax.f32 %v3954, 0.0
      %v3991 = vmax.f32 %v3955, 0.0
      %v3992 = vmax.f32 %v3956, 0.0
      %v3993 = vmax.f32 %v3957, 0.0
      %v3994 = vmax.f32 %v3958, 0.0
      %v3995 = vmax.f32 %v3959, 0.0
      %v3996 = vmax.f32 %v3960, 0.0
      %v3997 = vmax.f32 %v3961, 0.0
      %v3998 = vmax.f32 %v3962, 0.0
      %v3999 = vmax.f32 %v3963, 0.0
      %v4000 = vmax.f32 %v3964, 0.0
      %v4001 = vmax.f32 %v3965, 0.0
      %v4002 = vmax.f32 %v3966, 0.0
      %v4003 = vmax.f32 %v3967, 0.0
      %v4004 = vmax.f32 %v3968, 0.0
      %v4005 = vmax.f32 %v3969, 0.0
      %v4006 = vmax.f32 %v3970, 0.0
      %v4007 = vmax.f32 %v3971, 0.0
      %v4008 = vmax.f32 %v3972, 0.0
      %v4009 = vmax.f32 %v3973, 0.0
      %v4010 = vmax.f32 %v3974, 0.0
      %v4011 = vmax.f32 %v3975, 0.0
      %v4012 = vmax.f32 %v3976, 0.0
      %v4013 = vmax.f32 %v3977, 0.0
      %v4014 = vmax.f32 %v3978, 0.0
      %v4015 = vmax.f32 %v3979, 0.0
      %v4016 = vmax.f32 %v3980, 0.0
      %v4017 = vmax.f32 %v3981, 0.0
      %v4018 = vmax.f32 %v3982, 0.0
      %v4019 = vmax.f32 %v3983, 0.0
      %v4020 = vmax.f32 %v3984, 0.0
      %4021 = vst [vmem:[%s170] sm:$0xff] %v3985
      %4022 = vst [vmem:[%s170 + $0x8] sm:$0xff] %v3986
      %4023 = vst [vmem:[%s170 + $0x10] sm:$0xff] %v3987
      %4024 = vst [vmem:[%s170 + $0x18] sm:$0xff] %v3988
      %4025 = vst [vmem:[%s170 + $0x20] sm:$0xff] %v3989
      %4026 = vst [vmem:[%s170 + $0x28] sm:$0xff] %v3990
      %4027 = vst [vmem:[%s170 + $0x30] sm:$0xff] %v3991
      %4028 = vst [vmem:[%s170 + $0x38] sm:$0xff] %v3992
      %4029 = vst [vmem:[%s170 + $0x40] sm:$0xff] %v3993
      %4030 = vst [vmem:[%s170 + $0x48] sm:$0xff] %v3994
      %4031 = vst [vmem:[%s170 + $0x50] sm:$0xff] %v3995
      %4032 = vst [vmem:[%s170 + $0x58] sm:$0xff] %v3996
      %4033 = vst [vmem:[%s170 + $0x60] sm:$0xff] %v3997
      %4034 = vst [vmem:[%s170 + $0x68] sm:$0xff] %v3998
      %4035 = vst [vmem:[%s170 + $0x70] sm:$0xff] %v3999
      %4036 = vst [vmem:[%s170 + $0x78] sm:$0xff] %v4000
      %4037 = vst [vmem:[%s170 + $0x80] sm:$0xff] %v4001
      %4038 = vst [vmem:[%s170 + $0x88] sm:$0xff] %v4002
      %4039 = vst [vmem:[%s170 + $0x90] sm:$0xff] %v4003
      %4040 = vst [vmem:[%s170 + $0x98] sm:$0xff] %v4004
      %4041 = vst [vmem:[%s170 + $0xa0] sm:$0xff] %v4005
      %4042 = vst [vmem:[%s170 + $0xa8] sm:$0xff] %v4006
      %4043 = vst [vmem:[%s170 + $0xb0] sm:$0xff] %v4007
      %4044 = vst [vmem:[%s170 + $0xb8] sm:$0xff] %v4008
      %4045 = vst [vmem:[%s170 + $0xc0] sm:$0xff] %v4009
      %4046 = vst [vmem:[%s170 + $0xc8] sm:$0xff] %v4010
      %4047 = vst [vmem:[%s170 + $0xd0] sm:$0xff] %v4011
      %4048 = vst [vmem:[%s170 + $0xd8] sm:$0xff] %v4012
      %4049 = vst [vmem:[%s170 + $0xe0] sm:$0xff] %v4013
      %4050 = vst [vmem:[%s170 + $0xe8] sm:$0xff] %v4014
      %4051 = vst [vmem:[%s170 + $0xf0] sm:$0xff] %v4015
      %4052 = vst [vmem:[%s170 + $0xf8] sm:$0xff] %v4016
      %4053 = vst [vmem:[%s170 + $0x100] sm:$0xff] %v4017
      %4054 = vst [vmem:[%s170 + $0x108] sm:$0xff] %v4018
      %4055 = vst [vmem:[%s170 + $0x110] sm:$0xff] %v4019
      %4056 = vst [vmem:[%s170 + $0x118] sm:$0xff] %v4020
      %p4057 = scmp.lt.s32.totalorder %s14, 1
      %s4058 = scalar_select %p4057, %s14, 1
      %s4059 = smul.addr %s4058, 36
      %s4060 = smul.addr %s4059, 8
      %s4061 = scalar_lea.vmem %s3, %s4060
      // Predicated region
      $region33: #{basic_conv2d.1} parent=31 // pred_check
        %p4062 = pneg %p100
      $region34: #{basic_conv2d.1} parent=31 // pred_check_branch
        %4064 = sbr.rel (%p4062) target = $region36
      $region35: #{basic_conv2d.1} parent=31 // pred_region
        _
      $region36: #{basic_conv2d.1} parent=31 // pred_fallthru
        _
    $region32: #{basic_conv2d.1} parent=5 // pred_fallthru
      _
    %p4065 = scmp.le.s32.totalorder 2, %s9
    // Predicated region
    $region37: #{basic_conv2d.1} parent=5 // pred_check
      %p4066 = pneg %p4065
    $region38: #{basic_conv2d.1} parent=5 // pred_check_branch
      %4068 = sbr.rel (%p4066) target = $region40
    $region39: #{basic_conv2d.1} parent=5 // pred_region
      %s4069 = ssub.s32 %s9, 2
      // Predicated region
      $region41: #{basic_conv2d.1} parent=39 // pred_check
        %p4070 = pneg %p106
      $region42: #{basic_conv2d.1} parent=39 // pred_check_branch
        %4072 = sbr.rel (%p4070) target = $region44
      $region43: #{basic_conv2d.1} parent=39 // pred_region
        %p4073 = scmp.lt.s32.totalorder %s15, 1
        %s4074 = scalar_select %p4073, %s15, 1
        %s4075 = smul.addr %s4074, 36
        %s4076 = smul.addr %s4075, 8
        %s4077 = scalar_lea.vmem %s3, %s4076
      $region44: #{basic_conv2d.1} parent=39 // pred_fallthru
        _
    $region40: #{basic_conv2d.1} parent=5 // pred_fallthru
      _
  $region6: #{basic_conv2d.1} parent=0 // loop_footer
    %s13 = sadd.s32 1, %s9
  $region7: #{basic_conv2d.1} parent=0 // loop_footer_branch
    %8 = sbr.rel target = $region3
  $region8: #{basic_conv2d.1} parent=0 // loop_exit
    _

</llo_original>
